<compile_context>
chip_gen: v6e
topology: v6e:2x2x1
jax: 0.10.0
libtpu: 0.0.40
codegen_flags: <defaults>
</compile_context>

<pallas_src>
import functools

import numpy as np
import jax
import jax.numpy as jnp
from jax.experimental import pallas as pl
from jax.experimental.pallas import tpu as pltpu


# ---------------------------------------------------------------------------
# Kernel 1: fused conv-as-matmul (transposed) + BatchNorm(train) + activation
#   y (C, M) = wT (C, Kd) @ pT (Kd, M);  BN over axis=1;  ReLU / LeakyReLU
#   output is lane-dense along M.
# ---------------------------------------------------------------------------
def _conv_bn_act_kernel(pT_ref, wT_ref, g_ref, bt_ref, o_ref,
                        *, eps, activation, slope):
    y = jnp.dot(wT_ref[...], pT_ref[...], preferred_element_type=jnp.float32)
    m = y.shape[1]
    inv_m = 1.0 / m
    mean = jnp.sum(y, axis=1, keepdims=True) * inv_m          # single pass stats
    ex2 = jnp.sum(y * y, axis=1, keepdims=True) * inv_m
    var = jnp.maximum(ex2 - mean * mean, 0.0)                 # biased var
    scale = jax.lax.rsqrt(var + eps) * g_ref[...]
    y = (y - mean) * scale + bt_ref[...]
    if activation == "relu":
        y = jnp.maximum(y, 0.0)
    elif activation == "leaky_relu":
        y = jnp.where(y >= 0.0, y, slope * y)
    o_ref[...] = y.astype(o_ref.dtype)


def conv_bn_act_T(pT, wT, gamma, beta, activation="relu",
                  out_dtype=jnp.bfloat16, eps=1e-5, slope=0.01):
    Kd, M = pT.shape
    C = wT.shape[0]
    kern = functools.partial(_conv_bn_act_kernel, eps=eps,
                             activation=activation, slope=slope)
    s2 = lambda shp: pl.BlockSpec(shp, lambda i: (0, 0))
    return pl.pallas_call(
        kern,
        out_shape=jax.ShapeDtypeStruct((C, M), out_dtype),
        grid=(1,),
        in_specs=[s2((Kd, M)), s2((C, Kd)), s2((C, 1)), s2((C, 1))],
        out_specs=s2((C, M)),
        cost_estimate=pl.CostEstimate(
            flops=2 * C * Kd * M + 12 * C * M,
            transcendentals=C,
            bytes_accessed=(Kd * M + C * Kd + C * M) * 2 + 2 * C * 4),
    )(pT, wT, gamma, beta)


# ---------------------------------------------------------------------------
# Kernel 2: fused  fc_z matmul + gumbel-softmax reparam + decoder-input Linear
#   q (N, L*K) f32  and  decoder features d (N, D) bf16; single K=80 matmul
#   for dec_in; per-group softmax assembled in a VMEM scratch.
# ---------------------------------------------------------------------------
def _fc_gumbel_decin_kernel(h_ref, fw_ref, fb_ref, u_ref, dw_ref, db_ref,
                            q_ref, o_ref, s_ref, *, temp, eps, L, K):
    q = jnp.dot(h_ref[...], fw_ref[...], preferred_element_type=jnp.float32)
    q = q + fb_ref[...]
    q_ref[...] = q
    g = -jnp.log(-jnp.log(u_ref[...] + eps) + eps)
    logits = (q + g) * (1.0 / temp)
    for l in range(L):                      # static unroll; L small, slices only
        lg = logits[:, l * K:(l + 1) * K]
        mx = jnp.max(lg, axis=-1, keepdims=True)
        e = jnp.exp(lg - mx)
        s_ref[:, l * K:(l + 1) * K] = e / jnp.sum(e, axis=-1, keepdims=True)
    d = jnp.dot(s_ref[...].astype(dw_ref.dtype), dw_ref[...],
                preferred_element_type=jnp.float32)           # ONE (N,80)@(80,D)
    o_ref[...] = (d + db_ref[...]).astype(o_ref.dtype)


def fc_gumbel_decin(hf, fw, fb, u, dw, db, *, temp, L, K, eps=1e-7):
    N, F = hf.shape
    D = dw.shape[1]
    kern = functools.partial(_fc_gumbel_decin_kernel, temp=float(temp),
                             eps=eps, L=L, K=K)
    s2 = lambda shp: pl.BlockSpec(shp, lambda i: (0, 0))
    return pl.pallas_call(
        kern,
        out_shape=(jax.ShapeDtypeStruct((N, L * K), jnp.float32),
                   jax.ShapeDtypeStruct((N, D), jnp.bfloat16)),
        grid=(1,),
        in_specs=[s2((N, F)), s2((F, L * K)), s2((1, L * K)), s2((N, L * K)),
                  s2((L * K, D)), s2((1, D))],
        out_specs=[s2((N, L * K)), s2((N, D))],
        scratch_shapes=[pltpu.VMEM((N, L * K), jnp.float32)],
        cost_estimate=pl.CostEstimate(
            flops=2 * N * F * L * K + 2 * N * L * K * D + 12 * N * L * K,
            transcendentals=3 * N * L * K,
            bytes_accessed=(N * F + F * L * K + L * K * D + N * D) * 2
            + (2 * N * L * K + L * K + D) * 4),
    )(hf, fw, fb, u, dw, db)


# ---------------------------------------------------------------------------
# Kernel 3: fused output head (transposed layout, lane-dense (1, M) store)
#   ConvT-as-matmul + BN(train, single-pass) + LeakyReLU + Conv1x1(C->1) + Tanh
# ---------------------------------------------------------------------------
def _head_kernel(pT_ref, wT_ref, g_ref, bt_ref, w1_ref, b1_ref, o_ref,
                 *, eps, slope):
    y = jnp.dot(wT_ref[...], pT_ref[...], preferred_element_type=jnp.float32)
    m = y.shape[1]
    inv_m = 1.0 / m
    mean = jnp.sum(y, axis=1, keepdims=True) * inv_m
    ex2 = jnp.sum(y * y, axis=1, keepdims=True) * inv_m
    var = jnp.maximum(ex2 - mean * mean, 0.0)
    scale = jax.lax.rsqrt(var + eps) * g_ref[...]
    y = (y - mean) * scale + bt_ref[...]
    y = jnp.where(y >= 0.0, y, slope * y)                     # LeakyReLU
    out = jnp.sum(y * w1_ref[...], axis=0, keepdims=True) + b1_ref[...]
    o_ref[...] = jnp.tanh(out)                                # (1, M) lane-dense


def head_fused(pT, wT, gamma, beta, w1, b1, eps=1e-5, slope=0.01):
    Kd, M = pT.shape
    C = wT.shape[0]
    kern = functools.partial(_head_kernel, eps=eps, slope=slope)
    s2 = lambda shp: pl.BlockSpec(shp, lambda i: (0, 0))
    return pl.pallas_call(
        kern,
        out_shape=jax.ShapeDtypeStruct((1, M), jnp.float32),
        grid=(1,),
        in_specs=[s2((Kd, M)), s2((C, Kd)), s2((C, 1)), s2((C, 1)), s2((C, 1)),
                  s2((1, 1))],
        out_specs=s2((1, M)),
        cost_estimate=pl.CostEstimate(
            flops=2 * C * Kd * M + 16 * C * M,
            transcendentals=M + C,
            bytes_accessed=(Kd * M + C * Kd) * 2 + M * 4 + 3 * C * 4),
    )(pT, wT, gamma, beta, w1, b1)


# ---------------------------------------------------------------------------
# XLA glue: channel-major im2col (directly transposed) and ConvT dilate/pad
# TODO(synk): move in-kernel (shifted matmuls on a VMEM-resident tile).
# ---------------------------------------------------------------------------
def im2col_T(x_cm, kh, kw, stride, k_pad=None):
    """x_cm: (C, N, Hp, Wp) already spatially padded.  Returns pT (kh*kw*C, M)."""
    C, N, Hp, Wp = x_cm.shape
    Ho = (Hp - kh) // stride + 1
    Wo = (Wp - kw) // stride + 1
    rows = []
    for i in range(kh):
        for j in range(kw):
            rows.append(x_cm[:, :, i:i + stride * (Ho - 1) + 1:stride,
                                   j:j + stride * (Wo - 1) + 1:stride])
    pT = jnp.stack(rows, axis=0).reshape(kh * kw * C, N * Ho * Wo)
    kd = kh * kw * C
    if k_pad is not None and k_pad > kd:
        pT = jnp.pad(pT, ((0, k_pad - kd), (0, 0)))
    return pT, (N, Ho, Wo)


def dilate_pad_cm(x, stride, padding, output_padding, k):
    """ConvTranspose2d input -> equivalent stride-1 conv input (channel-major)."""
    lo = k - 1 - padding
    hi = k - 1 - padding + output_padding
    cfg = ((0, 0, 0), (0, 0, 0),
           (max(lo, 0), max(hi, 0), stride - 1),
           (max(lo, 0), max(hi, 0), stride - 1))
    x = jax.lax.pad(x, jnp.zeros((), x.dtype), cfg)           # interior dilation
    cl, ch = max(-lo, 0), max(-hi, 0)
    if cl or ch:                                              # negative pad = crop
        x = x[:, :, cl:x.shape[2] - ch, cl:x.shape[3] - ch]
    return x


# ---------------------------------------------------------------------------
# Parameter init (deterministic, synthetic) + one-time weight prep
# Weights are prepped in (Cout, Kdim) bf16 form; conv biases that feed
# training-mode BN are omitted (cancelled exactly by the mean subtraction).
# ---------------------------------------------------------------------------
def _round16(v):
    return int(np.ceil(v / 16) * 16)


def init_params(key, latent_dims, num_categories, hidden_dims):
    ks = iter(jax.random.split(key, 16))
    L, K = latent_dims, num_categories
    enc_chans = [1] + list(hidden_dims)
    dec_hidden = list(hidden_dims[::-1])

    def rnd(shape, fan_in):
        return jax.random.normal(next(ks), shape, jnp.float32) / np.sqrt(fan_in)

    cfg = dict(latent_dims=L, num_categories=K, dec_hidden=tuple(dec_hidden),
               enc_k_pad=tuple(_round16(9 * c) for c in enc_chans[:-1]),
               dec_k_pad=tuple(_round16(9 * c) for c in dec_hidden[:-1]))

    w = {"enc": [], "dec": []}

    # encoder Conv2d(k3,s2,p1)+BN+ReLU  ->  wT (Cout, Kd_pad) bf16
    for cin, cout in zip(enc_chans, enc_chans[1:]):
        wt = rnd((cout, cin, 3, 3), cin * 9)                      # torch OIHW
        wm = jnp.transpose(wt, (2, 3, 1, 0)).reshape(9 * cin, cout)
        kp = _round16(9 * cin)
        if kp > 9 * cin:
            wm = jnp.pad(wm, ((0, kp - 9 * cin), (0, 0)))
        w["enc"].append(dict(wT=wm.T.astype(jnp.bfloat16),
                             gamma=jnp.ones((cout, 1), jnp.float32),
                             beta=jnp.zeros((cout, 1), jnp.float32)))

    # fc_z Linear(hidden[-1]*16 -> K*L): rows are torch CHW order (= our
    # channel-major flatten), so real torch weights load with a plain .T.
    F = hidden_dims[-1] * 16
    w["fc_z_w"] = rnd((F, K * L), F).astype(jnp.bfloat16)
    w["fc_z_b"] = jnp.zeros((1, K * L), jnp.float32)

    # decoder-input Linear(L*K -> dec_hidden[0]*16): 2-D (80, D), torch order.
    D = dec_hidden[0] * 16
    w["dec_in_w"] = rnd((L * K, D), L * K).astype(jnp.bfloat16)
    w["dec_in_b"] = jnp.zeros((1, D), jnp.float32)

    # decoder ConvT(k3,s2,p1,op1)+BN+ReLU  (equivalent flipped-kernel conv)
    for cin, cout in zip(dec_hidden, dec_hidden[1:]):
        wt = rnd((cin, cout, 3, 3), cin * 9)                      # torch (in,out,kh,kw)
        w_conv = jnp.transpose(wt[:, :, ::-1, ::-1], (1, 0, 2, 3))
        wm = jnp.transpose(w_conv, (2, 3, 1, 0)).reshape(9 * cin, cout)
        w["dec"].append(dict(wT=wm.T.astype(jnp.bfloat16),
                             gamma=jnp.ones((cout, 1), jnp.float32),
                             beta=jnp.zeros((cout, 1), jnp.float32)))

    # output head: ConvT(k3,s2,p3,op1)+BN+LeakyReLU+Conv1x1+Tanh
    c = dec_hidden[-1]
    wt = rnd((c, c, 3, 3), c * 9)
    w_conv = jnp.transpose(wt[:, :, ::-1, ::-1], (1, 0, 2, 3))
    wm = jnp.transpose(w_conv, (2, 3, 1, 0)).reshape(9 * c, c)
    w["head"] = dict(wT=wm.T.astype(jnp.bfloat16),
                     gamma=jnp.ones((c, 1), jnp.float32),
                     beta=jnp.zeros((c, 1), jnp.float32),
                     w1=rnd((c, 1), c),
                     b1=jnp.zeros((1, 1), jnp.float32))
    return cfg, w


# ---------------------------------------------------------------------------
# Full CVAE forward:  [decode(reparam(encode(x))), x, q]
# ---------------------------------------------------------------------------
def cvae_forward(cfg, w, x_nchw, noise_key, temp=0.5):
    N = x_nchw.shape[0]
    L, K = cfg["latent_dims"], cfg["num_categories"]

    # channel-major (C, N, H, W) activations; bf16 MXU operands end-to-end.
    h = jnp.transpose(x_nchw, (1, 0, 2, 3)).astype(jnp.bfloat16)

    # ---- Encoder: 3 x [Conv(k3,s2,p1)+BN+ReLU], one fused kernel each ----
    for layer, kp in zip(w["enc"], cfg["enc_k_pad"]):
        hp = jnp.pad(h, ((0, 0), (0, 0), (1, 1), (1, 1)))
        pT, (n, ho, wo) = im2col_T(hp, 3, 3, stride=2, k_pad=kp)
        y = conv_bn_act_T(pT, layer["wT"], layer["gamma"], layer["beta"],
                          activation="relu")
        h = y.reshape(-1, n, ho, wo)                      # (Cout, N, Ho, Wo)

    # torch CHW Flatten order falls out of the channel-major layout directly.
    hf = jnp.transpose(h, (1, 0, 2, 3)).reshape(N, -1)    # (N, C*H*W) bf16

    # ---- fc_z + Gumbel-softmax reparameterization + decoder-input Linear ----
    # TODO(synk): torch.rand_like RNG stream is not reproducible; jax.random used.
    u = jax.random.uniform(noise_key, (N, L * K), jnp.float32)
    q_flat, d = fc_gumbel_decin(hf, w["fc_z_w"], w["fc_z_b"], u,
                                w["dec_in_w"], w["dec_in_b"],
                                temp=temp, L=L, K=K)
    q = q_flat.reshape(N, L, K)

    # ---- Decoder: 2 x [ConvT(k3,s2,p1,op1)+BN+ReLU], one fused kernel each ----
    c0 = cfg["dec_hidden"][0]
    h = jnp.transpose(d.reshape(N, c0, 4, 4), (1, 0, 2, 3))   # (C0, N, 4, 4)
    for layer, kp in zip(w["dec"], cfg["dec_k_pad"]):
        xd = dilate_pad_cm(h, stride=2, padding=1, output_padding=1, k=3)
        pT, (n, ho, wo) = im2col_T(xd, 3, 3, stride=1, k_pad=kp)
        y = conv_bn_act_T(pT, layer["wT"], layer["gamma"], layer["beta"],
                          activation="relu")
        h = y.reshape(-1, n, ho, wo)

    # ---- Output head: ConvT + BN + LeakyReLU + Conv1x1 + Tanh, one kernel ----
    hd = w["head"]
    xd = dilate_pad_cm(h, stride=2, padding=3, output_padding=1, k=3)
    pT, (n, ho, wo) = im2col_T(xd, 3, 3, stride=1)            # built transposed
    recon_row = head_fused(pT, hd["wT"], hd["gamma"], hd["beta"],
                           hd["w1"], hd["b1"])                # (1, N*Ho*Wo)
    recon = recon_row.reshape(N, 1, ho, wo)                   # NCHW
    return recon, x_nchw, q


# ---------------------------------------------------------------------------
if __name__ == "__main__":
    latent_dims = 8
    num_categories = 10
    hidden_dims = [16, 32, 64]      # small; fc_z in-features = hidden_dims[-1]*16

    key = jax.random.PRNGKey(0)
    k_param, k_x, k_noise = jax.random.split(key, 3)

    cfg, weights = init_params(k_param, latent_dims, num_categories, hidden_dims)
    # input: NCHW, 32x32 (three stride-2 convs -> 4x4, matching fc_z in-features)
    x = jax.random.normal(k_x, (2, 1, 32, 32), jnp.float32)

    fwd = jax.jit(functools.partial(cvae_forward, cfg, temp=0.5))
    recon, orig, q = fwd(weights, x, k_noise)
    jax.block_until_ready((recon, orig, q))

    assert recon.shape == (2, 1, 28, 28), recon.shape
    assert q.shape == (2, latent_dims, num_categories), q.shape
    assert bool(jnp.all(jnp.isfinite(recon))) and bool(jnp.all(jnp.isfinite(q)))
    print("KERNEL_OK")
</pallas_src>

<mosaic_0001>
module attributes {stable_mosaic.version = 11 : i64} {
  func.func @_conv_bn_act_kernel(%arg0: i32, %arg1: memref<16x512xbf16, #tpu.memory_space<vmem>>, %arg2: memref<16x16xbf16, #tpu.memory_space<vmem>>, %arg3: memref<16x1xf32, #tpu.memory_space<vmem>>, %arg4: memref<16x1xf32, #tpu.memory_space<vmem>>, %arg5: memref<16x512xbf16, #tpu.memory_space<vmem>>) attributes {dimension_semantics = [#tpu.dimension_semantics<arbitrary>], iteration_bounds = array<i64: 1>, scalar_prefetch = 0 : i64, scratch_operands = 0 : i64, tpu.core_type = #tpu.core_type<tc>, window_params = [{pipeline_mode = #tpu.pipeline_mode<synchronous>, transform_indices = @transform_0, window_bounds = array<i64: 16, 512>}, {pipeline_mode = #tpu.pipeline_mode<synchronous>, transform_indices = @transform_1, window_bounds = array<i64: 16, 16>}, {pipeline_mode = #tpu.pipeline_mode<synchronous>, transform_indices = @transform_2, window_bounds = array<i64: 16, 1>}, {pipeline_mode = #tpu.pipeline_mode<synchronous>, transform_indices = @transform_3, window_bounds = array<i64: 16, 1>}, {pipeline_mode = #tpu.pipeline_mode<synchronous>, transform_indices = @transform_4, window_bounds = array<i64: 16, 512>}]} {
    %c0 = arith.constant 0 : index
    %c0_0 = arith.constant 0 : index
    %0 = vector.load %arg2[%c0, %c0_0] : memref<16x16xbf16, #tpu.memory_space<vmem>>, vector<16x16xbf16>
    %c0_1 = arith.constant 0 : index
    %c0_2 = arith.constant 0 : index
    %1 = vector.load %arg1[%c0_1, %c0_2] : memref<16x512xbf16, #tpu.memory_space<vmem>>, vector<16x512xbf16>
    %cst = arith.constant dense<0.000000e+00> : vector<16x512xf32>
    %2 = tpu.matmul %0, %1, %cst {dimension_numbers = #tpu.dot_dimension_numbers<[1], [0], [0], [1], [0, 0, 1, 1], [], []>} : vector<16x16xbf16>, vector<16x512xbf16>, vector<16x512xf32> -> vector<16x512xf32>
    %cst_3 = arith.constant dense<0.000000e+00> : vector<16xf32>
    %3 = vector.multi_reduction <add>, %2, %cst_3 [1] : vector<16x512xf32> to vector<16xf32>
    %4 = vector.shape_cast %3 : vector<16xf32> to vector<16x1xf32>
    %cst_4 = arith.constant 0.001953125 : f32
    %5 = vector.broadcast %cst_4 : f32 to vector<16x1xf32>
    %6 = arith.mulf %4, %5 : vector<16x1xf32>
    %7 = arith.mulf %2, %2 : vector<16x512xf32>
    %cst_5 = arith.constant dense<0.000000e+00> : vector<16xf32>
    %8 = vector.multi_reduction <add>, %7, %cst_5 [1] : vector<16x512xf32> to vector<16xf32>
    %9 = vector.shape_cast %8 : vector<16xf32> to vector<16x1xf32>
    %cst_6 = arith.constant 0.001953125 : f32
    %10 = vector.broadcast %cst_6 : f32 to vector<16x1xf32>
    %11 = arith.mulf %9, %10 : vector<16x1xf32>
    %12 = arith.mulf %6, %6 : vector<16x1xf32>
    %13 = arith.subf %11, %12 : vector<16x1xf32>
    %cst_7 = arith.constant 0.000000e+00 : f32
    %14 = vector.broadcast %cst_7 : f32 to vector<16x1xf32>
    %15 = arith.maximumf %13, %14 : vector<16x1xf32>
    %cst_8 = arith.constant 9.99999974E-6 : f32
    %16 = vector.broadcast %cst_8 : f32 to vector<16x1xf32>
    %17 = arith.addf %15, %16 : vector<16x1xf32>
    %18 = math.rsqrt %17 : vector<16x1xf32>
    %c0_9 = arith.constant 0 : index
    %c0_10 = arith.constant 0 : index
    %19 = vector.load %arg3[%c0_9, %c0_10] : memref<16x1xf32, #tpu.memory_space<vmem>>, vector<16x1xf32>
    %20 = arith.mulf %18, %19 : vector<16x1xf32>
    %21 = vector.broadcast %6 : vector<16x1xf32> to vector<16x512xf32>
    %22 = arith.subf %2, %21 : vector<16x512xf32>
    %23 = vector.broadcast %20 : vector<16x1xf32> to vector<16x512xf32>
    %24 = arith.mulf %22, %23 : vector<16x512xf32>
    %c0_11 = arith.constant 0 : index
    %c0_12 = arith.constant 0 : index
    %25 = vector.load %arg4[%c0_11, %c0_12] : memref<16x1xf32, #tpu.memory_space<vmem>>, vector<16x1xf32>
    %26 = vector.broadcast %25 : vector<16x1xf32> to vector<16x512xf32>
    %27 = arith.addf %24, %26 : vector<16x512xf32>
    %cst_13 = arith.constant 0.000000e+00 : f32
    %28 = vector.broadcast %cst_13 : f32 to vector<16x512xf32>
    %29 = arith.maximumf %27, %28 : vector<16x512xf32>
    %30 = arith.truncf %29 : vector<16x512xf32> to vector<16x512xbf16>
    %c0_14 = arith.constant 0 : index
    %c0_15 = arith.constant 0 : index
    %31 = vector.load %arg5[%c0_14, %c0_15] : memref<16x512xbf16, #tpu.memory_space<vmem>>, vector<16x512xbf16>
    tpu.vector_store %arg5[%c0_14, %c0_15], %30 {strides = array<i32>} : memref<16x512xbf16, #tpu.memory_space<vmem>>, vector<16x512xbf16>,
    return
  }
  func.func @transform_0(%arg0: i32) -> (i32, i32) {
    %c0_i32 = arith.constant 0 : i32
    %c0_i32_0 = arith.constant 0 : i32
    %c0_i32_1 = arith.constant 0 : i32
    return %c0_i32, %c0_i32_0 : i32, i32
  }
  func.func @transform_1(%arg0: i32) -> (i32, i32) {
    %c0_i32 = arith.constant 0 : i32
    %c0_i32_0 = arith.constant 0 : i32
    %c0_i32_1 = arith.constant 0 : i32
    return %c0_i32, %c0_i32_0 : i32, i32
  }
  func.func @transform_2(%arg0: i32) -> (i32, i32) {
    %c0_i32 = arith.constant 0 : i32
    %c0_i32_0 = arith.constant 0 : i32
    %c0_i32_1 = arith.constant 0 : i32
    return %c0_i32, %c0_i32_0 : i32, i32
  }
  func.func @transform_3(%arg0: i32) -> (i32, i32) {
    %c0_i32 = arith.constant 0 : i32
    %c0_i32_0 = arith.constant 0 : i32
    %c0_i32_1 = arith.constant 0 : i32
    return %c0_i32, %c0_i32_0 : i32, i32
  }
  func.func @transform_4(%arg0: i32) -> (i32, i32) {
    %c0_i32 = arith.constant 0 : i32
    %c0_i32_0 = arith.constant 0 : i32
    %c0_i32_1 = arith.constant 0 : i32
    return %c0_i32, %c0_i32_0 : i32, i32
  }
}

module attributes {stable_mosaic.version = 11 : i64} {
  func.func @_conv_bn_act_kernel(%arg0: i32, %arg1: memref<144x128xbf16, #tpu.memory_space<vmem>>, %arg2: memref<32x144xbf16, #tpu.memory_space<vmem>>, %arg3: memref<32x1xf32, #tpu.memory_space<vmem>>, %arg4: memref<32x1xf32, #tpu.memory_space<vmem>>, %arg5: memref<32x128xbf16, #tpu.memory_space<vmem>>) attributes {dimension_semantics = [#tpu.dimension_semantics<arbitrary>], iteration_bounds = array<i64: 1>, scalar_prefetch = 0 : i64, scratch_operands = 0 : i64, tpu.core_type = #tpu.core_type<tc>, window_params = [{pipeline_mode = #tpu.pipeline_mode<synchronous>, transform_indices = @transform_0, window_bounds = array<i64: 144, 128>}, {pipeline_mode = #tpu.pipeline_mode<synchronous>, transform_indices = @transform_1, window_bounds = array<i64: 32, 144>}, {pipeline_mode = #tpu.pipeline_mode<synchronous>, transform_indices = @transform_2, window_bounds = array<i64: 32, 1>}, {pipeline_mode = #tpu.pipeline_mode<synchronous>, transform_indices = @transform_3, window_bounds = array<i64: 32, 1>}, {pipeline_mode = #tpu.pipeline_mode<synchronous>, transform_indices = @transform_4, window_bounds = array<i64: 32, 128>}]} {
    %c0 = arith.constant 0 : index
    %c0_0 = arith.constant 0 : index
    %0 = vector.load %arg2[%c0, %c0_0] : memref<32x144xbf16, #tpu.memory_space<vmem>>, vector<32x144xbf16>
    %c0_1 = arith.constant 0 : index
    %c0_2 = arith.constant 0 : index
    %1 = vector.load %arg1[%c0_1, %c0_2] : memref<144x128xbf16, #tpu.memory_space<vmem>>, vector<144x128xbf16>
    %cst = arith.constant dense<0.000000e+00> : vector<32x128xf32>
    %2 = tpu.matmul %0, %1, %cst {dimension_numbers = #tpu.dot_dimension_numbers<[1], [0], [0], [1], [0, 0, 1, 1], [], []>} : vector<32x144xbf16>, vector<144x128xbf16>, vector<32x128xf32> -> vector<32x128xf32>
    %cst_3 = arith.constant dense<0.000000e+00> : vector<32xf32>
    %3 = vector.multi_reduction <add>, %2, %cst_3 [1] : vector<32x128xf32> to vector<32xf32>
    %4 = vector.shape_cast %3 : vector<32xf32> to vector<32x1xf32>
    %cst_4 = arith.constant 7.812500e-03 : f32
    %5 = vector.broadcast %cst_4 : f32 to vector<32x1xf32>
    %6 = arith.mulf %4, %5 : vector<32x1xf32>
    %7 = arith.mulf %2, %2 : vector<32x128xf32>
    %cst_5 = arith.constant dense<0.000000e+00> : vector<32xf32>
    %8 = vector.multi_reduction <add>, %7, %cst_5 [1] : vector<32x128xf32> to vector<32xf32>
    %9 = vector.shape_cast %8 : vector<32xf32> to vector<32x1xf32>
    %cst_6 = arith.constant 7.812500e-03 : f32
    %10 = vector.broadcast %cst_6 : f32 to vector<32x1xf32>
    %11 = arith.mulf %9, %10 : vector<32x1xf32>
    %12 = arith.mulf %6, %6 : vector<32x1xf32>
    %13 = arith.subf %11, %12 : vector<32x1xf32>
    %cst_7 = arith.constant 0.000000e+00 : f32
    %14 = vector.broadcast %cst_7 : f32 to vector<32x1xf32>
    %15 = arith.maximumf %13, %14 : vector<32x1xf32>
    %cst_8 = arith.constant 9.99999974E-6 : f32
    %16 = vector.broadcast %cst_8 : f32 to vector<32x1xf32>
    %17 = arith.addf %15, %16 : vector<32x1xf32>
    %18 = math.rsqrt %17 : vector<32x1xf32>
    %c0_9 = arith.constant 0 : index
    %c0_10 = arith.constant 0 : index
    %19 = vector.load %arg3[%c0_9, %c0_10] : memref<32x1xf32, #tpu.memory_space<vmem>>, vector<32x1xf32>
    %20 = arith.mulf %18, %19 : vector<32x1xf32>
    %21 = vector.broadcast %6 : vector<32x1xf32> to vector<32x128xf32>
    %22 = arith.subf %2, %21 : vector<32x128xf32>
    %23 = vector.broadcast %20 : vector<32x1xf32> to vector<32x128xf32>
    %24 = arith.mulf %22, %23 : vector<32x128xf32>
    %c0_11 = arith.constant 0 : index
    %c0_12 = arith.constant 0 : index
    %25 = vector.load %arg4[%c0_11, %c0_12] : memref<32x1xf32, #tpu.memory_space<vmem>>, vector<32x1xf32>
    %26 = vector.broadcast %25 : vector<32x1xf32> to vector<32x128xf32>
    %27 = arith.addf %24, %26 : vector<32x128xf32>
    %cst_13 = arith.constant 0.000000e+00 : f32
    %28 = vector.broadcast %cst_13 : f32 to vector<32x128xf32>
    %29 = arith.maximumf %27, %28 : vector<32x128xf32>
    %30 = arith.truncf %29 : vector<32x128xf32> to vector<32x128xbf16>
    %c0_14 = arith.constant 0 : index
    %c0_15 = arith.constant 0 : index
    %31 = vector.load %arg5[%c0_14, %c0_15] : memref<32x128xbf16, #tpu.memory_space<vmem>>, vector<32x128xbf16>
    tpu.vector_store %arg5[%c0_14, %c0_15], %30 {strides = array<i32>} : memref<32x128xbf16, #tpu.memory_space<vmem>>, vector<32x128xbf16>,
    return
  }
  func.func @transform_0(%arg0: i32) -> (i32, i32) {
    %c0_i32 = arith.constant 0 : i32
    %c0_i32_0 = arith.constant 0 : i32
    %c0_i32_1 = arith.constant 0 : i32
    return %c0_i32, %c0_i32_0 : i32, i32
  }
  func.func @transform_1(%arg0: i32) -> (i32, i32) {
    %c0_i32 = arith.constant 0 : i32
    %c0_i32_0 = arith.constant 0 : i32
    %c0_i32_1 = arith.constant 0 : i32
    return %c0_i32, %c0_i32_0 : i32, i32
  }
  func.func @transform_2(%arg0: i32) -> (i32, i32) {
    %c0_i32 = arith.constant 0 : i32
    %c0_i32_0 = arith.constant 0 : i32
    %c0_i32_1 = arith.constant 0 : i32
    return %c0_i32, %c0_i32_0 : i32, i32
  }
  func.func @transform_3(%arg0: i32) -> (i32, i32) {
    %c0_i32 = arith.constant 0 : i32
    %c0_i32_0 = arith.constant 0 : i32
    %c0_i32_1 = arith.constant 0 : i32
    return %c0_i32, %c0_i32_0 : i32, i32
  }
  func.func @transform_4(%arg0: i32) -> (i32, i32) {
    %c0_i32 = arith.constant 0 : i32
    %c0_i32_0 = arith.constant 0 : i32
    %c0_i32_1 = arith.constant 0 : i32
    return %c0_i32, %c0_i32_0 : i32, i32
  }
}

module attributes {stable_mosaic.version = 11 : i64} {
  func.func @_conv_bn_act_kernel(%arg0: i32, %arg1: memref<288x32xbf16, #tpu.memory_space<vmem>>, %arg2: memref<64x288xbf16, #tpu.memory_space<vmem>>, %arg3: memref<64x1xf32, #tpu.memory_space<vmem>>, %arg4: memref<64x1xf32, #tpu.memory_space<vmem>>, %arg5: memref<64x32xbf16, #tpu.memory_space<vmem>>) attributes {dimension_semantics = [#tpu.dimension_semantics<arbitrary>], iteration_bounds = array<i64: 1>, scalar_prefetch = 0 : i64, scratch_operands = 0 : i64, tpu.core_type = #tpu.core_type<tc>, window_params = [{pipeline_mode = #tpu.pipeline_mode<synchronous>, transform_indices = @transform_0, window_bounds = array<i64: 288, 32>}, {pipeline_mode = #tpu.pipeline_mode<synchronous>, transform_indices = @transform_1, window_bounds = array<i64: 64, 288>}, {pipeline_mode = #tpu.pipeline_mode<synchronous>, transform_indices = @transform_2, window_bounds = array<i64: 64, 1>}, {pipeline_mode = #tpu.pipeline_mode<synchronous>, transform_indices = @transform_3, window_bounds = array<i64: 64, 1>}, {pipeline_mode = #tpu.pipeline_mode<synchronous>, transform_indices = @transform_4, window_bounds = array<i64: 64, 32>}]} {
    %c0 = arith.constant 0 : index
    %c0_0 = arith.constant 0 : index
    %0 = vector.load %arg2[%c0, %c0_0] : memref<64x288xbf16, #tpu.memory_space<vmem>>, vector<64x288xbf16>
    %c0_1 = arith.constant 0 : index
    %c0_2 = arith.constant 0 : index
    %1 = vector.load %arg1[%c0_1, %c0_2] : memref<288x32xbf16, #tpu.memory_space<vmem>>, vector<288x32xbf16>
    %cst = arith.constant dense<0.000000e+00> : vector<64x32xf32>
    %2 = tpu.matmul %0, %1, %cst {dimension_numbers = #tpu.dot_dimension_numbers<[1], [0], [0], [1], [0, 0, 1, 1], [], []>} : vector<64x288xbf16>, vector<288x32xbf16>, vector<64x32xf32> -> vector<64x32xf32>
    %cst_3 = arith.constant dense<0.000000e+00> : vector<64xf32>
    %3 = vector.multi_reduction <add>, %2, %cst_3 [1] : vector<64x32xf32> to vector<64xf32>
    %4 = vector.shape_cast %3 : vector<64xf32> to vector<64x1xf32>
    %cst_4 = arith.constant 3.125000e-02 : f32
    %5 = vector.broadcast %cst_4 : f32 to vector<64x1xf32>
    %6 = arith.mulf %4, %5 : vector<64x1xf32>
    %7 = arith.mulf %2, %2 : vector<64x32xf32>
    %cst_5 = arith.constant dense<0.000000e+00> : vector<64xf32>
    %8 = vector.multi_reduction <add>, %7, %cst_5 [1] : vector<64x32xf32> to vector<64xf32>
    %9 = vector.shape_cast %8 : vector<64xf32> to vector<64x1xf32>
    %cst_6 = arith.constant 3.125000e-02 : f32
    %10 = vector.broadcast %cst_6 : f32 to vector<64x1xf32>
    %11 = arith.mulf %9, %10 : vector<64x1xf32>
    %12 = arith.mulf %6, %6 : vector<64x1xf32>
    %13 = arith.subf %11, %12 : vector<64x1xf32>
    %cst_7 = arith.constant 0.000000e+00 : f32
    %14 = vector.broadcast %cst_7 : f32 to vector<64x1xf32>
    %15 = arith.maximumf %13, %14 : vector<64x1xf32>
    %cst_8 = arith.constant 9.99999974E-6 : f32
    %16 = vector.broadcast %cst_8 : f32 to vector<64x1xf32>
    %17 = arith.addf %15, %16 : vector<64x1xf32>
    %18 = math.rsqrt %17 : vector<64x1xf32>
    %c0_9 = arith.constant 0 : index
    %c0_10 = arith.constant 0 : index
    %19 = vector.load %arg3[%c0_9, %c0_10] : memref<64x1xf32, #tpu.memory_space<vmem>>, vector<64x1xf32>
    %20 = arith.mulf %18, %19 : vector<64x1xf32>
    %21 = vector.broadcast %6 : vector<64x1xf32> to vector<64x32xf32>
    %22 = arith.subf %2, %21 : vector<64x32xf32>
    %23 = vector.broadcast %20 : vector<64x1xf32> to vector<64x32xf32>
    %24 = arith.mulf %22, %23 : vector<64x32xf32>
    %c0_11 = arith.constant 0 : index
    %c0_12 = arith.constant 0 : index
    %25 = vector.load %arg4[%c0_11, %c0_12] : memref<64x1xf32, #tpu.memory_space<vmem>>, vector<64x1xf32>
    %26 = vector.broadcast %25 : vector<64x1xf32> to vector<64x32xf32>
    %27 = arith.addf %24, %26 : vector<64x32xf32>
    %cst_13 = arith.constant 0.000000e+00 : f32
    %28 = vector.broadcast %cst_13 : f32 to vector<64x32xf32>
    %29 = arith.maximumf %27, %28 : vector<64x32xf32>
    %30 = arith.truncf %29 : vector<64x32xf32> to vector<64x32xbf16>
    %c0_14 = arith.constant 0 : index
    %c0_15 = arith.constant 0 : index
    %31 = vector.load %arg5[%c0_14, %c0_15] : memref<64x32xbf16, #tpu.memory_space<vmem>>, vector<64x32xbf16>
    tpu.vector_store %arg5[%c0_14, %c0_15], %30 {strides = array<i32>} : memref<64x32xbf16, #tpu.memory_space<vmem>>, vector<64x32xbf16>,
    return
  }
  func.func @transform_0(%arg0: i32) -> (i32, i32) {
    %c0_i32 = arith.constant 0 : i32
    %c0_i32_0 = arith.constant 0 : i32
    %c0_i32_1 = arith.constant 0 : i32
    return %c0_i32, %c0_i32_0 : i32, i32
  }
  func.func @transform_1(%arg0: i32) -> (i32, i32) {
    %c0_i32 = arith.constant 0 : i32
    %c0_i32_0 = arith.constant 0 : i32
    %c0_i32_1 = arith.constant 0 : i32
    return %c0_i32, %c0_i32_0 : i32, i32
  }
  func.func @transform_2(%arg0: i32) -> (i32, i32) {
    %c0_i32 = arith.constant 0 : i32
    %c0_i32_0 = arith.constant 0 : i32
    %c0_i32_1 = arith.constant 0 : i32
    return %c0_i32, %c0_i32_0 : i32, i32
  }
  func.func @transform_3(%arg0: i32) -> (i32, i32) {
    %c0_i32 = arith.constant 0 : i32
    %c0_i32_0 = arith.constant 0 : i32
    %c0_i32_1 = arith.constant 0 : i32
    return %c0_i32, %c0_i32_0 : i32, i32
  }
  func.func @transform_4(%arg0: i32) -> (i32, i32) {
    %c0_i32 = arith.constant 0 : i32
    %c0_i32_0 = arith.constant 0 : i32
    %c0_i32_1 = arith.constant 0 : i32
    return %c0_i32, %c0_i32_0 : i32, i32
  }
}

module attributes {stable_mosaic.version = 11 : i64} {
  func.func @_fc_gumbel_decin_kernel(%arg0: i32, %arg1: memref<2x1024xbf16, #tpu.memory_space<vmem>>, %arg2: memref<1024x80xbf16, #tpu.memory_space<vmem>>, %arg3: memref<1x80xf32, #tpu.memory_space<vmem>>, %arg4: memref<2x80xf32, #tpu.memory_space<vmem>>, %arg5: memref<80x1024xbf16, #tpu.memory_space<vmem>>, %arg6: memref<1x1024xf32, #tpu.memory_space<vmem>>, %arg7: memref<2x80xf32, #tpu.memory_space<vmem>>, %arg8: memref<2x1024xbf16, #tpu.memory_space<vmem>>, %arg9: memref<2x80xf32, #tpu.memory_space<vmem>>) attributes {dimension_semantics = [#tpu.dimension_semantics<arbitrary>], iteration_bounds = array<i64: 1>, scalar_prefetch = 0 : i64, scratch_operands = 1 : i64, tpu.core_type = #tpu.core_type<tc>, window_params = [{pipeline_mode = #tpu.pipeline_mode<synchronous>, transform_indices = @transform_0, window_bounds = array<i64: 2, 1024>}, {pipeline_mode = #tpu.pipeline_mode<synchronous>, transform_indices = @transform_1, window_bounds = array<i64: 1024, 80>}, {pipeline_mode = #tpu.pipeline_mode<synchronous>, transform_indices = @transform_2, window_bounds = array<i64: 1, 80>}, {pipeline_mode = #tpu.pipeline_mode<synchronous>, transform_indices = @transform_3, window_bounds = array<i64: 2, 80>}, {pipeline_mode = #tpu.pipeline_mode<synchronous>, transform_indices = @transform_4, window_bounds = array<i64: 80, 1024>}, {pipeline_mode = #tpu.pipeline_mode<synchronous>, transform_indices = @transform_5, window_bounds = array<i64: 1, 1024>}, {pipeline_mode = #tpu.pipeline_mode<synchronous>, transform_indices = @transform_6, window_bounds = array<i64: 2, 80>}, {pipeline_mode = #tpu.pipeline_mode<synchronous>, transform_indices = @transform_7, window_bounds = array<i64: 2, 1024>}]} {
    %c0 = arith.constant 0 : index
    %c0_0 = arith.constant 0 : index
    %0 = vector.load %arg1[%c0, %c0_0] : memref<2x1024xbf16, #tpu.memory_space<vmem>>, vector<2x1024xbf16>
    %c0_1 = arith.constant 0 : index
    %c0_2 = arith.constant 0 : index
    %1 = vector.load %arg2[%c0_1, %c0_2] : memref<1024x80xbf16, #tpu.memory_space<vmem>>, vector<1024x80xbf16>
    %cst = arith.constant dense<0.000000e+00> : vector<2x80xf32>
    %2 = tpu.matmul %0, %1, %cst {dimension_numbers = #tpu.dot_dimension_numbers<[1], [0], [0], [1], [0, 0, 1, 1], [], []>} : vector<2x1024xbf16>, vector<1024x80xbf16>, vector<2x80xf32> -> vector<2x80xf32>
    %c0_3 = arith.constant 0 : index
    %c0_4 = arith.constant 0 : index
    %3 = vector.load %arg3[%c0_3, %c0_4] : memref<1x80xf32, #tpu.memory_space<vmem>>, vector<1x80xf32>
    %4 = vector.broadcast %3 : vector<1x80xf32> to vector<2x80xf32>
    %5 = arith.addf %2, %4 : vector<2x80xf32>
    %c0_5 = arith.constant 0 : index
    %c0_6 = arith.constant 0 : index
    %6 = vector.load %arg7[%c0_5, %c0_6] : memref<2x80xf32, #tpu.memory_space<vmem>>, vector<2x80xf32>
    tpu.vector_store %arg7[%c0_5, %c0_6], %5 {strides = array<i32>} : memref<2x80xf32, #tpu.memory_space<vmem>>, vector<2x80xf32>,
    %c0_7 = arith.constant 0 : index
    %c0_8 = arith.constant 0 : index
    %7 = vector.load %arg4[%c0_7, %c0_8] : memref<2x80xf32, #tpu.memory_space<vmem>>, vector<2x80xf32>
    %cst_9 = arith.constant 1.000000e-07 : f32
    %8 = vector.broadcast %cst_9 : f32 to vector<2x80xf32>
    %9 = arith.addf %7, %8 : vector<2x80xf32>
    %10 = math.log %9 : vector<2x80xf32>
    %cst_10 = arith.constant 0.000000e+00 : f32
    %11 = vector.broadcast %cst_10 : f32 to vector<2x80xf32>
    %12 = arith.subf %11, %10 : vector<2x80xf32>
    %cst_11 = arith.constant 1.000000e-07 : f32
    %13 = vector.broadcast %cst_11 : f32 to vector<2x80xf32>
    %14 = arith.addf %12, %13 : vector<2x80xf32>
    %15 = math.log %14 : vector<2x80xf32>
    %cst_12 = arith.constant 0.000000e+00 : f32
    %16 = vector.broadcast %cst_12 : f32 to vector<2x80xf32>
    %17 = arith.subf %16, %15 : vector<2x80xf32>
    %18 = arith.addf %5, %17 : vector<2x80xf32>
    %cst_13 = arith.constant 2.000000e+00 : f32
    %19 = vector.broadcast %cst_13 : f32 to vector<2x80xf32>
    %20 = arith.mulf %18, %19 : vector<2x80xf32>
    %21 = vector.extract_strided_slice %20 {offsets = [0, 0], sizes = [2, 10], strides = [1, 1]} : vector<2x80xf32> to vector<2x10xf32>
    %cst_14 = arith.constant dense<0xFF800000> : vector<2xf32>
    %22 = vector.multi_reduction <maximumf>, %21, %cst_14 [1] : vector<2x10xf32> to vector<2xf32>
    %23 = vector.shape_cast %22 : vector<2xf32> to vector<2x1xf32>
    %24 = vector.broadcast %23 : vector<2x1xf32> to vector<2x10xf32>
    %25 = arith.subf %21, %24 : vector<2x10xf32>
    %26 = math.exp %25 : vector<2x10xf32>
    %cst_15 = arith.constant dense<0.000000e+00> : vector<2xf32>
    %27 = vector.multi_reduction <add>, %26, %cst_15 [1] : vector<2x10xf32> to vector<2xf32>
    %28 = vector.shape_cast %27 : vector<2xf32> to vector<2x1xf32>
    %29 = vector.broadcast %28 : vector<2x1xf32> to vector<2x10xf32>
    %30 = arith.divf %26, %29 : vector<2x10xf32>
    %c0_16 = arith.constant 0 : index
    %c0_17 = arith.constant 0 : index
    %31 = vector.load %arg9[%c0_16, %c0_17] : memref<2x80xf32, #tpu.memory_space<vmem>>, vector<2x10xf32>
    tpu.vector_store %arg9[%c0_16, %c0_17], %30 {strides = array<i32>} : memref<2x80xf32, #tpu.memory_space<vmem>>, vector<2x10xf32>,
    %32 = vector.extract_strided_slice %20 {offsets = [0, 10], sizes = [2, 10], strides = [1, 1]} : vector<2x80xf32> to vector<2x10xf32>
    %cst_18 = arith.constant dense<0xFF800000> : vector<2xf32>
    %33 = vector.multi_reduction <maximumf>, %32, %cst_18 [1] : vector<2x10xf32> to vector<2xf32>
    %34 = vector.shape_cast %33 : vector<2xf32> to vector<2x1xf32>
    %35 = vector.broadcast %34 : vector<2x1xf32> to vector<2x10xf32>
    %36 = arith.subf %32, %35 : vector<2x10xf32>
    %37 = math.exp %36 : vector<2x10xf32>
    %cst_19 = arith.constant dense<0.000000e+00> : vector<2xf32>
    %38 = vector.multi_reduction <add>, %37, %cst_19 [1] : vector<2x10xf32> to vector<2xf32>
    %39 = vector.shape_cast %38 : vector<2xf32> to vector<2x1xf32>
    %40 = vector.broadcast %39 : vector<2x1xf32> to vector<2x10xf32>
    %41 = arith.divf %37, %40 : vector<2x10xf32>
    %c0_20 = arith.constant 0 : index
    %c10 = arith.constant 10 : index
    %42 = vector.load %arg9[%c0_20, %c10] : memref<2x80xf32, #tpu.memory_space<vmem>>, vector<2x10xf32>
    tpu.vector_store %arg9[%c0_20, %c10], %41 {strides = array<i32>} : memref<2x80xf32, #tpu.memory_space<vmem>>, vector<2x10xf32>,
    %43 = vector.extract_strided_slice %20 {offsets = [0, 20], sizes = [2, 10], strides = [1, 1]} : vector<2x80xf32> to vector<2x10xf32>
    %cst_21 = arith.constant dense<0xFF800000> : vector<2xf32>
    %44 = vector.multi_reduction <maximumf>, %43, %cst_21 [1] : vector<2x10xf32> to vector<2xf32>
    %45 = vector.shape_cast %44 : vector<2xf32> to vector<2x1xf32>
    %46 = vector.broadcast %45 : vector<2x1xf32> to vector<2x10xf32>
    %47 = arith.subf %43, %46 : vector<2x10xf32>
    %48 = math.exp %47 : vector<2x10xf32>
    %cst_22 = arith.constant dense<0.000000e+00> : vector<2xf32>
    %49 = vector.multi_reduction <add>, %48, %cst_22 [1] : vector<2x10xf32> to vector<2xf32>
    %50 = vector.shape_cast %49 : vector<2xf32> to vector<2x1xf32>
    %51 = vector.broadcast %50 : vector<2x1xf32> to vector<2x10xf32>
    %52 = arith.divf %48, %51 : vector<2x10xf32>
    %c0_23 = arith.constant 0 : index
    %c20 = arith.constant 20 : index
    %53 = vector.load %arg9[%c0_23, %c20] : memref<2x80xf32, #tpu.memory_space<vmem>>, vector<2x10xf32>
    tpu.vector_store %arg9[%c0_23, %c20], %52 {strides = array<i32>} : memref<2x80xf32, #tpu.memory_space<vmem>>, vector<2x10xf32>,
    %54 = vector.extract_strided_slice %20 {offsets = [0, 30], sizes = [2, 10], strides = [1, 1]} : vector<2x80xf32> to vector<2x10xf32>
    %cst_24 = arith.constant dense<0xFF800000> : vector<2xf32>
    %55 = vector.multi_reduction <maximumf>, %54, %cst_24 [1] : vector<2x10xf32> to vector<2xf32>
    %56 = vector.shape_cast %55 : vector<2xf32> to vector<2x1xf32>
    %57 = vector.broadcast %56 : vector<2x1xf32> to vector<2x10xf32>
    %58 = arith.subf %54, %57 : vector<2x10xf32>
    %59 = math.exp %58 : vector<2x10xf32>
    %cst_25 = arith.constant dense<0.000000e+00> : vector<2xf32>
    %60 = vector.multi_reduction <add>, %59, %cst_25 [1] : vector<2x10xf32> to vector<2xf32>
    %61 = vector.shape_cast %60 : vector<2xf32> to vector<2x1xf32>
    %62 = vector.broadcast %61 : vector<2x1xf32> to vector<2x10xf32>
    %63 = arith.divf %59, %62 : vector<2x10xf32>
    %c0_26 = arith.constant 0 : index
    %c30 = arith.constant 30 : index
    %64 = vector.load %arg9[%c0_26, %c30] : memref<2x80xf32, #tpu.memory_space<vmem>>, vector<2x10xf32>
    tpu.vector_store %arg9[%c0_26, %c30], %63 {strides = array<i32>} : memref<2x80xf32, #tpu.memory_space<vmem>>, vector<2x10xf32>,
    %65 = vector.extract_strided_slice %20 {offsets = [0, 40], sizes = [2, 10], strides = [1, 1]} : vector<2x80xf32> to vector<2x10xf32>
    %cst_27 = arith.constant dense<0xFF800000> : vector<2xf32>
    %66 = vector.multi_reduction <maximumf>, %65, %cst_27 [1] : vector<2x10xf32> to vector<2xf32>
    %67 = vector.shape_cast %66 : vector<2xf32> to vector<2x1xf32>
    %68 = vector.broadcast %67 : vector<2x1xf32> to vector<2x10xf32>
    %69 = arith.subf %65, %68 : vector<2x10xf32>
    %70 = math.exp %69 : vector<2x10xf32>
    %cst_28 = arith.constant dense<0.000000e+00> : vector<2xf32>
    %71 = vector.multi_reduction <add>, %70, %cst_28 [1] : vector<2x10xf32> to vector<2xf32>
    %72 = vector.shape_cast %71 : vector<2xf32> to vector<2x1xf32>
    %73 = vector.broadcast %72 : vector<2x1xf32> to vector<2x10xf32>
    %74 = arith.divf %70, %73 : vector<2x10xf32>
    %c0_29 = arith.constant 0 : index
    %c40 = arith.constant 40 : index
    %75 = vector.load %arg9[%c0_29, %c40] : memref<2x80xf32, #tpu.memory_space<vmem>>, vector<2x10xf32>
    tpu.vector_store %arg9[%c0_29, %c40], %74 {strides = array<i32>} : memref<2x80xf32, #tpu.memory_space<vmem>>, vector<2x10xf32>,
    %76 = vector.extract_strided_slice %20 {offsets = [0, 50], sizes = [2, 10], strides = [1, 1]} : vector<2x80xf32> to vector<2x10xf32>
    %cst_30 = arith.constant dense<0xFF800000> : vector<2xf32>
    %77 = vector.multi_reduction <maximumf>, %76, %cst_30 [1] : vector<2x10xf32> to vector<2xf32>
    %78 = vector.shape_cast %77 : vector<2xf32> to vector<2x1xf32>
    %79 = vector.broadcast %78 : vector<2x1xf32> to vector<2x10xf32>
    %80 = arith.subf %76, %79 : vector<2x10xf32>
    %81 = math.exp %80 : vector<2x10xf32>
    %cst_31 = arith.constant dense<0.000000e+00> : vector<2xf32>
    %82 = vector.multi_reduction <add>, %81, %cst_31 [1] : vector<2x10xf32> to vector<2xf32>
    %83 = vector.shape_cast %82 : vector<2xf32> to vector<2x1xf32>
    %84 = vector.broadcast %83 : vector<2x1xf32> to vector<2x10xf32>
    %85 = arith.divf %81, %84 : vector<2x10xf32>
    %c0_32 = arith.constant 0 : index
    %c50 = arith.constant 50 : index
    %86 = vector.load %arg9[%c0_32, %c50] : memref<2x80xf32, #tpu.memory_space<vmem>>, vector<2x10xf32>
    tpu.vector_store %arg9[%c0_32, %c50], %85 {strides = array<i32>} : memref<2x80xf32, #tpu.memory_space<vmem>>, vector<2x10xf32>,
    %87 = vector.extract_strided_slice %20 {offsets = [0, 60], sizes = [2, 10], strides = [1, 1]} : vector<2x80xf32> to vector<2x10xf32>
    %cst_33 = arith.constant dense<0xFF800000> : vector<2xf32>
    %88 = vector.multi_reduction <maximumf>, %87, %cst_33 [1] : vector<2x10xf32> to vector<2xf32>
    %89 = vector.shape_cast %88 : vector<2xf32> to vector<2x1xf32>
    %90 = vector.broadcast %89 : vector<2x1xf32> to vector<2x10xf32>
    %91 = arith.subf %87, %90 : vector<2x10xf32>
    %92 = math.exp %91 : vector<2x10xf32>
    %cst_34 = arith.constant dense<0.000000e+00> : vector<2xf32>
    %93 = vector.multi_reduction <add>, %92, %cst_34 [1] : vector<2x10xf32> to vector<2xf32>
    %94 = vector.shape_cast %93 : vector<2xf32> to vector<2x1xf32>
    %95 = vector.broadcast %94 : vector<2x1xf32> to vector<2x10xf32>
    %96 = arith.divf %92, %95 : vector<2x10xf32>
    %c0_35 = arith.constant 0 : index
    %c60 = arith.constant 60 : index
    %97 = vector.load %arg9[%c0_35, %c60] : memref<2x80xf32, #tpu.memory_space<vmem>>, vector<2x10xf32>
    tpu.vector_store %arg9[%c0_35, %c60], %96 {strides = array<i32>} : memref<2x80xf32, #tpu.memory_space<vmem>>, vector<2x10xf32>,
    %98 = vector.extract_strided_slice %20 {offsets = [0, 70], sizes = [2, 10], strides = [1, 1]} : vector<2x80xf32> to vector<2x10xf32>
    %cst_36 = arith.constant dense<0xFF800000> : vector<2xf32>
    %99 = vector.multi_reduction <maximumf>, %98, %cst_36 [1] : vector<2x10xf32> to vector<2xf32>
    %100 = vector.shape_cast %99 : vector<2xf32> to vector<2x1xf32>
    %101 = vector.broadcast %100 : vector<2x1xf32> to vector<2x10xf32>
    %102 = arith.subf %98, %101 : vector<2x10xf32>
    %103 = math.exp %102 : vector<2x10xf32>
    %cst_37 = arith.constant dense<0.000000e+00> : vector<2xf32>
    %104 = vector.multi_reduction <add>, %103, %cst_37 [1] : vector<2x10xf32> to vector<2xf32>
    %105 = vector.shape_cast %104 : vector<2xf32> to vector<2x1xf32>
    %106 = vector.broadcast %105 : vector<2x1xf32> to vector<2x10xf32>
    %107 = arith.divf %103, %106 : vector<2x10xf32>
    %c0_38 = arith.constant 0 : index
    %c70 = arith.constant 70 : index
    %108 = vector.load %arg9[%c0_38, %c70] : memref<2x80xf32, #tpu.memory_space<vmem>>, vector<2x10xf32>
    tpu.vector_store %arg9[%c0_38, %c70], %107 {strides = array<i32>} : memref<2x80xf32, #tpu.memory_space<vmem>>, vector<2x10xf32>,
    %c0_39 = arith.constant 0 : index
    %c0_40 = arith.constant 0 : index
    %109 = vector.load %arg9[%c0_39, %c0_40] : memref<2x80xf32, #tpu.memory_space<vmem>>, vector<2x80xf32>
    %110 = arith.truncf %109 : vector<2x80xf32> to vector<2x80xbf16>
    %c0_41 = arith.constant 0 : index
    %c0_42 = arith.constant 0 : index
    %111 = vector.load %arg5[%c0_41, %c0_42] : memref<80x1024xbf16, #tpu.memory_space<vmem>>, vector<80x1024xbf16>
    %cst_43 = arith.constant dense<0.000000e+00> : vector<2x1024xf32>
    %112 = tpu.matmul %110, %111, %cst_43 {dimension_numbers = #tpu.dot_dimension_numbers<[1], [0], [0], [1], [0, 0, 1, 1], [], []>} : vector<2x80xbf16>, vector<80x1024xbf16>, vector<2x1024xf32> -> vector<2x1024xf32>
    %c0_44 = arith.constant 0 : index
    %c0_45 = arith.constant 0 : index
    %113 = vector.load %arg6[%c0_44, %c0_45] : memref<1x1024xf32, #tpu.memory_space<vmem>>, vector<1x1024xf32>
    %114 = vector.broadcast %113 : vector<1x1024xf32> to vector<2x1024xf32>
    %115 = arith.addf %112, %114 : vector<2x1024xf32>
    %116 = arith.truncf %115 : vector<2x1024xf32> to vector<2x1024xbf16>
    %c0_46 = arith.constant 0 : index
    %c0_47 = arith.constant 0 : index
    %117 = vector.load %arg8[%c0_46, %c0_47] : memref<2x1024xbf16, #tpu.memory_space<vmem>>, vector<2x1024xbf16>
    tpu.vector_store %arg8[%c0_46, %c0_47], %116 {strides = array<i32>} : memref<2x1024xbf16, #tpu.memory_space<vmem>>, vector<2x1024xbf16>,
    return
  }
  func.func @transform_0(%arg0: i32) -> (i32, i32) {
    %c0_i32 = arith.constant 0 : i32
    %c0_i32_0 = arith.constant 0 : i32
    %c0_i32_1 = arith.constant 0 : i32
    return %c0_i32, %c0_i32_0 : i32, i32
  }
  func.func @transform_1(%arg0: i32) -> (i32, i32) {
    %c0_i32 = arith.constant 0 : i32
    %c0_i32_0 = arith.constant 0 : i32
    %c0_i32_1 = arith.constant 0 : i32
    return %c0_i32, %c0_i32_0 : i32, i32
  }
  func.func @transform_2(%arg0: i32) -> (i32, i32) {
    %c0_i32 = arith.constant 0 : i32
    %c0_i32_0 = arith.constant 0 : i32
    %c0_i32_1 = arith.constant 0 : i32
    return %c0_i32, %c0_i32_0 : i32, i32
  }
  func.func @transform_3(%arg0: i32) -> (i32, i32) {
    %c0_i32 = arith.constant 0 : i32
    %c0_i32_0 = arith.constant 0 : i32
    %c0_i32_1 = arith.constant 0 : i32
    return %c0_i32, %c0_i32_0 : i32, i32
  }
  func.func @transform_4(%arg0: i32) -> (i32, i32) {
    %c0_i32 = arith.constant 0 : i32
    %c0_i32_0 = arith.constant 0 : i32
    %c0_i32_1 = arith.constant 0 : i32
    return %c0_i32, %c0_i32_0 : i32, i32
  }
  func.func @transform_5(%arg0: i32) -> (i32, i32) {
    %c0_i32 = arith.constant 0 : i32
    %c0_i32_0 = arith.constant 0 : i32
    %c0_i32_1 = arith.constant 0 : i32
    return %c0_i32, %c0_i32_0 : i32, i32
  }
  func.func @transform_6(%arg0: i32) -> (i32, i32) {
    %c0_i32 = arith.constant 0 : i32
    %c0_i32_0 = arith.constant 0 : i32
    %c0_i32_1 = arith.constant 0 : i32
    return %c0_i32, %c0_i32_0 : i32, i32
  }
  func.func @transform_7(%arg0: i32) -> (i32, i32) {
    %c0_i32 = arith.constant 0 : i32
    %c0_i32_0 = arith.constant 0 : i32
    %c0_i32_1 = arith.constant 0 : i32
    return %c0_i32, %c0_i32_0 : i32, i32
  }
}

module attributes {stable_mosaic.version = 11 : i64} {
  func.func @_conv_bn_act_kernel(%arg0: i32, %arg1: memref<576x128xbf16, #tpu.memory_space<vmem>>, %arg2: memref<32x576xbf16, #tpu.memory_space<vmem>>, %arg3: memref<32x1xf32, #tpu.memory_space<vmem>>, %arg4: memref<32x1xf32, #tpu.memory_space<vmem>>, %arg5: memref<32x128xbf16, #tpu.memory_space<vmem>>) attributes {dimension_semantics = [#tpu.dimension_semantics<arbitrary>], iteration_bounds = array<i64: 1>, scalar_prefetch = 0 : i64, scratch_operands = 0 : i64, tpu.core_type = #tpu.core_type<tc>, window_params = [{pipeline_mode = #tpu.pipeline_mode<synchronous>, transform_indices = @transform_0, window_bounds = array<i64: 576, 128>}, {pipeline_mode = #tpu.pipeline_mode<synchronous>, transform_indices = @transform_1, window_bounds = array<i64: 32, 576>}, {pipeline_mode = #tpu.pipeline_mode<synchronous>, transform_indices = @transform_2, window_bounds = array<i64: 32, 1>}, {pipeline_mode = #tpu.pipeline_mode<synchronous>, transform_indices = @transform_3, window_bounds = array<i64: 32, 1>}, {pipeline_mode = #tpu.pipeline_mode<synchronous>, transform_indices = @transform_4, window_bounds = array<i64: 32, 128>}]} {
    %c0 = arith.constant 0 : index
    %c0_0 = arith.constant 0 : index
    %0 = vector.load %arg2[%c0, %c0_0] : memref<32x576xbf16, #tpu.memory_space<vmem>>, vector<32x576xbf16>
    %c0_1 = arith.constant 0 : index
    %c0_2 = arith.constant 0 : index
    %1 = vector.load %arg1[%c0_1, %c0_2] : memref<576x128xbf16, #tpu.memory_space<vmem>>, vector<576x128xbf16>
    %cst = arith.constant dense<0.000000e+00> : vector<32x128xf32>
    %2 = tpu.matmul %0, %1, %cst {dimension_numbers = #tpu.dot_dimension_numbers<[1], [0], [0], [1], [0, 0, 1, 1], [], []>} : vector<32x576xbf16>, vector<576x128xbf16>, vector<32x128xf32> -> vector<32x128xf32>
    %cst_3 = arith.constant dense<0.000000e+00> : vector<32xf32>
    %3 = vector.multi_reduction <add>, %2, %cst_3 [1] : vector<32x128xf32> to vector<32xf32>
    %4 = vector.shape_cast %3 : vector<32xf32> to vector<32x1xf32>
    %cst_4 = arith.constant 7.812500e-03 : f32
    %5 = vector.broadcast %cst_4 : f32 to vector<32x1xf32>
    %6 = arith.mulf %4, %5 : vector<32x1xf32>
    %7 = arith.mulf %2, %2 : vector<32x128xf32>
    %cst_5 = arith.constant dense<0.000000e+00> : vector<32xf32>
    %8 = vector.multi_reduction <add>, %7, %cst_5 [1] : vector<32x128xf32> to vector<32xf32>
    %9 = vector.shape_cast %8 : vector<32xf32> to vector<32x1xf32>
    %cst_6 = arith.constant 7.812500e-03 : f32
    %10 = vector.broadcast %cst_6 : f32 to vector<32x1xf32>
    %11 = arith.mulf %9, %10 : vector<32x1xf32>
    %12 = arith.mulf %6, %6 : vector<32x1xf32>
    %13 = arith.subf %11, %12 : vector<32x1xf32>
    %cst_7 = arith.constant 0.000000e+00 : f32
    %14 = vector.broadcast %cst_7 : f32 to vector<32x1xf32>
    %15 = arith.maximumf %13, %14 : vector<32x1xf32>
    %cst_8 = arith.constant 9.99999974E-6 : f32
    %16 = vector.broadcast %cst_8 : f32 to vector<32x1xf32>
    %17 = arith.addf %15, %16 : vector<32x1xf32>
    %18 = math.rsqrt %17 : vector<32x1xf32>
    %c0_9 = arith.constant 0 : index
    %c0_10 = arith.constant 0 : index
    %19 = vector.load %arg3[%c0_9, %c0_10] : memref<32x1xf32, #tpu.memory_space<vmem>>, vector<32x1xf32>
    %20 = arith.mulf %18, %19 : vector<32x1xf32>
    %21 = vector.broadcast %6 : vector<32x1xf32> to vector<32x128xf32>
    %22 = arith.subf %2, %21 : vector<32x128xf32>
    %23 = vector.broadcast %20 : vector<32x1xf32> to vector<32x128xf32>
    %24 = arith.mulf %22, %23 : vector<32x128xf32>
    %c0_11 = arith.constant 0 : index
    %c0_12 = arith.constant 0 : index
    %25 = vector.load %arg4[%c0_11, %c0_12] : memref<32x1xf32, #tpu.memory_space<vmem>>, vector<32x1xf32>
    %26 = vector.broadcast %25 : vector<32x1xf32> to vector<32x128xf32>
    %27 = arith.addf %24, %26 : vector<32x128xf32>
    %cst_13 = arith.constant 0.000000e+00 : f32
    %28 = vector.broadcast %cst_13 : f32 to vector<32x128xf32>
    %29 = arith.maximumf %27, %28 : vector<32x128xf32>
    %30 = arith.truncf %29 : vector<32x128xf32> to vector<32x128xbf16>
    %c0_14 = arith.constant 0 : index
    %c0_15 = arith.constant 0 : index
    %31 = vector.load %arg5[%c0_14, %c0_15] : memref<32x128xbf16, #tpu.memory_space<vmem>>, vector<32x128xbf16>
    tpu.vector_store %arg5[%c0_14, %c0_15], %30 {strides = array<i32>} : memref<32x128xbf16, #tpu.memory_space<vmem>>, vector<32x128xbf16>,
    return
  }
  func.func @transform_0(%arg0: i32) -> (i32, i32) {
    %c0_i32 = arith.constant 0 : i32
    %c0_i32_0 = arith.constant 0 : i32
    %c0_i32_1 = arith.constant 0 : i32
    return %c0_i32, %c0_i32_0 : i32, i32
  }
  func.func @transform_1(%arg0: i32) -> (i32, i32) {
    %c0_i32 = arith.constant 0 : i32
    %c0_i32_0 = arith.constant 0 : i32
    %c0_i32_1 = arith.constant 0 : i32
    return %c0_i32, %c0_i32_0 : i32, i32
  }
  func.func @transform_2(%arg0: i32) -> (i32, i32) {
    %c0_i32 = arith.constant 0 : i32
    %c0_i32_0 = arith.constant 0 : i32
    %c0_i32_1 = arith.constant 0 : i32
    return %c0_i32, %c0_i32_0 : i32, i32
  }
  func.func @transform_3(%arg0: i32) -> (i32, i32) {
    %c0_i32 = arith.constant 0 : i32
    %c0_i32_0 = arith.constant 0 : i32
    %c0_i32_1 = arith.constant 0 : i32
    return %c0_i32, %c0_i32_0 : i32, i32
  }
  func.func @transform_4(%arg0: i32) -> (i32, i32) {
    %c0_i32 = arith.constant 0 : i32
    %c0_i32_0 = arith.constant 0 : i32
    %c0_i32_1 = arith.constant 0 : i32
    return %c0_i32, %c0_i32_0 : i32, i32
  }
}

module attributes {stable_mosaic.version = 11 : i64} {
  func.func @_conv_bn_act_kernel(%arg0: i32, %arg1: memref<288x512xbf16, #tpu.memory_space<vmem>>, %arg2: memref<16x288xbf16, #tpu.memory_space<vmem>>, %arg3: memref<16x1xf32, #tpu.memory_space<vmem>>, %arg4: memref<16x1xf32, #tpu.memory_space<vmem>>, %arg5: memref<16x512xbf16, #tpu.memory_space<vmem>>) attributes {dimension_semantics = [#tpu.dimension_semantics<arbitrary>], iteration_bounds = array<i64: 1>, scalar_prefetch = 0 : i64, scratch_operands = 0 : i64, tpu.core_type = #tpu.core_type<tc>, window_params = [{pipeline_mode = #tpu.pipeline_mode<synchronous>, transform_indices = @transform_0, window_bounds = array<i64: 288, 512>}, {pipeline_mode = #tpu.pipeline_mode<synchronous>, transform_indices = @transform_1, window_bounds = array<i64: 16, 288>}, {pipeline_mode = #tpu.pipeline_mode<synchronous>, transform_indices = @transform_2, window_bounds = array<i64: 16, 1>}, {pipeline_mode = #tpu.pipeline_mode<synchronous>, transform_indices = @transform_3, window_bounds = array<i64: 16, 1>}, {pipeline_mode = #tpu.pipeline_mode<synchronous>, transform_indices = @transform_4, window_bounds = array<i64: 16, 512>}]} {
    %c0 = arith.constant 0 : index
    %c0_0 = arith.constant 0 : index
    %0 = vector.load %arg2[%c0, %c0_0] : memref<16x288xbf16, #tpu.memory_space<vmem>>, vector<16x288xbf16>
    %c0_1 = arith.constant 0 : index
    %c0_2 = arith.constant 0 : index
    %1 = vector.load %arg1[%c0_1, %c0_2] : memref<288x512xbf16, #tpu.memory_space<vmem>>, vector<288x512xbf16>
    %cst = arith.constant dense<0.000000e+00> : vector<16x512xf32>
    %2 = tpu.matmul %0, %1, %cst {dimension_numbers = #tpu.dot_dimension_numbers<[1], [0], [0], [1], [0, 0, 1, 1], [], []>} : vector<16x288xbf16>, vector<288x512xbf16>, vector<16x512xf32> -> vector<16x512xf32>
    %cst_3 = arith.constant dense<0.000000e+00> : vector<16xf32>
    %3 = vector.multi_reduction <add>, %2, %cst_3 [1] : vector<16x512xf32> to vector<16xf32>
    %4 = vector.shape_cast %3 : vector<16xf32> to vector<16x1xf32>
    %cst_4 = arith.constant 0.001953125 : f32
    %5 = vector.broadcast %cst_4 : f32 to vector<16x1xf32>
    %6 = arith.mulf %4, %5 : vector<16x1xf32>
    %7 = arith.mulf %2, %2 : vector<16x512xf32>
    %cst_5 = arith.constant dense<0.000000e+00> : vector<16xf32>
    %8 = vector.multi_reduction <add>, %7, %cst_5 [1] : vector<16x512xf32> to vector<16xf32>
    %9 = vector.shape_cast %8 : vector<16xf32> to vector<16x1xf32>
    %cst_6 = arith.constant 0.001953125 : f32
    %10 = vector.broadcast %cst_6 : f32 to vector<16x1xf32>
    %11 = arith.mulf %9, %10 : vector<16x1xf32>
    %12 = arith.mulf %6, %6 : vector<16x1xf32>
    %13 = arith.subf %11, %12 : vector<16x1xf32>
    %cst_7 = arith.constant 0.000000e+00 : f32
    %14 = vector.broadcast %cst_7 : f32 to vector<16x1xf32>
    %15 = arith.maximumf %13, %14 : vector<16x1xf32>
    %cst_8 = arith.constant 9.99999974E-6 : f32
    %16 = vector.broadcast %cst_8 : f32 to vector<16x1xf32>
    %17 = arith.addf %15, %16 : vector<16x1xf32>
    %18 = math.rsqrt %17 : vector<16x1xf32>
    %c0_9 = arith.constant 0 : index
    %c0_10 = arith.constant 0 : index
    %19 = vector.load %arg3[%c0_9, %c0_10] : memref<16x1xf32, #tpu.memory_space<vmem>>, vector<16x1xf32>
    %20 = arith.mulf %18, %19 : vector<16x1xf32>
    %21 = vector.broadcast %6 : vector<16x1xf32> to vector<16x512xf32>
    %22 = arith.subf %2, %21 : vector<16x512xf32>
    %23 = vector.broadcast %20 : vector<16x1xf32> to vector<16x512xf32>
    %24 = arith.mulf %22, %23 : vector<16x512xf32>
    %c0_11 = arith.constant 0 : index
    %c0_12 = arith.constant 0 : index
    %25 = vector.load %arg4[%c0_11, %c0_12] : memref<16x1xf32, #tpu.memory_space<vmem>>, vector<16x1xf32>
    %26 = vector.broadcast %25 : vector<16x1xf32> to vector<16x512xf32>
    %27 = arith.addf %24, %26 : vector<16x512xf32>
    %cst_13 = arith.constant 0.000000e+00 : f32
    %28 = vector.broadcast %cst_13 : f32 to vector<16x512xf32>
    %29 = arith.maximumf %27, %28 : vector<16x512xf32>
    %30 = arith.truncf %29 : vector<16x512xf32> to vector<16x512xbf16>
    %c0_14 = arith.constant 0 : index
    %c0_15 = arith.constant 0 : index
    %31 = vector.load %arg5[%c0_14, %c0_15] : memref<16x512xbf16, #tpu.memory_space<vmem>>, vector<16x512xbf16>
    tpu.vector_store %arg5[%c0_14, %c0_15], %30 {strides = array<i32>} : memref<16x512xbf16, #tpu.memory_space<vmem>>, vector<16x512xbf16>,
    return
  }
  func.func @transform_0(%arg0: i32) -> (i32, i32) {
    %c0_i32 = arith.constant 0 : i32
    %c0_i32_0 = arith.constant 0 : i32
    %c0_i32_1 = arith.constant 0 : i32
    return %c0_i32, %c0_i32_0 : i32, i32
  }
  func.func @transform_1(%arg0: i32) -> (i32, i32) {
    %c0_i32 = arith.constant 0 : i32
    %c0_i32_0 = arith.constant 0 : i32
    %c0_i32_1 = arith.constant 0 : i32
    return %c0_i32, %c0_i32_0 : i32, i32
  }
  func.func @transform_2(%arg0: i32) -> (i32, i32) {
    %c0_i32 = arith.constant 0 : i32
    %c0_i32_0 = arith.constant 0 : i32
    %c0_i32_1 = arith.constant 0 : i32
    return %c0_i32, %c0_i32_0 : i32, i32
  }
  func.func @transform_3(%arg0: i32) -> (i32, i32) {
    %c0_i32 = arith.constant 0 : i32
    %c0_i32_0 = arith.constant 0 : i32
    %c0_i32_1 = arith.constant 0 : i32
    return %c0_i32, %c0_i32_0 : i32, i32
  }
  func.func @transform_4(%arg0: i32) -> (i32, i32) {
    %c0_i32 = arith.constant 0 : i32
    %c0_i32_0 = arith.constant 0 : i32
    %c0_i32_1 = arith.constant 0 : i32
    return %c0_i32, %c0_i32_0 : i32, i32
  }
}

module attributes {stable_mosaic.version = 11 : i64} {
  func.func @_head_kernel(%arg0: i32, %arg1: memref<144x1568xbf16, #tpu.memory_space<vmem>>, %arg2: memref<16x144xbf16, #tpu.memory_space<vmem>>, %arg3: memref<16x1xf32, #tpu.memory_space<vmem>>, %arg4: memref<16x1xf32, #tpu.memory_space<vmem>>, %arg5: memref<16x1xf32, #tpu.memory_space<vmem>>, %arg6: memref<1x1xf32, #tpu.memory_space<vmem>>, %arg7: memref<1x1568xf32, #tpu.memory_space<vmem>>) attributes {dimension_semantics = [#tpu.dimension_semantics<arbitrary>], iteration_bounds = array<i64: 1>, scalar_prefetch = 0 : i64, scratch_operands = 0 : i64, tpu.core_type = #tpu.core_type<tc>, window_params = [{pipeline_mode = #tpu.pipeline_mode<synchronous>, transform_indices = @transform_0, window_bounds = array<i64: 144, 1568>}, {pipeline_mode = #tpu.pipeline_mode<synchronous>, transform_indices = @transform_1, window_bounds = array<i64: 16, 144>}, {pipeline_mode = #tpu.pipeline_mode<synchronous>, transform_indices = @transform_2, window_bounds = array<i64: 16, 1>}, {pipeline_mode = #tpu.pipeline_mode<synchronous>, transform_indices = @transform_3, window_bounds = array<i64: 16, 1>}, {pipeline_mode = #tpu.pipeline_mode<synchronous>, transform_indices = @transform_4, window_bounds = array<i64: 16, 1>}, {pipeline_mode = #tpu.pipeline_mode<synchronous>, transform_indices = @transform_5, window_bounds = array<i64: 1, 1>}, {pipeline_mode = #tpu.pipeline_mode<synchronous>, transform_indices = @transform_6, window_bounds = array<i64: 1, 1568>}]} {
    %c0 = arith.constant 0 : index
    %c0_0 = arith.constant 0 : index
    %0 = vector.load %arg2[%c0, %c0_0] : memref<16x144xbf16, #tpu.memory_space<vmem>>, vector<16x144xbf16>
    %c0_1 = arith.constant 0 : index
    %c0_2 = arith.constant 0 : index
    %1 = vector.load %arg1[%c0_1, %c0_2] : memref<144x1568xbf16, #tpu.memory_space<vmem>>, vector<144x1568xbf16>
    %cst = arith.constant dense<0.000000e+00> : vector<16x1568xf32>
    %2 = tpu.matmul %0, %1, %cst {dimension_numbers = #tpu.dot_dimension_numbers<[1], [0], [0], [1], [0, 0, 1, 1], [], []>} : vector<16x144xbf16>, vector<144x1568xbf16>, vector<16x1568xf32> -> vector<16x1568xf32>
    %cst_3 = arith.constant dense<0.000000e+00> : vector<16xf32>
    %3 = vector.multi_reduction <add>, %2, %cst_3 [1] : vector<16x1568xf32> to vector<16xf32>
    %4 = vector.shape_cast %3 : vector<16xf32> to vector<16x1xf32>
    %cst_4 = arith.constant 6.37755089E-4 : f32
    %5 = vector.broadcast %cst_4 : f32 to vector<16x1xf32>
    %6 = arith.mulf %4, %5 : vector<16x1xf32>
    %7 = arith.mulf %2, %2 : vector<16x1568xf32>
    %cst_5 = arith.constant dense<0.000000e+00> : vector<16xf32>
    %8 = vector.multi_reduction <add>, %7, %cst_5 [1] : vector<16x1568xf32> to vector<16xf32>
    %9 = vector.shape_cast %8 : vector<16xf32> to vector<16x1xf32>
    %cst_6 = arith.constant 6.37755089E-4 : f32
    %10 = vector.broadcast %cst_6 : f32 to vector<16x1xf32>
    %11 = arith.mulf %9, %10 : vector<16x1xf32>
    %12 = arith.mulf %6, %6 : vector<16x1xf32>
    %13 = arith.subf %11, %12 : vector<16x1xf32>
    %cst_7 = arith.constant 0.000000e+00 : f32
    %14 = vector.broadcast %cst_7 : f32 to vector<16x1xf32>
    %15 = arith.maximumf %13, %14 : vector<16x1xf32>
    %cst_8 = arith.constant 9.99999974E-6 : f32
    %16 = vector.broadcast %cst_8 : f32 to vector<16x1xf32>
    %17 = arith.addf %15, %16 : vector<16x1xf32>
    %18 = math.rsqrt %17 : vector<16x1xf32>
    %c0_9 = arith.constant 0 : index
    %c0_10 = arith.constant 0 : index
    %19 = vector.load %arg3[%c0_9, %c0_10] : memref<16x1xf32, #tpu.memory_space<vmem>>, vector<16x1xf32>
    %20 = arith.mulf %18, %19 : vector<16x1xf32>
    %21 = vector.broadcast %6 : vector<16x1xf32> to vector<16x1568xf32>
    %22 = arith.subf %2, %21 : vector<16x1568xf32>
    %23 = vector.broadcast %20 : vector<16x1xf32> to vector<16x1568xf32>
    %24 = arith.mulf %22, %23 : vector<16x1568xf32>
    %c0_11 = arith.constant 0 : index
    %c0_12 = arith.constant 0 : index
    %25 = vector.load %arg4[%c0_11, %c0_12] : memref<16x1xf32, #tpu.memory_space<vmem>>, vector<16x1xf32>
    %26 = vector.broadcast %25 : vector<16x1xf32> to vector<16x1568xf32>
    %27 = arith.addf %24, %26 : vector<16x1568xf32>
    %cst_13 = arith.constant 0.000000e+00 : f32
    %28 = vector.broadcast %cst_13 : f32 to vector<16x1568xf32>
    %29 = arith.cmpf oge, %27, %28 : vector<16x1568xf32>
    %cst_14 = arith.constant 0.00999999977 : f32
    %30 = vector.broadcast %cst_14 : f32 to vector<16x1568xf32>
    %31 = arith.mulf %30, %27 : vector<16x1568xf32>
    %32 = arith.select %29, %27, %31 : vector<16x1568xi1>, vector<16x1568xf32>
    %c0_15 = arith.constant 0 : index
    %c0_16 = arith.constant 0 : index
    %33 = vector.load %arg5[%c0_15, %c0_16] : memref<16x1xf32, #tpu.memory_space<vmem>>, vector<16x1xf32>
    %34 = vector.broadcast %33 : vector<16x1xf32> to vector<16x1568xf32>
    %35 = arith.mulf %32, %34 : vector<16x1568xf32>
    %cst_17 = arith.constant dense<0.000000e+00> : vector<1568xf32>
    %36 = vector.multi_reduction <add>, %35, %cst_17 [0] : vector<16x1568xf32> to vector<1568xf32>
    %37 = vector.shape_cast %36 : vector<1568xf32> to vector<1x1568xf32>
    %c0_18 = arith.constant 0 : index
    %c0_19 = arith.constant 0 : index
    %38 = vector.load %arg6[%c0_18, %c0_19] : memref<1x1xf32, #tpu.memory_space<vmem>>, vector<1x1xf32>
    %39 = vector.broadcast %38 : vector<1x1xf32> to vector<1x1568xf32>
    %40 = arith.addf %37, %39 : vector<1x1568xf32>
    %41 = math.tanh %40 : vector<1x1568xf32>
    %c0_20 = arith.constant 0 : index
    %c0_21 = arith.constant 0 : index
    %42 = vector.load %arg7[%c0_20, %c0_21] : memref<1x1568xf32, #tpu.memory_space<vmem>>, vector<1x1568xf32>
    tpu.vector_store %arg7[%c0_20, %c0_21], %41 {strides = array<i32>} : memref<1x1568xf32, #tpu.memory_space<vmem>>, vector<1x1568xf32>,
    return
  }
  func.func @transform_0(%arg0: i32) -> (i32, i32) {
    %c0_i32 = arith.constant 0 : i32
    %c0_i32_0 = arith.constant 0 : i32
    %c0_i32_1 = arith.constant 0 : i32
    return %c0_i32, %c0_i32_0 : i32, i32
  }
  func.func @transform_1(%arg0: i32) -> (i32, i32) {
    %c0_i32 = arith.constant 0 : i32
    %c0_i32_0 = arith.constant 0 : i32
    %c0_i32_1 = arith.constant 0 : i32
    return %c0_i32, %c0_i32_0 : i32, i32
  }
  func.func @transform_2(%arg0: i32) -> (i32, i32) {
    %c0_i32 = arith.constant 0 : i32
    %c0_i32_0 = arith.constant 0 : i32
    %c0_i32_1 = arith.constant 0 : i32
    return %c0_i32, %c0_i32_0 : i32, i32
  }
  func.func @transform_3(%arg0: i32) -> (i32, i32) {
    %c0_i32 = arith.constant 0 : i32
    %c0_i32_0 = arith.constant 0 : i32
    %c0_i32_1 = arith.constant 0 : i32
    return %c0_i32, %c0_i32_0 : i32, i32
  }
  func.func @transform_4(%arg0: i32) -> (i32, i32) {
    %c0_i32 = arith.constant 0 : i32
    %c0_i32_0 = arith.constant 0 : i32
    %c0_i32_1 = arith.constant 0 : i32
    return %c0_i32, %c0_i32_0 : i32, i32
  }
  func.func @transform_5(%arg0: i32) -> (i32, i32) {
    %c0_i32 = arith.constant 0 : i32
    %c0_i32_0 = arith.constant 0 : i32
    %c0_i32_1 = arith.constant 0 : i32
    return %c0_i32, %c0_i32_0 : i32, i32
  }
  func.func @transform_6(%arg0: i32) -> (i32, i32) {
    %c0_i32 = arith.constant 0 : i32
    %c0_i32_0 = arith.constant 0 : i32
    %c0_i32_1 = arith.constant 0 : i32
    return %c0_i32, %c0_i32_0 : i32, i32
  }
}

</mosaic_0001>

<llo_original>
// kernel: cvae_forward.7
$region0: #{cvae_forward.7}
  #allocation0 [shape = 'u32[]', space=smem, size = 0x4, offset = 0x4, fixed_abs, tag = 'smem constant byte address 0x4 - core index']
  #allocation1 [shape = 'u32[144,128]{1,0:T(1,128)}', space=vmem, size = 0x12000, scoped, tag = 'internal scratch']
  %s0 = inlined_call_operand.vmem [shape: bf16[16,512], index: 0, kind: input, shape index: {}]
  %s1 = inlined_call_operand.hbm [shape: bf16[16,16], index: 1, kind: input, shape index: {}]
  %s2 = inlined_call_operand.vmem [shape: f32[16,1], index: 2, kind: input, shape index: {}]
  %s3 = inlined_call_operand.vmem [shape: f32[16,1], index: 3, kind: input, shape index: {}]
  %s4 = inlined_call_operand.vmem [shape: bf16[16,512], index: 4, kind: output, shape index: {}]
  %s5 = sld [smem:[#allocation0]]
  $region30: #{cvae_forward.7} parent=0
    _
  %s7 = ssub.s32 1, %s5
  %s8 = scalar_select 0, %s7, %s5
  $region1: #{cvae_forward.7} parent=0
    #allocation2 [shape = 'u8[4096]{0}', space=vmem, size = 0x1000, scoped, tag = 'input window, operand 1, single buffered']
    #allocation3 [shape = 's32[1]{0}', space=sflag, size = 0x4, scoped, tag = 'scoped memory for cvae_forward.7']
    %9 = vsyncpa [#allocation3], 0
    // Predicated region
    $region2: #{cvae_forward.7} parent=1 // pred_check
      _
    $region3: #{cvae_forward.7} parent=1 // pred_check_branch
      %11 = sbr.rel (0) target = $region5
    $region4: #{cvae_forward.7} parent=1 // pred_region
      _
    $region5: #{cvae_forward.7} parent=1 // pred_fallthru
      _
    // Predicated region
    $region6: #{cvae_forward.7} parent=1 // pred_check
      _
    $region7: #{cvae_forward.7} parent=1 // pred_check_branch
      %13 = sbr.rel (0) target = $region9
    $region8: #{cvae_forward.7} parent=1 // pred_region
      %s15 = ssub.s32 128, 128
      %16 = vsyncadd [#allocation3], %s15
      %s17 = sshll.u32 [#allocation2], 4
      %s18 = int_to_ptr.vmem [resolvable:$true] %s17
      %23 = dma.hbm_to_vmem [thread:$0]  %s1, 128, %s18, [#allocation3], 64, 64, 4
    $region9: #{cvae_forward.7} parent=1 // pred_fallthru
      _
    // Predicated region
    $region10: #{cvae_forward.7} parent=1 // pred_check
      _
    $region11: #{cvae_forward.7} parent=1 // pred_check_branch
      %25 = sbr.rel (0) target = $region13
    $region12: #{cvae_forward.7} parent=1 // pred_region
      _
    $region13: #{cvae_forward.7} parent=1 // pred_fallthru
      _
    // Predicated region
    $region14: #{cvae_forward.7} parent=1 // pred_check
      _
    $region15: #{cvae_forward.7} parent=1 // pred_check_branch
      %27 = sbr.rel (0) target = $region17
    $region16: #{cvae_forward.7} parent=1 // pred_region
      _
    $region17: #{cvae_forward.7} parent=1 // pred_fallthru
      _
    // Predicated region
    $region18: #{cvae_forward.7} parent=1 // pred_check
      _
    $region19: #{cvae_forward.7} parent=1 // pred_check_branch
      %29 = sbr.rel (0) target = $region21
    $region20: #{cvae_forward.7} parent=1 // pred_region
      %30 = dma.done [#allocation3], 128
    $region21: #{cvae_forward.7} parent=1 // pred_fallthru
      _
    %v32 = vld [vmem:[#allocation2] sm:$0xf]
    %v33 = vld [vmem:[#allocation2 + $0x4] sm:$0xf]
    %v34 = vld [vmem:[%s0] sm:$0xff]
    %v35 = vld [vmem:[%s0 + $0x8] sm:$0xff]
    %v36 = vld [vmem:[%s0 + $0x10] sm:$0xff]
    %v37 = vld [vmem:[%s0 + $0x18] sm:$0xff]
    %v40 = vunpack.c.l.b16 %v32
    %v41 = vunpack.c.l.b16 %v33
    %v42 = vpack.c.b16 %v41, %v40
    %v47 = vunpack.c.l.b16 %v34
    %v48 = vunpack.c.h.b16 %v34
    %v49 = vunpack.c.l.b16 %v35
    %v50 = vunpack.c.h.b16 %v35
    %v51 = vunpack.c.l.b16 %v36
    %v52 = vunpack.c.h.b16 %v36
    %v53 = vunpack.c.l.b16 %v37
    %v54 = vunpack.c.h.b16 %v37
    %v55 = vpack.c.b16 %v51, %v47
    %v56 = vpack.c.b16 %v52, %v48
    %v57 = vpack.c.b16 %v53, %v49
    %v58 = vpack.c.b16 %v54, %v50
    %vm63 = vcmask 130048
    %v65 = vsel %vm63, %v42, 0
    %67 = vmatprep.subr.bf16.mxu0 0
    %68 = vmatpush1.bf16.msra.mxu0 0
    %69 = vmatprep.subr.bf16.mxu0 0
    %70 = vmatpush1.bf16.msra.mxu0 0
    %71 = vmatprep.subr.bf16.mxu0 0
    %72 = vmatpush1.bf16.msra.mxu0 0
    %73 = vmatprep.subr.bf16.mxu0 0
    %74 = vmatpush1.bf16.msra.mxu0 0
    %75 = vmatprep.subr.bf16.mxu0 0
    %76 = vmatpush1.bf16.msra.mxu0 0
    %77 = vmatprep.subr.bf16.mxu0 0
    %78 = vmatpush1.bf16.msra.mxu0 0
    %79 = vmatprep.subr.bf16.mxu0 0
    %80 = vmatpush1.bf16.msra.mxu0 0
    %81 = vmatprep.subr.bf16.mxu0 %v56
    %82 = vmatpush1.bf16.msra.mxu0 %v55
    %83 = vmatprep.subr.bf16.mxu0 0
    %84 = vmatpush2.bf16.msra.mxu0 0
    %85 = vmatprep.subr.bf16.mxu0 0
    %86 = vmatpush2.bf16.msra.mxu0 0
    %87 = vmatprep.subr.bf16.mxu0 0
    %88 = vmatpush2.bf16.msra.mxu0 0
    %89 = vmatprep.subr.bf16.mxu0 0
    %90 = vmatpush2.bf16.msra.mxu0 0
    %91 = vmatprep.subr.bf16.mxu0 0
    %92 = vmatpush2.bf16.msra.mxu0 0
    %93 = vmatprep.subr.bf16.mxu0 0
    %94 = vmatpush2.bf16.msra.mxu0 0
    %95 = vmatprep.subr.bf16.mxu0 0
    %96 = vmatpush2.bf16.msra.mxu0 0
    %97 = vmatprep.subr.bf16.mxu0 0
    %98 = vmatpush2.bf16.msra.mxu0 0
    %99 = vmatprep.mubr.bf16.mxu0 0
    %100 = vmatmul.mubr.bf16.gmra.mxu0 %v65
    %v101 = vpop.f32.mrf.mxu0
    %v102 = vadd.f32 0.0, %v101
    %v103 = vpop.f32.mrf.mxu0
    %v104 = vadd.f32 0.0, %v103
    %v105 = vpop.f32.mrf.mxu0
    %v106 = vadd.f32 0.0, %v105
    %v107 = vpop.f32.mrf.mxu0
    %v108 = vadd.f32 0.0, %v107
    %109 = vdwg.mxu0
    %110 = vmatprep.subr.bf16.mxu0 0
    %111 = vmatpush1.bf16.msra.mxu0 0
    %112 = vmatprep.subr.bf16.mxu0 0
    %113 = vmatpush1.bf16.msra.mxu0 0
    %114 = vmatprep.subr.bf16.mxu0 0
    %115 = vmatpush1.bf16.msra.mxu0 0
    %116 = vmatprep.subr.bf16.mxu0 0
    %117 = vmatpush1.bf16.msra.mxu0 0
    %118 = vmatprep.subr.bf16.mxu0 0
    %119 = vmatpush1.bf16.msra.mxu0 0
    %120 = vmatprep.subr.bf16.mxu0 0
    %121 = vmatpush1.bf16.msra.mxu0 0
    %122 = vmatprep.subr.bf16.mxu0 0
    %123 = vmatpush1.bf16.msra.mxu0 0
    %124 = vmatprep.subr.bf16.mxu0 %v58
    %125 = vmatpush1.bf16.msra.mxu0 %v57
    %126 = vmatprep.subr.bf16.mxu0 0
    %127 = vmatpush2.bf16.msra.mxu0 0
    %128 = vmatprep.subr.bf16.mxu0 0
    %129 = vmatpush2.bf16.msra.mxu0 0
    %130 = vmatprep.subr.bf16.mxu0 0
    %131 = vmatpush2.bf16.msra.mxu0 0
    %132 = vmatprep.subr.bf16.mxu0 0
    %133 = vmatpush2.bf16.msra.mxu0 0
    %134 = vmatprep.subr.bf16.mxu0 0
    %135 = vmatpush2.bf16.msra.mxu0 0
    %136 = vmatprep.subr.bf16.mxu0 0
    %137 = vmatpush2.bf16.msra.mxu0 0
    %138 = vmatprep.subr.bf16.mxu0 0
    %139 = vmatpush2.bf16.msra.mxu0 0
    %140 = vmatprep.subr.bf16.mxu0 0
    %141 = vmatpush2.bf16.msra.mxu0 0
    %142 = vmatprep.mubr.bf16.mxu0 0
    %143 = vmatmul.mubr.bf16.gmra.mxu0 %v65
    %v144 = vpop.f32.mrf.mxu0
    %v145 = vadd.f32 0.0, %v144
    %v146 = vpop.f32.mrf.mxu0
    %v147 = vadd.f32 0.0, %v146
    %v148 = vpop.f32.mrf.mxu0
    %v149 = vadd.f32 0.0, %v148
    %v150 = vpop.f32.mrf.mxu0
    %v151 = vadd.f32 0.0, %v150
    %152 = vdwg.mxu0
    %v153 = vadd.f32 %v102, %v104
    %v154 = vadd.f32 %v153, %v145
    %v155 = vadd.f32 %v154, %v147
    %156 = vadd.xlane.f32.xlu0 %v155
    %v157 = vpop.xlane.xlu0 %156
    %v158 = vadd.f32 %v106, %v108
    %v159 = vadd.f32 %v158, %v149
    %v160 = vadd.f32 %v159, %v151
    %161 = vadd.xlane.f32.xlu0 %v160
    %v162 = vpop.xlane.xlu0 %161
    %v163 = vmul.f32 %v157, 0.001953125
    %v164 = vmul.f32 %v162, 0.001953125
    %v165 = vmul.f32 %v102, %v102
    %v166 = vmul.f32 %v104, %v104
    %v167 = vmul.f32 %v145, %v145
    %v168 = vmul.f32 %v147, %v147
    %v169 = vmul.f32 %v106, %v106
    %v170 = vmul.f32 %v108, %v108
    %v171 = vmul.f32 %v149, %v149
    %v172 = vmul.f32 %v151, %v151
    %v173 = vadd.f32 %v165, %v166
    %v174 = vadd.f32 %v173, %v167
    %v175 = vadd.f32 %v174, %v168
    %176 = vadd.xlane.f32.xlu0 %v175
    %v177 = vpop.xlane.xlu0 %176
    %v178 = vadd.f32 %v169, %v170
    %v179 = vadd.f32 %v178, %v171
    %v180 = vadd.f32 %v179, %v172
    %181 = vadd.xlane.f32.xlu0 %v180
    %v182 = vpop.xlane.xlu0 %181
    %v183 = vmul.f32 %v177, 0.001953125
    %v184 = vmul.f32 %v182, 0.001953125
    %v185 = vmul.f32 %v163, %v163
    %v186 = vmul.f32 %v164, %v164
    %v187 = vsub.f32 %v183, %v185
    %v188 = vsub.f32 %v184, %v186
    %v189 = vmax.f32 %v187, 0.0
    %v190 = vmax.f32 %v188, 0.0
    %v191 = vadd.f32 %v189, 1e-05
    %v192 = vadd.f32 %v190, 1e-05
    %v193 = vrsqrt.pop %v191
    %v194 = vrsqrt.pop %v192
    %v195 = vld [vmem:[%s2] sm:$0xff]
    %v196 = vld [vmem:[%s2 + $0x8] sm:$0xff]
    %v197 = vmul.f32 %v193, %v195
    %v198 = vmul.f32 %v194, %v196
    %v199 = vsub.f32 %v102, %v163
    %v200 = vsub.f32 %v104, %v163
    %v201 = vsub.f32 %v145, %v163
    %v202 = vsub.f32 %v147, %v163
    %v203 = vsub.f32 %v106, %v164
    %v204 = vsub.f32 %v108, %v164
    %v205 = vsub.f32 %v149, %v164
    %v206 = vsub.f32 %v151, %v164
    %208 = vset.pattern.permute.xlu0 0
    %209 = vperm.xlu0 %208, %v197
    %v210 = vpop.permute.xlu0 %209
    %213 = vset.pattern.permute.xlu0 0
    %214 = vperm.xlu0 %213, %v198
    %v215 = vpop.permute.xlu0 %214
    %v217 = vmul.f32 %v199, %v210
    %v218 = vmul.f32 %v200, %v210
    %v219 = vmul.f32 %v201, %v210
    %v220 = vmul.f32 %v202, %v210
    %v221 = vmul.f32 %v203, %v215
    %v222 = vmul.f32 %v204, %v215
    %v223 = vmul.f32 %v205, %v215
    %v224 = vmul.f32 %v206, %v215
    %v225 = vld [vmem:[%s3] sm:$0xff]
    %v226 = vld [vmem:[%s3 + $0x8] sm:$0xff]
    %228 = vset.pattern.permute.xlu0 0
    %229 = vperm.xlu0 %228, %v225
    %v230 = vpop.permute.xlu0 %229
    %233 = vset.pattern.permute.xlu0 0
    %234 = vperm.xlu0 %233, %v226
    %v235 = vpop.permute.xlu0 %234
    %v237 = vadd.f32 %v217, %v230
    %v238 = vadd.f32 %v218, %v230
    %v239 = vadd.f32 %v219, %v230
    %v240 = vadd.f32 %v220, %v230
    %v241 = vadd.f32 %v221, %v235
    %v242 = vadd.f32 %v222, %v235
    %v243 = vadd.f32 %v223, %v235
    %v244 = vadd.f32 %v224, %v235
    %v245 = vmax.f32 %v237, 0.0
    %v246 = vmax.f32 %v238, 0.0
    %v247 = vmax.f32 %v239, 0.0
    %v248 = vmax.f32 %v240, 0.0
    %v249 = vmax.f32 %v241, 0.0
    %v250 = vmax.f32 %v242, 0.0
    %v251 = vmax.f32 %v243, 0.0
    %v252 = vmax.f32 %v244, 0.0
    %v253 = vpack.c.bf16 %v249, %v245
    %v254 = vpack.c.bf16 %v250, %v246
    %v255 = vpack.c.bf16 %v251, %v247
    %v256 = vpack.c.bf16 %v252, %v248
    %v261 = vunpack.c.l.b16 %v253
    %v262 = vunpack.c.l.b16 %v254
    %v263 = vunpack.c.l.b16 %v255
    %v264 = vunpack.c.l.b16 %v256
    %v265 = vunpack.c.h.b16 %v253
    %v266 = vunpack.c.h.b16 %v254
    %v267 = vunpack.c.h.b16 %v255
    %v268 = vunpack.c.h.b16 %v256
    %v269 = vpack.c.b16 %v262, %v261
    %v270 = vpack.c.b16 %v264, %v263
    %v271 = vpack.c.b16 %v266, %v265
    %v272 = vpack.c.b16 %v268, %v267
    %277 = vst [vmem:[%s4] sm:$0xff] %v269
    %278 = vst [vmem:[%s4 + $0x8] sm:$0xff] %v270
    %279 = vst [vmem:[%s4 + $0x10] sm:$0xff] %v271
    %280 = vst [vmem:[%s4 + $0x18] sm:$0xff] %v272
    // Predicated region
    $region22: #{cvae_forward.7} parent=1 // pred_check
      _
    $region23: #{cvae_forward.7} parent=1 // pred_check_branch
      %282 = sbr.rel (0) target = $region25
    $region24: #{cvae_forward.7} parent=1 // pred_region
      _
    $region25: #{cvae_forward.7} parent=1 // pred_fallthru
      _
    // Predicated region
    $region26: #{cvae_forward.7} parent=1 // pred_check
      _
    $region27: #{cvae_forward.7} parent=1 // pred_check_branch
      %284 = sbr.rel (0) target = $region29
    $region28: #{cvae_forward.7} parent=1 // pred_region
      _
    $region29: #{cvae_forward.7} parent=1 // pred_fallthru
      _
    %285 = vsyncpa [#allocation3], 1

// kernel: cvae_forward.8
$region0: #{cvae_forward.8}
  #allocation0 [shape = 'u32[]', space=smem, size = 0x4, offset = 0x4, fixed_abs, tag = 'smem constant byte address 0x4 - core index']
  #allocation1 [shape = 'u32[144,128]{1,0:T(1,128)}', space=vmem, size = 0x12000, scoped, tag = 'internal scratch']
  %s0 = inlined_call_operand.vmem [shape: bf16[144,128], index: 0, kind: input, shape index: {}]
  %s1 = inlined_call_operand.vmem [shape: bf16[32,144], index: 1, kind: input, shape index: {}]
  %s2 = inlined_call_operand.vmem [shape: f32[32,1], index: 2, kind: input, shape index: {}]
  %s3 = inlined_call_operand.vmem [shape: f32[32,1], index: 3, kind: input, shape index: {}]
  %s4 = inlined_call_operand.vmem [shape: bf16[32,128], index: 4, kind: output, shape index: {}]
  %s5 = sld [smem:[#allocation0]]
  $region26: #{cvae_forward.8} parent=0
    _
  %s7 = ssub.s32 1, %s5
  %s8 = scalar_select 0, %s7, %s5
  // Predicated region
  $region2: #{cvae_forward.8} parent=0 // pred_check
    _
  $region3: #{cvae_forward.8} parent=0 // pred_check_branch
    %10 = sbr.rel (0) target = $region5
  $region4: #{cvae_forward.8} parent=0 // pred_region
    _
  $region5: #{cvae_forward.8} parent=0 // pred_fallthru
    _
  // Predicated region
  $region6: #{cvae_forward.8} parent=0 // pred_check
    _
  $region7: #{cvae_forward.8} parent=0 // pred_check_branch
    %12 = sbr.rel (0) target = $region9
  $region8: #{cvae_forward.8} parent=0 // pred_region
    _
  $region9: #{cvae_forward.8} parent=0 // pred_fallthru
    _
  // Predicated region
  $region10: #{cvae_forward.8} parent=0 // pred_check
    _
  $region11: #{cvae_forward.8} parent=0 // pred_check_branch
    %14 = sbr.rel (0) target = $region13
  $region12: #{cvae_forward.8} parent=0 // pred_region
    _
  $region13: #{cvae_forward.8} parent=0 // pred_fallthru
    _
  // Predicated region
  $region14: #{cvae_forward.8} parent=0 // pred_check
    _
  $region15: #{cvae_forward.8} parent=0 // pred_check_branch
    %16 = sbr.rel (0) target = $region17
  $region16: #{cvae_forward.8} parent=0 // pred_region
    _
  $region17: #{cvae_forward.8} parent=0 // pred_fallthru
    _
  %v18 = vld [vmem:[%s1] sm:$0xff]
  %v19 = vld [vmem:[%s1 + $0x8] sm:$0xff]
  %v20 = vld [vmem:[%s1 + $0x10] sm:$0xff]
  %v21 = vld [vmem:[%s1 + $0x18] sm:$0xff]
  %v22 = vld [vmem:[%s0] sm:$0xf]
  %v23 = vld [vmem:[%s0 + $0x4] sm:$0xf]
  %v24 = vld [vmem:[%s0 + $0x8] sm:$0xf]
  %v25 = vld [vmem:[%s0 + $0xc] sm:$0xf]
  %v26 = vld [vmem:[%s0 + $0x10] sm:$0xf]
  %v27 = vld [vmem:[%s0 + $0x14] sm:$0xf]
  %v28 = vld [vmem:[%s0 + $0x18] sm:$0xf]
  %v29 = vld [vmem:[%s0 + $0x1c] sm:$0xf]
  %v30 = vld [vmem:[%s0 + $0x20] sm:$0xf]
  %v31 = vld [vmem:[%s0 + $0x24] sm:$0xf]
  %v32 = vld [vmem:[%s0 + $0x28] sm:$0xf]
  %v33 = vld [vmem:[%s0 + $0x2c] sm:$0xf]
  %v34 = vld [vmem:[%s0 + $0x30] sm:$0xf]
  %v35 = vld [vmem:[%s0 + $0x34] sm:$0xf]
  %v36 = vld [vmem:[%s0 + $0x38] sm:$0xf]
  %v37 = vld [vmem:[%s0 + $0x3c] sm:$0xf]
  %v38 = vld [vmem:[%s0 + $0x40] sm:$0xf]
  %v39 = vld [vmem:[%s0 + $0x44] sm:$0xf]
  %v44 = vunpack.c.l.b16 %v18
  %v45 = vunpack.c.h.b16 %v18
  %v46 = vunpack.c.l.b16 %v19
  %v47 = vunpack.c.h.b16 %v19
  %v48 = vunpack.c.l.b16 %v20
  %v49 = vunpack.c.h.b16 %v20
  %v50 = vunpack.c.l.b16 %v21
  %v51 = vunpack.c.h.b16 %v21
  %v52 = vpack.c.b16 %v46, %v44
  %v53 = vpack.c.b16 %v47, %v45
  %v54 = vpack.c.b16 %v50, %v48
  %v55 = vpack.c.b16 %v51, %v49
  %v76 = vunpack.c.l.b16 %v22
  %v77 = vunpack.c.l.b16 %v23
  %v78 = vunpack.c.l.b16 %v24
  %v79 = vunpack.c.l.b16 %v25
  %v80 = vunpack.c.l.b16 %v26
  %v81 = vunpack.c.l.b16 %v27
  %v82 = vunpack.c.l.b16 %v28
  %v83 = vunpack.c.l.b16 %v29
  %v84 = vunpack.c.l.b16 %v30
  %v85 = vunpack.c.l.b16 %v31
  %v86 = vunpack.c.l.b16 %v32
  %v87 = vunpack.c.l.b16 %v33
  %v88 = vunpack.c.l.b16 %v34
  %v89 = vunpack.c.l.b16 %v35
  %v90 = vunpack.c.l.b16 %v36
  %v91 = vunpack.c.l.b16 %v37
  %v92 = vunpack.c.l.b16 %v38
  %v93 = vunpack.c.l.b16 %v39
  %v94 = vpack.c.b16 %v77, %v76
  %v95 = vpack.c.b16 %v79, %v78
  %v96 = vpack.c.b16 %v81, %v80
  %v97 = vpack.c.b16 %v83, %v82
  %v98 = vpack.c.b16 %v85, %v84
  %v99 = vpack.c.b16 %v87, %v86
  %v100 = vpack.c.b16 %v89, %v88
  %v101 = vpack.c.b16 %v91, %v90
  %v102 = vpack.c.b16 %v93, %v92
  %vm112 = vcmask 130048
  %v114 = vsel %vm112, %v53, 0
  %v117 = vsel %vm112, %v55, 0
  %119 = vmatprep.subr.bf16.mxu0 0
  %120 = vmatpush1.bf16.msra.mxu0 %v101
  %121 = vmatprep.subr.bf16.mxu0 0
  %122 = vmatpush1.bf16.msra.mxu0 %v100
  %123 = vmatprep.subr.bf16.mxu0 0
  %124 = vmatpush1.bf16.msra.mxu0 %v99
  %125 = vmatprep.subr.bf16.mxu0 0
  %126 = vmatpush1.bf16.msra.mxu0 %v98
  %127 = vmatprep.subr.bf16.mxu0 0
  %128 = vmatpush1.bf16.msra.mxu0 %v97
  %129 = vmatprep.subr.bf16.mxu0 0
  %130 = vmatpush1.bf16.msra.mxu0 %v96
  %131 = vmatprep.subr.bf16.mxu0 0
  %132 = vmatpush1.bf16.msra.mxu0 %v95
  %133 = vmatprep.subr.bf16.mxu0 0
  %134 = vmatpush1.bf16.msra.mxu0 %v94
  %135 = vmatprep.subr.bf16.mxu0 0
  %136 = vmatpush2.bf16.msra.mxu0 0
  %137 = vmatprep.subr.bf16.mxu0 0
  %138 = vmatpush2.bf16.msra.mxu0 0
  %139 = vmatprep.subr.bf16.mxu0 0
  %140 = vmatpush2.bf16.msra.mxu0 0
  %141 = vmatprep.subr.bf16.mxu0 0
  %142 = vmatpush2.bf16.msra.mxu0 0
  %143 = vmatprep.subr.bf16.mxu0 0
  %144 = vmatpush2.bf16.msra.mxu0 0
  %145 = vmatprep.subr.bf16.mxu0 0
  %146 = vmatpush2.bf16.msra.mxu0 0
  %147 = vmatprep.subr.bf16.mxu0 0
  %148 = vmatpush2.bf16.msra.mxu0 0
  %149 = vmatprep.subr.bf16.mxu0 0
  %150 = vmatpush2.bf16.msra.mxu0 %v102
  %151 = vmatprep.mubr.bf16.mxu0 %v114
  %152 = vmatmul.mubr.bf16.gmra.mxu0 %v52
  %v153 = vpop.f32.mrf.mxu0
  %v154 = vadd.f32 0.0, %v153
  %v155 = vpop.f32.mrf.mxu0
  %v156 = vpop.f32.mrf.mxu0
  %v157 = vadd.f32 0.0, %v156
  %v158 = vpop.f32.mrf.mxu0
  %159 = vmatprep.mubr.bf16.mxu0 %v117
  %160 = vmatmul.mubr.bf16.gmra.mxu0 %v54
  %v161 = vpop.f32.mrf.mxu0
  %v162 = vadd.f32 0.0, %v161
  %v163 = vpop.f32.mrf.mxu0
  %v164 = vpop.f32.mrf.mxu0
  %v165 = vadd.f32 0.0, %v164
  %v166 = vpop.f32.mrf.mxu0
  %167 = vdwg.mxu0
  %168 = vadd.xlane.f32.xlu0 %v154
  %v169 = vpop.xlane.xlu0 %168
  %170 = vadd.xlane.f32.xlu0 %v157
  %v171 = vpop.xlane.xlu0 %170
  %172 = vadd.xlane.f32.xlu0 %v162
  %v173 = vpop.xlane.xlu0 %172
  %174 = vadd.xlane.f32.xlu0 %v165
  %v175 = vpop.xlane.xlu0 %174
  %v176 = vmul.f32 %v169, 0.0078125
  %v177 = vmul.f32 %v171, 0.0078125
  %v178 = vmul.f32 %v173, 0.0078125
  %v179 = vmul.f32 %v175, 0.0078125
  %v180 = vmul.f32 %v154, %v154
  %v181 = vmul.f32 %v157, %v157
  %v182 = vmul.f32 %v162, %v162
  %v183 = vmul.f32 %v165, %v165
  %184 = vadd.xlane.f32.xlu0 %v180
  %v185 = vpop.xlane.xlu0 %184
  %186 = vadd.xlane.f32.xlu0 %v181
  %v187 = vpop.xlane.xlu0 %186
  %188 = vadd.xlane.f32.xlu0 %v182
  %v189 = vpop.xlane.xlu0 %188
  %190 = vadd.xlane.f32.xlu0 %v183
  %v191 = vpop.xlane.xlu0 %190
  %v192 = vmul.f32 %v185, 0.0078125
  %v193 = vmul.f32 %v187, 0.0078125
  %v194 = vmul.f32 %v189, 0.0078125
  %v195 = vmul.f32 %v191, 0.0078125
  %v196 = vmul.f32 %v176, %v176
  %v197 = vmul.f32 %v177, %v177
  %v198 = vmul.f32 %v178, %v178
  %v199 = vmul.f32 %v179, %v179
  %v200 = vsub.f32 %v192, %v196
  %v201 = vsub.f32 %v193, %v197
  %v202 = vsub.f32 %v194, %v198
  %v203 = vsub.f32 %v195, %v199
  %v204 = vmax.f32 %v200, 0.0
  %v205 = vmax.f32 %v201, 0.0
  %v206 = vmax.f32 %v202, 0.0
  %v207 = vmax.f32 %v203, 0.0
  %v208 = vadd.f32 %v204, 1e-05
  %v209 = vadd.f32 %v205, 1e-05
  %v210 = vadd.f32 %v206, 1e-05
  %v211 = vadd.f32 %v207, 1e-05
  %v212 = vrsqrt.pop %v208
  %v213 = vrsqrt.pop %v209
  %v214 = vrsqrt.pop %v210
  %v215 = vrsqrt.pop %v211
  %v216 = vld [vmem:[%s2] sm:$0xff]
  %v217 = vld [vmem:[%s2 + $0x8] sm:$0xff]
  %v218 = vld [vmem:[%s2 + $0x10] sm:$0xff]
  %v219 = vld [vmem:[%s2 + $0x18] sm:$0xff]
  %v220 = vmul.f32 %v212, %v216
  %v221 = vmul.f32 %v213, %v217
  %v222 = vmul.f32 %v214, %v218
  %v223 = vmul.f32 %v215, %v219
  %v224 = vsub.f32 %v154, %v176
  %v225 = vsub.f32 %v157, %v177
  %v226 = vsub.f32 %v162, %v178
  %v227 = vsub.f32 %v165, %v179
  %229 = vset.pattern.permute.xlu0 0
  %230 = vperm.xlu0 %229, %v220
  %v231 = vpop.permute.xlu0 %230
  %234 = vset.pattern.permute.xlu0 0
  %235 = vperm.xlu0 %234, %v221
  %v236 = vpop.permute.xlu0 %235
  %239 = vset.pattern.permute.xlu0 0
  %240 = vperm.xlu0 %239, %v222
  %v241 = vpop.permute.xlu0 %240
  %244 = vset.pattern.permute.xlu0 0
  %245 = vperm.xlu0 %244, %v223
  %v246 = vpop.permute.xlu0 %245
  %v248 = vmul.f32 %v224, %v231
  %v249 = vmul.f32 %v225, %v236
  %v250 = vmul.f32 %v226, %v241
  %v251 = vmul.f32 %v227, %v246
  %v252 = vld [vmem:[%s3] sm:$0xff]
  %v253 = vld [vmem:[%s3 + $0x8] sm:$0xff]
  %v254 = vld [vmem:[%s3 + $0x10] sm:$0xff]
  %v255 = vld [vmem:[%s3 + $0x18] sm:$0xff]
  %257 = vset.pattern.permute.xlu0 0
  %258 = vperm.xlu0 %257, %v252
  %v259 = vpop.permute.xlu0 %258
  %262 = vset.pattern.permute.xlu0 0
  %263 = vperm.xlu0 %262, %v253
  %v264 = vpop.permute.xlu0 %263
  %267 = vset.pattern.permute.xlu0 0
  %268 = vperm.xlu0 %267, %v254
  %v269 = vpop.permute.xlu0 %268
  %272 = vset.pattern.permute.xlu0 0
  %273 = vperm.xlu0 %272, %v255
  %v274 = vpop.permute.xlu0 %273
  %v276 = vadd.f32 %v248, %v259
  %v277 = vadd.f32 %v249, %v264
  %v278 = vadd.f32 %v250, %v269
  %v279 = vadd.f32 %v251, %v274
  %v280 = vmax.f32 %v276, 0.0
  %v281 = vmax.f32 %v277, 0.0
  %v282 = vmax.f32 %v278, 0.0
  %v283 = vmax.f32 %v279, 0.0
  %v284 = vpack.c.bf16 %v281, %v280
  %v285 = vpack.c.bf16 %v283, %v282
  %v288 = vunpack.c.l.b16 %v284
  %v289 = vunpack.c.h.b16 %v284
  %v290 = vunpack.c.l.b16 %v285
  %v291 = vunpack.c.h.b16 %v285
  %v292 = vpack.c.b16 %v288, %v288
  %v293 = vpack.c.b16 %v289, %v289
  %v294 = vpack.c.b16 %v290, %v290
  %v295 = vpack.c.b16 %v291, %v291
  %300 = vst [vmem:[%s4] sm:$0xf] %v292
  %301 = vst [vmem:[%s4 + $0x4] sm:$0xf] %v293
  %302 = vst [vmem:[%s4 + $0x8] sm:$0xf] %v294
  %303 = vst [vmem:[%s4 + $0xc] sm:$0xf] %v295
  // Predicated region
  $region18: #{cvae_forward.8} parent=0 // pred_check
    _
  $region19: #{cvae_forward.8} parent=0 // pred_check_branch
    %305 = sbr.rel (0) target = $region21
  $region20: #{cvae_forward.8} parent=0 // pred_region
    _
  $region21: #{cvae_forward.8} parent=0 // pred_fallthru
    _
  // Predicated region
  $region22: #{cvae_forward.8} parent=0 // pred_check
    _
  $region23: #{cvae_forward.8} parent=0 // pred_check_branch
    %307 = sbr.rel (0) target = $region25
  $region24: #{cvae_forward.8} parent=0 // pred_region
    _
  $region25: #{cvae_forward.8} parent=0 // pred_fallthru
    _

// kernel: cvae_forward.9
$region0: #{cvae_forward.9}
  #allocation0 [shape = 'u32[]', space=smem, size = 0x4, offset = 0x4, fixed_abs, tag = 'smem constant byte address 0x4 - core index']
  #allocation1 [shape = 'u32[144,128]{1,0:T(1,128)}', space=vmem, size = 0x12000, scoped, tag = 'internal scratch']
  %s0 = inlined_call_operand.vmem [shape: bf16[288,32], index: 0, kind: input, shape index: {}]
  %s1 = inlined_call_operand.vmem [shape: bf16[64,288], index: 1, kind: input, shape index: {}]
  %s2 = inlined_call_operand.vmem [shape: f32[64,1], index: 2, kind: input, shape index: {}]
  %s3 = inlined_call_operand.vmem [shape: f32[64,1], index: 3, kind: input, shape index: {}]
  %s4 = inlined_call_operand.vmem [shape: bf16[64,32], index: 4, kind: output, shape index: {}]
  %s5 = sld [smem:[#allocation0]]
  $region26: #{cvae_forward.9} parent=0
    _
  %s7 = ssub.s32 1, %s5
  %s8 = scalar_select 0, %s7, %s5
  // Predicated region
  $region2: #{cvae_forward.9} parent=0 // pred_check
    _
  $region3: #{cvae_forward.9} parent=0 // pred_check_branch
    %10 = sbr.rel (0) target = $region5
  $region4: #{cvae_forward.9} parent=0 // pred_region
    _
  $region5: #{cvae_forward.9} parent=0 // pred_fallthru
    _
  // Predicated region
  $region6: #{cvae_forward.9} parent=0 // pred_check
    _
  $region7: #{cvae_forward.9} parent=0 // pred_check_branch
    %12 = sbr.rel (0) target = $region9
  $region8: #{cvae_forward.9} parent=0 // pred_region
    _
  $region9: #{cvae_forward.9} parent=0 // pred_fallthru
    _
  // Predicated region
  $region10: #{cvae_forward.9} parent=0 // pred_check
    _
  $region11: #{cvae_forward.9} parent=0 // pred_check_branch
    %14 = sbr.rel (0) target = $region13
  $region12: #{cvae_forward.9} parent=0 // pred_region
    _
  $region13: #{cvae_forward.9} parent=0 // pred_fallthru
    _
  // Predicated region
  $region14: #{cvae_forward.9} parent=0 // pred_check
    _
  $region15: #{cvae_forward.9} parent=0 // pred_check_branch
    %16 = sbr.rel (0) target = $region17
  $region16: #{cvae_forward.9} parent=0 // pred_region
    _
  $region17: #{cvae_forward.9} parent=0 // pred_fallthru
    _
  %v18 = vld [vmem:[%s1] sm:$0xff]
  %v19 = vld [vmem:[%s1 + $0x8] sm:$0xf]
  %v20 = vld [vmem:[%s1 + $0xc] sm:$0xff]
  %v21 = vld [vmem:[%s1 + $0x14] sm:$0xf]
  %v22 = vld [vmem:[%s1 + $0x18] sm:$0xff]
  %v23 = vld [vmem:[%s1 + $0x20] sm:$0xf]
  %v24 = vld [vmem:[%s1 + $0x24] sm:$0xff]
  %v25 = vld [vmem:[%s1 + $0x2c] sm:$0xf]
  %v26 = vld [vmem:[%s1 + $0x30] sm:$0xff]
  %v27 = vld [vmem:[%s1 + $0x38] sm:$0xf]
  %v28 = vld [vmem:[%s1 + $0x3c] sm:$0xff]
  %v29 = vld [vmem:[%s1 + $0x44] sm:$0xf]
  %v30 = vld [vmem:[%s1 + $0x48] sm:$0xff]
  %v31 = vld [vmem:[%s1 + $0x50] sm:$0xf]
  %v32 = vld [vmem:[%s1 + $0x54] sm:$0xff]
  %v33 = vld [vmem:[%s1 + $0x5c] sm:$0xf]
  %v34 = vld [vmem:[%s0] sm:$0xf]
  %v35 = vld [vmem:[%s0 + $0x4] sm:$0xf]
  %v36 = vld [vmem:[%s0 + $0x8] sm:$0xf]
  %v37 = vld [vmem:[%s0 + $0xc] sm:$0xf]
  %v38 = vld [vmem:[%s0 + $0x10] sm:$0xf]
  %v39 = vld [vmem:[%s0 + $0x14] sm:$0xf]
  %v40 = vld [vmem:[%s0 + $0x18] sm:$0xf]
  %v41 = vld [vmem:[%s0 + $0x1c] sm:$0xf]
  %v42 = vld [vmem:[%s0 + $0x20] sm:$0xf]
  %v43 = vld [vmem:[%s0 + $0x24] sm:$0xf]
  %v44 = vld [vmem:[%s0 + $0x28] sm:$0xf]
  %v45 = vld [vmem:[%s0 + $0x2c] sm:$0xf]
  %v46 = vld [vmem:[%s0 + $0x30] sm:$0xf]
  %v47 = vld [vmem:[%s0 + $0x34] sm:$0xf]
  %v48 = vld [vmem:[%s0 + $0x38] sm:$0xf]
  %v49 = vld [vmem:[%s0 + $0x3c] sm:$0xf]
  %v50 = vld [vmem:[%s0 + $0x40] sm:$0xf]
  %v51 = vld [vmem:[%s0 + $0x44] sm:$0xf]
  %v52 = vld [vmem:[%s0 + $0x48] sm:$0xf]
  %v53 = vld [vmem:[%s0 + $0x4c] sm:$0xf]
  %v54 = vld [vmem:[%s0 + $0x50] sm:$0xf]
  %v55 = vld [vmem:[%s0 + $0x54] sm:$0xf]
  %v56 = vld [vmem:[%s0 + $0x58] sm:$0xf]
  %v57 = vld [vmem:[%s0 + $0x5c] sm:$0xf]
  %v58 = vld [vmem:[%s0 + $0x60] sm:$0xf]
  %v59 = vld [vmem:[%s0 + $0x64] sm:$0xf]
  %v60 = vld [vmem:[%s0 + $0x68] sm:$0xf]
  %v61 = vld [vmem:[%s0 + $0x6c] sm:$0xf]
  %v62 = vld [vmem:[%s0 + $0x70] sm:$0xf]
  %v63 = vld [vmem:[%s0 + $0x74] sm:$0xf]
  %v64 = vld [vmem:[%s0 + $0x78] sm:$0xf]
  %v65 = vld [vmem:[%s0 + $0x7c] sm:$0xf]
  %v66 = vld [vmem:[%s0 + $0x80] sm:$0xf]
  %v67 = vld [vmem:[%s0 + $0x84] sm:$0xf]
  %v68 = vld [vmem:[%s0 + $0x88] sm:$0xf]
  %v69 = vld [vmem:[%s0 + $0x8c] sm:$0xf]
  %v86 = vunpack.c.l.b16 %v18
  %v87 = vunpack.c.h.b16 %v18
  %v88 = vunpack.c.l.b16 %v19
  %v89 = vunpack.c.l.b16 %v20
  %v90 = vunpack.c.h.b16 %v20
  %v91 = vunpack.c.l.b16 %v21
  %v92 = vunpack.c.l.b16 %v22
  %v93 = vunpack.c.h.b16 %v22
  %v94 = vunpack.c.l.b16 %v23
  %v95 = vunpack.c.l.b16 %v24
  %v96 = vunpack.c.h.b16 %v24
  %v97 = vunpack.c.l.b16 %v25
  %v98 = vunpack.c.l.b16 %v26
  %v99 = vunpack.c.h.b16 %v26
  %v100 = vunpack.c.l.b16 %v27
  %v101 = vunpack.c.l.b16 %v28
  %v102 = vunpack.c.h.b16 %v28
  %v103 = vunpack.c.l.b16 %v29
  %v104 = vunpack.c.l.b16 %v30
  %v105 = vunpack.c.h.b16 %v30
  %v106 = vunpack.c.l.b16 %v31
  %v107 = vunpack.c.l.b16 %v32
  %v108 = vunpack.c.h.b16 %v32
  %v109 = vunpack.c.l.b16 %v33
  %v110 = vpack.c.b16 %v89, %v86
  %v111 = vpack.c.b16 %v90, %v87
  %v112 = vpack.c.b16 %v91, %v88
  %v113 = vpack.c.b16 %v95, %v92
  %v114 = vpack.c.b16 %v96, %v93
  %v115 = vpack.c.b16 %v97, %v94
  %v116 = vpack.c.b16 %v101, %v98
  %v117 = vpack.c.b16 %v102, %v99
  %v118 = vpack.c.b16 %v103, %v100
  %v119 = vpack.c.b16 %v107, %v104
  %v120 = vpack.c.b16 %v108, %v105
  %v121 = vpack.c.b16 %v109, %v106
  %v166 = vunpack.c.l.b16 %v34
  %v167 = vunpack.c.l.b16 %v35
  %v168 = vunpack.c.l.b16 %v36
  %v169 = vunpack.c.l.b16 %v37
  %v170 = vunpack.c.l.b16 %v38
  %v171 = vunpack.c.l.b16 %v39
  %v172 = vunpack.c.l.b16 %v40
  %v173 = vunpack.c.l.b16 %v41
  %v174 = vunpack.c.l.b16 %v42
  %v175 = vunpack.c.l.b16 %v43
  %v176 = vunpack.c.l.b16 %v44
  %v177 = vunpack.c.l.b16 %v45
  %v178 = vunpack.c.l.b16 %v46
  %v179 = vunpack.c.l.b16 %v47
  %v180 = vunpack.c.l.b16 %v48
  %v181 = vunpack.c.l.b16 %v49
  %v182 = vunpack.c.l.b16 %v50
  %v183 = vunpack.c.l.b16 %v51
  %v184 = vunpack.c.l.b16 %v52
  %v185 = vunpack.c.l.b16 %v53
  %v186 = vunpack.c.l.b16 %v54
  %v187 = vunpack.c.l.b16 %v55
  %v188 = vunpack.c.l.b16 %v56
  %v189 = vunpack.c.l.b16 %v57
  %v190 = vunpack.c.l.b16 %v58
  %v191 = vunpack.c.l.b16 %v59
  %v192 = vunpack.c.l.b16 %v60
  %v193 = vunpack.c.l.b16 %v61
  %v194 = vunpack.c.l.b16 %v62
  %v195 = vunpack.c.l.b16 %v63
  %v196 = vunpack.c.l.b16 %v64
  %v197 = vunpack.c.l.b16 %v65
  %v198 = vunpack.c.l.b16 %v66
  %v199 = vunpack.c.l.b16 %v67
  %v200 = vunpack.c.l.b16 %v68
  %v201 = vunpack.c.l.b16 %v69
  %v202 = vpack.c.b16 %v167, %v166
  %v203 = vpack.c.b16 %v169, %v168
  %v204 = vpack.c.b16 %v171, %v170
  %v205 = vpack.c.b16 %v173, %v172
  %v206 = vpack.c.b16 %v175, %v174
  %v207 = vpack.c.b16 %v177, %v176
  %v208 = vpack.c.b16 %v179, %v178
  %v209 = vpack.c.b16 %v181, %v180
  %v210 = vpack.c.b16 %v183, %v182
  %v211 = vpack.c.b16 %v185, %v184
  %v212 = vpack.c.b16 %v187, %v186
  %v213 = vpack.c.b16 %v189, %v188
  %v214 = vpack.c.b16 %v191, %v190
  %v215 = vpack.c.b16 %v193, %v192
  %v216 = vpack.c.b16 %v195, %v194
  %v217 = vpack.c.b16 %v197, %v196
  %v218 = vpack.c.b16 %v199, %v198
  %v219 = vpack.c.b16 %v201, %v200
  %vm238 = vcmask 261120
  %v240 = vsel %vm238, %v112, 0
  %v243 = vsel %vm238, %v115, 0
  %v246 = vsel %vm238, %v118, 0
  %v249 = vsel %vm238, %v121, 0
  %251 = vmatprep.subr.bf16.mxu0 0
  %252 = vmatpush1.bf16.msra.mxu0 %v209
  %253 = vmatprep.subr.bf16.mxu0 0
  %254 = vmatpush1.bf16.msra.mxu0 %v208
  %255 = vmatprep.subr.bf16.mxu0 0
  %256 = vmatpush1.bf16.msra.mxu0 %v207
  %257 = vmatprep.subr.bf16.mxu0 0
  %258 = vmatpush1.bf16.msra.mxu0 %v206
  %259 = vmatprep.subr.bf16.mxu0 0
  %260 = vmatpush1.bf16.msra.mxu0 %v205
  %261 = vmatprep.subr.bf16.mxu0 0
  %262 = vmatpush1.bf16.msra.mxu0 %v204
  %263 = vmatprep.subr.bf16.mxu0 0
  %264 = vmatpush1.bf16.msra.mxu0 %v203
  %265 = vmatprep.subr.bf16.mxu0 0
  %266 = vmatpush1.bf16.msra.mxu0 %v202
  %267 = vmatprep.subr.bf16.mxu0 0
  %268 = vmatpush2.bf16.msra.mxu0 %v217
  %269 = vmatprep.subr.bf16.mxu0 0
  %270 = vmatpush2.bf16.msra.mxu0 %v216
  %271 = vmatprep.subr.bf16.mxu0 0
  %272 = vmatpush2.bf16.msra.mxu0 %v215
  %273 = vmatprep.subr.bf16.mxu0 0
  %274 = vmatpush2.bf16.msra.mxu0 %v214
  %275 = vmatprep.subr.bf16.mxu0 0
  %276 = vmatpush2.bf16.msra.mxu0 %v213
  %277 = vmatprep.subr.bf16.mxu0 0
  %278 = vmatpush2.bf16.msra.mxu0 %v212
  %279 = vmatprep.subr.bf16.mxu0 0
  %280 = vmatpush2.bf16.msra.mxu0 %v211
  %281 = vmatprep.subr.bf16.mxu0 0
  %282 = vmatpush2.bf16.msra.mxu0 %v210
  %283 = vmatprep.mubr.bf16.mxu0 %v111
  %284 = vmatmul.mubr.bf16.gmra.mxu0 %v110
  %v285 = vpop.f32.mrf.mxu0
  %v286 = vadd.f32 0.0, %v285
  %v287 = vpop.f32.mrf.mxu0
  %v288 = vpop.f32.mrf.mxu0
  %v289 = vadd.f32 0.0, %v288
  %v290 = vpop.f32.mrf.mxu0
  %291 = vmatprep.mubr.bf16.mxu0 %v114
  %292 = vmatmul.mubr.bf16.gmra.mxu0 %v113
  %v293 = vpop.f32.mrf.mxu0
  %v294 = vadd.f32 0.0, %v293
  %v295 = vpop.f32.mrf.mxu0
  %v296 = vpop.f32.mrf.mxu0
  %v297 = vadd.f32 0.0, %v296
  %v298 = vpop.f32.mrf.mxu0
  %299 = vmatprep.mubr.bf16.mxu0 %v117
  %300 = vmatmul.mubr.bf16.gmra.mxu0 %v116
  %v301 = vpop.f32.mrf.mxu0
  %v302 = vadd.f32 0.0, %v301
  %v303 = vpop.f32.mrf.mxu0
  %v304 = vpop.f32.mrf.mxu0
  %v305 = vadd.f32 0.0, %v304
  %v306 = vpop.f32.mrf.mxu0
  %307 = vmatprep.mubr.bf16.mxu0 %v120
  %308 = vmatmul.mubr.bf16.gmra.mxu0 %v119
  %v309 = vpop.f32.mrf.mxu0
  %v310 = vadd.f32 0.0, %v309
  %v311 = vpop.f32.mrf.mxu0
  %v312 = vpop.f32.mrf.mxu0
  %v313 = vadd.f32 0.0, %v312
  %v314 = vpop.f32.mrf.mxu0
  %315 = vdwg.mxu0
  %316 = vmatprep.subr.bf16.mxu0 0
  %317 = vmatpush1.bf16.msra.mxu0 0
  %318 = vmatprep.subr.bf16.mxu0 0
  %319 = vmatpush1.bf16.msra.mxu0 0
  %320 = vmatprep.subr.bf16.mxu0 0
  %321 = vmatpush1.bf16.msra.mxu0 0
  %322 = vmatprep.subr.bf16.mxu0 0
  %323 = vmatpush1.bf16.msra.mxu0 0
  %324 = vmatprep.subr.bf16.mxu0 0
  %325 = vmatpush1.bf16.msra.mxu0 0
  %326 = vmatprep.subr.bf16.mxu0 0
  %327 = vmatpush1.bf16.msra.mxu0 0
  %328 = vmatprep.subr.bf16.mxu0 0
  %329 = vmatpush1.bf16.msra.mxu0 %v219
  %330 = vmatprep.subr.bf16.mxu0 0
  %331 = vmatpush1.bf16.msra.mxu0 %v218
  %332 = vmatprep.subr.bf16.mxu0 0
  %333 = vmatpush2.bf16.msra.mxu0 0
  %334 = vmatprep.subr.bf16.mxu0 0
  %335 = vmatpush2.bf16.msra.mxu0 0
  %336 = vmatprep.subr.bf16.mxu0 0
  %337 = vmatpush2.bf16.msra.mxu0 0
  %338 = vmatprep.subr.bf16.mxu0 0
  %339 = vmatpush2.bf16.msra.mxu0 0
  %340 = vmatprep.subr.bf16.mxu0 0
  %341 = vmatpush2.bf16.msra.mxu0 0
  %342 = vmatprep.subr.bf16.mxu0 0
  %343 = vmatpush2.bf16.msra.mxu0 0
  %344 = vmatprep.subr.bf16.mxu0 0
  %345 = vmatpush2.bf16.msra.mxu0 0
  %346 = vmatprep.subr.bf16.mxu0 0
  %347 = vmatpush2.bf16.msra.mxu0 0
  %348 = vmatprep.mubr.bf16.mxu0 0
  %349 = vmatmul.mubr.bf16.gmra.mxu0 %v240
  %v350 = vpop.f32.mrf.mxu0
  %v351 = vadd.f32 %v286, %v350
  %v352 = vpop.f32.mrf.mxu0
  %v353 = vpop.f32.mrf.mxu0
  %v354 = vadd.f32 %v289, %v353
  %v355 = vpop.f32.mrf.mxu0
  %356 = vmatprep.mubr.bf16.mxu0 0
  %357 = vmatmul.mubr.bf16.gmra.mxu0 %v243
  %v358 = vpop.f32.mrf.mxu0
  %v359 = vadd.f32 %v294, %v358
  %v360 = vpop.f32.mrf.mxu0
  %v361 = vpop.f32.mrf.mxu0
  %v362 = vadd.f32 %v297, %v361
  %v363 = vpop.f32.mrf.mxu0
  %364 = vmatprep.mubr.bf16.mxu0 0
  %365 = vmatmul.mubr.bf16.gmra.mxu0 %v246
  %v366 = vpop.f32.mrf.mxu0
  %v367 = vadd.f32 %v302, %v366
  %v368 = vpop.f32.mrf.mxu0
  %v369 = vpop.f32.mrf.mxu0
  %v370 = vadd.f32 %v305, %v369
  %v371 = vpop.f32.mrf.mxu0
  %372 = vmatprep.mubr.bf16.mxu0 0
  %373 = vmatmul.mubr.bf16.gmra.mxu0 %v249
  %v374 = vpop.f32.mrf.mxu0
  %v375 = vadd.f32 %v310, %v374
  %v376 = vpop.f32.mrf.mxu0
  %v377 = vpop.f32.mrf.mxu0
  %v378 = vadd.f32 %v313, %v377
  %v379 = vpop.f32.mrf.mxu0
  %380 = vdwg.mxu0
  %v381 = vsel %vm238, %v351, 0.0
  %382 = vadd.xlane.f32.xlu0 %v381
  %v383 = vpop.xlane.xlu0 %382
  %v384 = vsel %vm238, %v354, 0.0
  %385 = vadd.xlane.f32.xlu0 %v384
  %v386 = vpop.xlane.xlu0 %385
  %v387 = vsel %vm238, %v359, 0.0
  %388 = vadd.xlane.f32.xlu0 %v387
  %v389 = vpop.xlane.xlu0 %388
  %v390 = vsel %vm238, %v362, 0.0
  %391 = vadd.xlane.f32.xlu0 %v390
  %v392 = vpop.xlane.xlu0 %391
  %v393 = vsel %vm238, %v367, 0.0
  %394 = vadd.xlane.f32.xlu0 %v393
  %v395 = vpop.xlane.xlu0 %394
  %v396 = vsel %vm238, %v370, 0.0
  %397 = vadd.xlane.f32.xlu0 %v396
  %v398 = vpop.xlane.xlu0 %397
  %v399 = vsel %vm238, %v375, 0.0
  %400 = vadd.xlane.f32.xlu0 %v399
  %v401 = vpop.xlane.xlu0 %400
  %v402 = vsel %vm238, %v378, 0.0
  %403 = vadd.xlane.f32.xlu0 %v402
  %v404 = vpop.xlane.xlu0 %403
  %v405 = vmul.f32 %v383, 0.03125
  %v406 = vmul.f32 %v386, 0.03125
  %v407 = vmul.f32 %v389, 0.03125
  %v408 = vmul.f32 %v392, 0.03125
  %v409 = vmul.f32 %v395, 0.03125
  %v410 = vmul.f32 %v398, 0.03125
  %v411 = vmul.f32 %v401, 0.03125
  %v412 = vmul.f32 %v404, 0.03125
  %v413 = vmul.f32 %v351, %v351
  %v414 = vmul.f32 %v354, %v354
  %v415 = vmul.f32 %v359, %v359
  %v416 = vmul.f32 %v362, %v362
  %v417 = vmul.f32 %v367, %v367
  %v418 = vmul.f32 %v370, %v370
  %v419 = vmul.f32 %v375, %v375
  %v420 = vmul.f32 %v378, %v378
  %v421 = vsel %vm238, %v413, 0.0
  %422 = vadd.xlane.f32.xlu0 %v421
  %v423 = vpop.xlane.xlu0 %422
  %v424 = vsel %vm238, %v414, 0.0
  %425 = vadd.xlane.f32.xlu0 %v424
  %v426 = vpop.xlane.xlu0 %425
  %v427 = vsel %vm238, %v415, 0.0
  %428 = vadd.xlane.f32.xlu0 %v427
  %v429 = vpop.xlane.xlu0 %428
  %v430 = vsel %vm238, %v416, 0.0
  %431 = vadd.xlane.f32.xlu0 %v430
  %v432 = vpop.xlane.xlu0 %431
  %v433 = vsel %vm238, %v417, 0.0
  %434 = vadd.xlane.f32.xlu0 %v433
  %v435 = vpop.xlane.xlu0 %434
  %v436 = vsel %vm238, %v418, 0.0
  %437 = vadd.xlane.f32.xlu0 %v436
  %v438 = vpop.xlane.xlu0 %437
  %v439 = vsel %vm238, %v419, 0.0
  %440 = vadd.xlane.f32.xlu0 %v439
  %v441 = vpop.xlane.xlu0 %440
  %v442 = vsel %vm238, %v420, 0.0
  %443 = vadd.xlane.f32.xlu0 %v442
  %v444 = vpop.xlane.xlu0 %443
  %v445 = vmul.f32 %v423, 0.03125
  %v446 = vmul.f32 %v426, 0.03125
  %v447 = vmul.f32 %v429, 0.03125
  %v448 = vmul.f32 %v432, 0.03125
  %v449 = vmul.f32 %v435, 0.03125
  %v450 = vmul.f32 %v438, 0.03125
  %v451 = vmul.f32 %v441, 0.03125
  %v452 = vmul.f32 %v444, 0.03125
  %v453 = vmul.f32 %v405, %v405
  %v454 = vmul.f32 %v406, %v406
  %v455 = vmul.f32 %v407, %v407
  %v456 = vmul.f32 %v408, %v408
  %v457 = vmul.f32 %v409, %v409
  %v458 = vmul.f32 %v410, %v410
  %v459 = vmul.f32 %v411, %v411
  %v460 = vmul.f32 %v412, %v412
  %v461 = vsub.f32 %v445, %v453
  %v462 = vsub.f32 %v446, %v454
  %v463 = vsub.f32 %v447, %v455
  %v464 = vsub.f32 %v448, %v456
  %v465 = vsub.f32 %v449, %v457
  %v466 = vsub.f32 %v450, %v458
  %v467 = vsub.f32 %v451, %v459
  %v468 = vsub.f32 %v452, %v460
  %v469 = vmax.f32 %v461, 0.0
  %v470 = vmax.f32 %v462, 0.0
  %v471 = vmax.f32 %v463, 0.0
  %v472 = vmax.f32 %v464, 0.0
  %v473 = vmax.f32 %v465, 0.0
  %v474 = vmax.f32 %v466, 0.0
  %v475 = vmax.f32 %v467, 0.0
  %v476 = vmax.f32 %v468, 0.0
  %v477 = vadd.f32 %v469, 1e-05
  %v478 = vadd.f32 %v470, 1e-05
  %v479 = vadd.f32 %v471, 1e-05
  %v480 = vadd.f32 %v472, 1e-05
  %v481 = vadd.f32 %v473, 1e-05
  %v482 = vadd.f32 %v474, 1e-05
  %v483 = vadd.f32 %v475, 1e-05
  %v484 = vadd.f32 %v476, 1e-05
  %v485 = vrsqrt.pop %v477
  %v486 = vrsqrt.pop %v478
  %v487 = vrsqrt.pop %v479
  %v488 = vrsqrt.pop %v480
  %v489 = vrsqrt.pop %v481
  %v490 = vrsqrt.pop %v482
  %v491 = vrsqrt.pop %v483
  %v492 = vrsqrt.pop %v484
  %v493 = vld [vmem:[%s2] sm:$0xff]
  %v494 = vld [vmem:[%s2 + $0x8] sm:$0xff]
  %v495 = vld [vmem:[%s2 + $0x10] sm:$0xff]
  %v496 = vld [vmem:[%s2 + $0x18] sm:$0xff]
  %v497 = vld [vmem:[%s2 + $0x20] sm:$0xff]
  %v498 = vld [vmem:[%s2 + $0x28] sm:$0xff]
  %v499 = vld [vmem:[%s2 + $0x30] sm:$0xff]
  %v500 = vld [vmem:[%s2 + $0x38] sm:$0xff]
  %v501 = vmul.f32 %v485, %v493
  %v502 = vmul.f32 %v486, %v494
  %v503 = vmul.f32 %v487, %v495
  %v504 = vmul.f32 %v488, %v496
  %v505 = vmul.f32 %v489, %v497
  %v506 = vmul.f32 %v490, %v498
  %v507 = vmul.f32 %v491, %v499
  %v508 = vmul.f32 %v492, %v500
  %v509 = vsub.f32 %v351, %v405
  %v510 = vsub.f32 %v354, %v406
  %v511 = vsub.f32 %v359, %v407
  %v512 = vsub.f32 %v362, %v408
  %v513 = vsub.f32 %v367, %v409
  %v514 = vsub.f32 %v370, %v410
  %v515 = vsub.f32 %v375, %v411
  %v516 = vsub.f32 %v378, %v412
  %518 = vset.pattern.permute.xlu0 0
  %519 = vperm.xlu0 %518, %v501
  %v520 = vpop.permute.xlu0 %519
  %523 = vset.pattern.permute.xlu0 0
  %524 = vperm.xlu0 %523, %v502
  %v525 = vpop.permute.xlu0 %524
  %528 = vset.pattern.permute.xlu0 0
  %529 = vperm.xlu0 %528, %v503
  %v530 = vpop.permute.xlu0 %529
  %533 = vset.pattern.permute.xlu0 0
  %534 = vperm.xlu0 %533, %v504
  %v535 = vpop.permute.xlu0 %534
  %538 = vset.pattern.permute.xlu0 0
  %539 = vperm.xlu0 %538, %v505
  %v540 = vpop.permute.xlu0 %539
  %543 = vset.pattern.permute.xlu0 0
  %544 = vperm.xlu0 %543, %v506
  %v545 = vpop.permute.xlu0 %544
  %548 = vset.pattern.permute.xlu0 0
  %549 = vperm.xlu0 %548, %v507
  %v550 = vpop.permute.xlu0 %549
  %553 = vset.pattern.permute.xlu0 0
  %554 = vperm.xlu0 %553, %v508
  %v555 = vpop.permute.xlu0 %554
  %v557 = vmul.f32 %v509, %v520
  %v558 = vmul.f32 %v510, %v525
  %v559 = vmul.f32 %v511, %v530
  %v560 = vmul.f32 %v512, %v535
  %v561 = vmul.f32 %v513, %v540
  %v562 = vmul.f32 %v514, %v545
  %v563 = vmul.f32 %v515, %v550
  %v564 = vmul.f32 %v516, %v555
  %v565 = vld [vmem:[%s3] sm:$0xff]
  %v566 = vld [vmem:[%s3 + $0x8] sm:$0xff]
  %v567 = vld [vmem:[%s3 + $0x10] sm:$0xff]
  %v568 = vld [vmem:[%s3 + $0x18] sm:$0xff]
  %v569 = vld [vmem:[%s3 + $0x20] sm:$0xff]
  %v570 = vld [vmem:[%s3 + $0x28] sm:$0xff]
  %v571 = vld [vmem:[%s3 + $0x30] sm:$0xff]
  %v572 = vld [vmem:[%s3 + $0x38] sm:$0xff]
  %574 = vset.pattern.permute.xlu0 0
  %575 = vperm.xlu0 %574, %v565
  %v576 = vpop.permute.xlu0 %575
  %579 = vset.pattern.permute.xlu0 0
  %580 = vperm.xlu0 %579, %v566
  %v581 = vpop.permute.xlu0 %580
  %584 = vset.pattern.permute.xlu0 0
  %585 = vperm.xlu0 %584, %v567
  %v586 = vpop.permute.xlu0 %585
  %589 = vset.pattern.permute.xlu0 0
  %590 = vperm.xlu0 %589, %v568
  %v591 = vpop.permute.xlu0 %590
  %594 = vset.pattern.permute.xlu0 0
  %595 = vperm.xlu0 %594, %v569
  %v596 = vpop.permute.xlu0 %595
  %599 = vset.pattern.permute.xlu0 0
  %600 = vperm.xlu0 %599, %v570
  %v601 = vpop.permute.xlu0 %600
  %604 = vset.pattern.permute.xlu0 0
  %605 = vperm.xlu0 %604, %v571
  %v606 = vpop.permute.xlu0 %605
  %609 = vset.pattern.permute.xlu0 0
  %610 = vperm.xlu0 %609, %v572
  %v611 = vpop.permute.xlu0 %610
  %v613 = vadd.f32 %v557, %v576
  %v614 = vadd.f32 %v558, %v581
  %v615 = vadd.f32 %v559, %v586
  %v616 = vadd.f32 %v560, %v591
  %v617 = vadd.f32 %v561, %v596
  %v618 = vadd.f32 %v562, %v601
  %v619 = vadd.f32 %v563, %v606
  %v620 = vadd.f32 %v564, %v611
  %v621 = vmax.f32 %v613, 0.0
  %v622 = vmax.f32 %v614, 0.0
  %v623 = vmax.f32 %v615, 0.0
  %v624 = vmax.f32 %v616, 0.0
  %v625 = vmax.f32 %v617, 0.0
  %v626 = vmax.f32 %v618, 0.0
  %v627 = vmax.f32 %v619, 0.0
  %v628 = vmax.f32 %v620, 0.0
  %v629 = vpack.c.bf16 %v622, %v621
  %v630 = vpack.c.bf16 %v624, %v623
  %v631 = vpack.c.bf16 %v626, %v625
  %v632 = vpack.c.bf16 %v628, %v627
  %v637 = vunpack.c.l.b16 %v629
  %v638 = vunpack.c.h.b16 %v629
  %v639 = vunpack.c.l.b16 %v630
  %v640 = vunpack.c.h.b16 %v630
  %v641 = vunpack.c.l.b16 %v631
  %v642 = vunpack.c.h.b16 %v631
  %v643 = vunpack.c.l.b16 %v632
  %v644 = vunpack.c.h.b16 %v632
  %v645 = vpack.c.b16 %v637, %v637
  %v646 = vpack.c.b16 %v638, %v638
  %v647 = vpack.c.b16 %v639, %v639
  %v648 = vpack.c.b16 %v640, %v640
  %v649 = vpack.c.b16 %v641, %v641
  %v650 = vpack.c.b16 %v642, %v642
  %v651 = vpack.c.b16 %v643, %v643
  %v652 = vpack.c.b16 %v644, %v644
  %vm661 = vcmask 257024
  %662 = vst.msk [vmem:[%s4] sm:$0xf] %vm661, %v645
  %663 = vst.msk [vmem:[%s4 + $0x4] sm:$0xf] %vm661, %v646
  %664 = vst.msk [vmem:[%s4 + $0x8] sm:$0xf] %vm661, %v647
  %665 = vst.msk [vmem:[%s4 + $0xc] sm:$0xf] %vm661, %v648
  %666 = vst.msk [vmem:[%s4 + $0x10] sm:$0xf] %vm661, %v649
  %667 = vst.msk [vmem:[%s4 + $0x14] sm:$0xf] %vm661, %v650
  %668 = vst.msk [vmem:[%s4 + $0x18] sm:$0xf] %vm661, %v651
  %669 = vst.msk [vmem:[%s4 + $0x1c] sm:$0xf] %vm661, %v652
  // Predicated region
  $region18: #{cvae_forward.9} parent=0 // pred_check
    _
  $region19: #{cvae_forward.9} parent=0 // pred_check_branch
    %671 = sbr.rel (0) target = $region21
  $region20: #{cvae_forward.9} parent=0 // pred_region
    _
  $region21: #{cvae_forward.9} parent=0 // pred_fallthru
    _
  // Predicated region
  $region22: #{cvae_forward.9} parent=0 // pred_check
    _
  $region23: #{cvae_forward.9} parent=0 // pred_check_branch
    %673 = sbr.rel (0) target = $region25
  $region24: #{cvae_forward.9} parent=0 // pred_region
    _
  $region25: #{cvae_forward.9} parent=0 // pred_fallthru
    _

// kernel: cvae_forward.10
$region0: #{cvae_forward.10}
  #allocation0 [shape = 'u32[]', space=smem, size = 0x4, offset = 0x4, fixed_abs, tag = 'smem constant byte address 0x4 - core index']
  #allocation1 [shape = 'u32[144,128]{1,0:T(1,128)}', space=vmem, size = 0x12000, scoped, tag = 'internal scratch']
  #allocation2 [shape = 'f32[2,80]{1,0:T(2,128)}', space=vmem, size = 0x400, scoped, tag = 'scratch operand']
  %s0 = inlined_call_operand.vmem [shape: bf16[2,1024], index: 0, kind: input, shape index: {}]
  %s1 = inlined_call_operand.vmem [shape: bf16[1024,80], index: 1, kind: input, shape index: {}]
  %s2 = inlined_call_operand.vmem [shape: f32[1,80], index: 2, kind: input, shape index: {}]
  %s3 = inlined_call_operand.vmem [shape: f32[2,80], index: 3, kind: input, shape index: {}]
  %s4 = inlined_call_operand.vmem [shape: bf16[80,1024], index: 4, kind: input, shape index: {}]
  %s5 = inlined_call_operand.vmem [shape: f32[1,1024], index: 5, kind: input, shape index: {}]
  %s6 = inlined_call_operand.vmem [shape: f32[2,80], index: 6, kind: output, shape index: {0}]
  %s7 = inlined_call_operand.vmem [shape: bf16[2,1024], index: 7, kind: output, shape index: {1}]
  %8 = xla_tuple %s6, %s7
  %s9 = sld [smem:[#allocation0]]
  $region42: #{cvae_forward.10} parent=0
    _
  %s11 = ssub.s32 1, %s9
  %s12 = scalar_select 0, %s11, %s9
  // Predicated region
  $region2: #{cvae_forward.10} parent=0 // pred_check
    _
  $region3: #{cvae_forward.10} parent=0 // pred_check_branch
    %14 = sbr.rel (0) target = $region5
  $region4: #{cvae_forward.10} parent=0 // pred_region
    _
  $region5: #{cvae_forward.10} parent=0 // pred_fallthru
    _
  // Predicated region
  $region6: #{cvae_forward.10} parent=0 // pred_check
    _
  $region7: #{cvae_forward.10} parent=0 // pred_check_branch
    %16 = sbr.rel (0) target = $region9
  $region8: #{cvae_forward.10} parent=0 // pred_region
    _
  $region9: #{cvae_forward.10} parent=0 // pred_fallthru
    _
  // Predicated region
  $region10: #{cvae_forward.10} parent=0 // pred_check
    _
  $region11: #{cvae_forward.10} parent=0 // pred_check_branch
    %18 = sbr.rel (0) target = $region13
  $region12: #{cvae_forward.10} parent=0 // pred_region
    _
  $region13: #{cvae_forward.10} parent=0 // pred_fallthru
    _
  // Predicated region
  $region14: #{cvae_forward.10} parent=0 // pred_check
    _
  $region15: #{cvae_forward.10} parent=0 // pred_check_branch
    %20 = sbr.rel (0) target = $region17
  $region16: #{cvae_forward.10} parent=0 // pred_region
    _
  $region17: #{cvae_forward.10} parent=0 // pred_fallthru
    _
  // Predicated region
  $region18: #{cvae_forward.10} parent=0 // pred_check
    _
  $region19: #{cvae_forward.10} parent=0 // pred_check_branch
    %22 = sbr.rel (0) target = $region21
  $region20: #{cvae_forward.10} parent=0 // pred_region
    _
  $region21: #{cvae_forward.10} parent=0 // pred_fallthru
    _
  // Predicated region
  $region22: #{cvae_forward.10} parent=0 // pred_check
    _
  $region23: #{cvae_forward.10} parent=0 // pred_check_branch
    %24 = sbr.rel (0) target = $region25
  $region24: #{cvae_forward.10} parent=0 // pred_region
    _
  $region25: #{cvae_forward.10} parent=0 // pred_fallthru
    _
  %v26 = vld [vmem:[%s0] sm:$0xff]
  %v27 = vld [vmem:[%s1] sm:$0xf]
  %v28 = vld [vmem:[%s1 + $0x4] sm:$0xf]
  %v29 = vld [vmem:[%s1 + $0x8] sm:$0xf]
  %v30 = vld [vmem:[%s1 + $0xc] sm:$0xf]
  %v31 = vld [vmem:[%s1 + $0x10] sm:$0xf]
  %v32 = vld [vmem:[%s1 + $0x14] sm:$0xf]
  %v33 = vld [vmem:[%s1 + $0x18] sm:$0xf]
  %v34 = vld [vmem:[%s1 + $0x1c] sm:$0xf]
  %v35 = vld [vmem:[%s1 + $0x20] sm:$0xf]
  %v36 = vld [vmem:[%s1 + $0x24] sm:$0xf]
  %v37 = vld [vmem:[%s1 + $0x28] sm:$0xf]
  %v38 = vld [vmem:[%s1 + $0x2c] sm:$0xf]
  %v39 = vld [vmem:[%s1 + $0x30] sm:$0xf]
  %v40 = vld [vmem:[%s1 + $0x34] sm:$0xf]
  %v41 = vld [vmem:[%s1 + $0x38] sm:$0xf]
  %v42 = vld [vmem:[%s1 + $0x3c] sm:$0xf]
  %v43 = vld [vmem:[%s1 + $0x40] sm:$0xf]
  %v44 = vld [vmem:[%s1 + $0x44] sm:$0xf]
  %v45 = vld [vmem:[%s1 + $0x48] sm:$0xf]
  %v46 = vld [vmem:[%s1 + $0x4c] sm:$0xf]
  %v47 = vld [vmem:[%s1 + $0x50] sm:$0xf]
  %v48 = vld [vmem:[%s1 + $0x54] sm:$0xf]
  %v49 = vld [vmem:[%s1 + $0x58] sm:$0xf]
  %v50 = vld [vmem:[%s1 + $0x5c] sm:$0xf]
  %v51 = vld [vmem:[%s1 + $0x60] sm:$0xf]
  %v52 = vld [vmem:[%s1 + $0x64] sm:$0xf]
  %v53 = vld [vmem:[%s1 + $0x68] sm:$0xf]
  %v54 = vld [vmem:[%s1 + $0x6c] sm:$0xf]
  %v55 = vld [vmem:[%s1 + $0x70] sm:$0xf]
  %v56 = vld [vmem:[%s1 + $0x74] sm:$0xf]
  %v57 = vld [vmem:[%s1 + $0x78] sm:$0xf]
  %v58 = vld [vmem:[%s1 + $0x7c] sm:$0xf]
  %v59 = vld [vmem:[%s1 + $0x80] sm:$0xf]
  %v60 = vld [vmem:[%s1 + $0x84] sm:$0xf]
  %v61 = vld [vmem:[%s1 + $0x88] sm:$0xf]
  %v62 = vld [vmem:[%s1 + $0x8c] sm:$0xf]
  %v63 = vld [vmem:[%s1 + $0x90] sm:$0xf]
  %v64 = vld [vmem:[%s1 + $0x94] sm:$0xf]
  %v65 = vld [vmem:[%s1 + $0x98] sm:$0xf]
  %v66 = vld [vmem:[%s1 + $0x9c] sm:$0xf]
  %v67 = vld [vmem:[%s1 + $0xa0] sm:$0xf]
  %v68 = vld [vmem:[%s1 + $0xa4] sm:$0xf]
  %v69 = vld [vmem:[%s1 + $0xa8] sm:$0xf]
  %v70 = vld [vmem:[%s1 + $0xac] sm:$0xf]
  %v71 = vld [vmem:[%s1 + $0xb0] sm:$0xf]
  %v72 = vld [vmem:[%s1 + $0xb4] sm:$0xf]
  %v73 = vld [vmem:[%s1 + $0xb8] sm:$0xf]
  %v74 = vld [vmem:[%s1 + $0xbc] sm:$0xf]
  %v75 = vld [vmem:[%s1 + $0xc0] sm:$0xf]
  %v76 = vld [vmem:[%s1 + $0xc4] sm:$0xf]
  %v77 = vld [vmem:[%s1 + $0xc8] sm:$0xf]
  %v78 = vld [vmem:[%s1 + $0xcc] sm:$0xf]
  %v79 = vld [vmem:[%s1 + $0xd0] sm:$0xf]
  %v80 = vld [vmem:[%s1 + $0xd4] sm:$0xf]
  %v81 = vld [vmem:[%s1 + $0xd8] sm:$0xf]
  %v82 = vld [vmem:[%s1 + $0xdc] sm:$0xf]
  %v83 = vld [vmem:[%s1 + $0xe0] sm:$0xf]
  %v84 = vld [vmem:[%s1 + $0xe4] sm:$0xf]
  %v85 = vld [vmem:[%s1 + $0xe8] sm:$0xf]
  %v86 = vld [vmem:[%s1 + $0xec] sm:$0xf]
  %v87 = vld [vmem:[%s1 + $0xf0] sm:$0xf]
  %v88 = vld [vmem:[%s1 + $0xf4] sm:$0xf]
  %v89 = vld [vmem:[%s1 + $0xf8] sm:$0xf]
  %v90 = vld [vmem:[%s1 + $0xfc] sm:$0xf]
  %v91 = vld [vmem:[%s1 + $0x100] sm:$0xf]
  %v92 = vld [vmem:[%s1 + $0x104] sm:$0xf]
  %v93 = vld [vmem:[%s1 + $0x108] sm:$0xf]
  %v94 = vld [vmem:[%s1 + $0x10c] sm:$0xf]
  %v95 = vld [vmem:[%s1 + $0x110] sm:$0xf]
  %v96 = vld [vmem:[%s1 + $0x114] sm:$0xf]
  %v97 = vld [vmem:[%s1 + $0x118] sm:$0xf]
  %v98 = vld [vmem:[%s1 + $0x11c] sm:$0xf]
  %v99 = vld [vmem:[%s1 + $0x120] sm:$0xf]
  %v100 = vld [vmem:[%s1 + $0x124] sm:$0xf]
  %v101 = vld [vmem:[%s1 + $0x128] sm:$0xf]
  %v102 = vld [vmem:[%s1 + $0x12c] sm:$0xf]
  %v103 = vld [vmem:[%s1 + $0x130] sm:$0xf]
  %v104 = vld [vmem:[%s1 + $0x134] sm:$0xf]
  %v105 = vld [vmem:[%s1 + $0x138] sm:$0xf]
  %v106 = vld [vmem:[%s1 + $0x13c] sm:$0xf]
  %v107 = vld [vmem:[%s1 + $0x140] sm:$0xf]
  %v108 = vld [vmem:[%s1 + $0x144] sm:$0xf]
  %v109 = vld [vmem:[%s1 + $0x148] sm:$0xf]
  %v110 = vld [vmem:[%s1 + $0x14c] sm:$0xf]
  %v111 = vld [vmem:[%s1 + $0x150] sm:$0xf]
  %v112 = vld [vmem:[%s1 + $0x154] sm:$0xf]
  %v113 = vld [vmem:[%s1 + $0x158] sm:$0xf]
  %v114 = vld [vmem:[%s1 + $0x15c] sm:$0xf]
  %v115 = vld [vmem:[%s1 + $0x160] sm:$0xf]
  %v116 = vld [vmem:[%s1 + $0x164] sm:$0xf]
  %v117 = vld [vmem:[%s1 + $0x168] sm:$0xf]
  %v118 = vld [vmem:[%s1 + $0x16c] sm:$0xf]
  %v119 = vld [vmem:[%s1 + $0x170] sm:$0xf]
  %v120 = vld [vmem:[%s1 + $0x174] sm:$0xf]
  %v121 = vld [vmem:[%s1 + $0x178] sm:$0xf]
  %v122 = vld [vmem:[%s1 + $0x17c] sm:$0xf]
  %v123 = vld [vmem:[%s1 + $0x180] sm:$0xf]
  %v124 = vld [vmem:[%s1 + $0x184] sm:$0xf]
  %v125 = vld [vmem:[%s1 + $0x188] sm:$0xf]
  %v126 = vld [vmem:[%s1 + $0x18c] sm:$0xf]
  %v127 = vld [vmem:[%s1 + $0x190] sm:$0xf]
  %v128 = vld [vmem:[%s1 + $0x194] sm:$0xf]
  %v129 = vld [vmem:[%s1 + $0x198] sm:$0xf]
  %v130 = vld [vmem:[%s1 + $0x19c] sm:$0xf]
  %v131 = vld [vmem:[%s1 + $0x1a0] sm:$0xf]
  %v132 = vld [vmem:[%s1 + $0x1a4] sm:$0xf]
  %v133 = vld [vmem:[%s1 + $0x1a8] sm:$0xf]
  %v134 = vld [vmem:[%s1 + $0x1ac] sm:$0xf]
  %v135 = vld [vmem:[%s1 + $0x1b0] sm:$0xf]
  %v136 = vld [vmem:[%s1 + $0x1b4] sm:$0xf]
  %v137 = vld [vmem:[%s1 + $0x1b8] sm:$0xf]
  %v138 = vld [vmem:[%s1 + $0x1bc] sm:$0xf]
  %v139 = vld [vmem:[%s1 + $0x1c0] sm:$0xf]
  %v140 = vld [vmem:[%s1 + $0x1c4] sm:$0xf]
  %v141 = vld [vmem:[%s1 + $0x1c8] sm:$0xf]
  %v142 = vld [vmem:[%s1 + $0x1cc] sm:$0xf]
  %v143 = vld [vmem:[%s1 + $0x1d0] sm:$0xf]
  %v144 = vld [vmem:[%s1 + $0x1d4] sm:$0xf]
  %v145 = vld [vmem:[%s1 + $0x1d8] sm:$0xf]
  %v146 = vld [vmem:[%s1 + $0x1dc] sm:$0xf]
  %v147 = vld [vmem:[%s1 + $0x1e0] sm:$0xf]
  %v148 = vld [vmem:[%s1 + $0x1e4] sm:$0xf]
  %v149 = vld [vmem:[%s1 + $0x1e8] sm:$0xf]
  %v150 = vld [vmem:[%s1 + $0x1ec] sm:$0xf]
  %v151 = vld [vmem:[%s1 + $0x1f0] sm:$0xf]
  %v152 = vld [vmem:[%s1 + $0x1f4] sm:$0xf]
  %v153 = vld [vmem:[%s1 + $0x1f8] sm:$0xf]
  %v154 = vld [vmem:[%s1 + $0x1fc] sm:$0xf]
  %v155 = vld [vmem:[%s2] sm:$0x1]
  %v157 = vlaneseq
  %v158 = vshrl.u32 %v157, 7
  %v159 = vsub.s32 0, %v158
  %v160 = vrot.slane %v155, %v159
  %v163 = vcombine.high %v26, %v26
  %v165 = vunpack.c.l.s4 1966171168
  %v166 = vunpack.c.0.s8 %v165
  %v167 = vlaneseq
  %v168 = vshrl.u32 %v167, 7
  %v169 = vsub.s32 %v166, %v168
  %v170 = vrot.slane %v26, %v169
  %v172 = vunpack.c.l.s4 1966171168
  %v173 = vunpack.c.0.s8 %v172
  %v174 = vlaneseq
  %v175 = vshrl.u32 %v174, 7
  %v176 = vsub.s32 %v173, %v175
  %v177 = vrot.slane %v163, %v176
  %v178 = vcombine.high %v170, %v170
  %v179 = vcombine.high %v177, %v177
  %v181 = vunpack.c.l.s4 1966171168
  %v182 = vunpack.c.0.s8 %v181
  %v183 = vlaneseq
  %v184 = vshrl.u32 %v183, 7
  %v185 = vsub.s32 %v182, %v184
  %v186 = vrot.slane %v170, %v185
  %v188 = vunpack.c.l.s4 1966171168
  %v189 = vunpack.c.0.s8 %v188
  %v190 = vlaneseq
  %v191 = vshrl.u32 %v190, 7
  %v192 = vsub.s32 %v189, %v191
  %v193 = vrot.slane %v177, %v192
  %v195 = vunpack.c.l.s4 1966171168
  %v196 = vunpack.c.0.s8 %v195
  %v197 = vlaneseq
  %v198 = vshrl.u32 %v197, 7
  %v199 = vsub.s32 %v196, %v198
  %v200 = vrot.slane %v178, %v199
  %v202 = vunpack.c.l.s4 1966171168
  %v203 = vunpack.c.0.s8 %v202
  %v204 = vlaneseq
  %v205 = vshrl.u32 %v204, 7
  %v206 = vsub.s32 %v203, %v205
  %v207 = vrot.slane %v179, %v206
  %v208 = vcombine.high %v186, %v186
  %v209 = vcombine.high %v193, %v193
  %v210 = vcombine.high %v200, %v200
  %v211 = vcombine.high %v207, %v207
  %v348 = vunpack.c.l.b16 %v27
  %v349 = vunpack.c.l.b16 %v28
  %v350 = vunpack.c.l.b16 %v29
  %v351 = vunpack.c.l.b16 %v30
  %v352 = vunpack.c.l.b16 %v31
  %v353 = vunpack.c.l.b16 %v32
  %v354 = vunpack.c.l.b16 %v33
  %v355 = vunpack.c.l.b16 %v34
  %v356 = vunpack.c.l.b16 %v35
  %v357 = vunpack.c.l.b16 %v36
  %v358 = vunpack.c.l.b16 %v37
  %v359 = vunpack.c.l.b16 %v38
  %v360 = vunpack.c.l.b16 %v39
  %v361 = vunpack.c.l.b16 %v40
  %v362 = vunpack.c.l.b16 %v41
  %v363 = vunpack.c.l.b16 %v42
  %v364 = vunpack.c.l.b16 %v43
  %v365 = vunpack.c.l.b16 %v44
  %v366 = vunpack.c.l.b16 %v45
  %v367 = vunpack.c.l.b16 %v46
  %v368 = vunpack.c.l.b16 %v47
  %v369 = vunpack.c.l.b16 %v48
  %v370 = vunpack.c.l.b16 %v49
  %v371 = vunpack.c.l.b16 %v50
  %v372 = vunpack.c.l.b16 %v51
  %v373 = vunpack.c.l.b16 %v52
  %v374 = vunpack.c.l.b16 %v53
  %v375 = vunpack.c.l.b16 %v54
  %v376 = vunpack.c.l.b16 %v55
  %v377 = vunpack.c.l.b16 %v56
  %v378 = vunpack.c.l.b16 %v57
  %v379 = vunpack.c.l.b16 %v58
  %v380 = vunpack.c.l.b16 %v59
  %v381 = vunpack.c.l.b16 %v60
  %v382 = vunpack.c.l.b16 %v61
  %v383 = vunpack.c.l.b16 %v62
  %v384 = vunpack.c.l.b16 %v63
  %v385 = vunpack.c.l.b16 %v64
  %v386 = vunpack.c.l.b16 %v65
  %v387 = vunpack.c.l.b16 %v66
  %v388 = vunpack.c.l.b16 %v67
  %v389 = vunpack.c.l.b16 %v68
  %v390 = vunpack.c.l.b16 %v69
  %v391 = vunpack.c.l.b16 %v70
  %v392 = vunpack.c.l.b16 %v71
  %v393 = vunpack.c.l.b16 %v72
  %v394 = vunpack.c.l.b16 %v73
  %v395 = vunpack.c.l.b16 %v74
  %v396 = vunpack.c.l.b16 %v75
  %v397 = vunpack.c.l.b16 %v76
  %v398 = vunpack.c.l.b16 %v77
  %v399 = vunpack.c.l.b16 %v78
  %v400 = vunpack.c.l.b16 %v79
  %v401 = vunpack.c.l.b16 %v80
  %v402 = vunpack.c.l.b16 %v81
  %v403 = vunpack.c.l.b16 %v82
  %v404 = vunpack.c.l.b16 %v83
  %v405 = vunpack.c.l.b16 %v84
  %v406 = vunpack.c.l.b16 %v85
  %v407 = vunpack.c.l.b16 %v86
  %v408 = vunpack.c.l.b16 %v87
  %v409 = vunpack.c.l.b16 %v88
  %v410 = vunpack.c.l.b16 %v89
  %v411 = vunpack.c.l.b16 %v90
  %v412 = vunpack.c.l.b16 %v91
  %v413 = vunpack.c.l.b16 %v92
  %v414 = vunpack.c.l.b16 %v93
  %v415 = vunpack.c.l.b16 %v94
  %v416 = vunpack.c.l.b16 %v95
  %v417 = vunpack.c.l.b16 %v96
  %v418 = vunpack.c.l.b16 %v97
  %v419 = vunpack.c.l.b16 %v98
  %v420 = vunpack.c.l.b16 %v99
  %v421 = vunpack.c.l.b16 %v100
  %v422 = vunpack.c.l.b16 %v101
  %v423 = vunpack.c.l.b16 %v102
  %v424 = vunpack.c.l.b16 %v103
  %v425 = vunpack.c.l.b16 %v104
  %v426 = vunpack.c.l.b16 %v105
  %v427 = vunpack.c.l.b16 %v106
  %v428 = vunpack.c.l.b16 %v107
  %v429 = vunpack.c.l.b16 %v108
  %v430 = vunpack.c.l.b16 %v109
  %v431 = vunpack.c.l.b16 %v110
  %v432 = vunpack.c.l.b16 %v111
  %v433 = vunpack.c.l.b16 %v112
  %v434 = vunpack.c.l.b16 %v113
  %v435 = vunpack.c.l.b16 %v114
  %v436 = vunpack.c.l.b16 %v115
  %v437 = vunpack.c.l.b16 %v116
  %v438 = vunpack.c.l.b16 %v117
  %v439 = vunpack.c.l.b16 %v118
  %v440 = vunpack.c.l.b16 %v119
  %v441 = vunpack.c.l.b16 %v120
  %v442 = vunpack.c.l.b16 %v121
  %v443 = vunpack.c.l.b16 %v122
  %v444 = vunpack.c.l.b16 %v123
  %v445 = vunpack.c.l.b16 %v124
  %v446 = vunpack.c.l.b16 %v125
  %v447 = vunpack.c.l.b16 %v126
  %v448 = vunpack.c.l.b16 %v127
  %v449 = vunpack.c.l.b16 %v128
  %v450 = vunpack.c.l.b16 %v129
  %v451 = vunpack.c.l.b16 %v130
  %v452 = vunpack.c.l.b16 %v131
  %v453 = vunpack.c.l.b16 %v132
  %v454 = vunpack.c.l.b16 %v133
  %v455 = vunpack.c.l.b16 %v134
  %v456 = vunpack.c.l.b16 %v135
  %v457 = vunpack.c.l.b16 %v136
  %v458 = vunpack.c.l.b16 %v137
  %v459 = vunpack.c.l.b16 %v138
  %v460 = vunpack.c.l.b16 %v139
  %v461 = vunpack.c.l.b16 %v140
  %v462 = vunpack.c.l.b16 %v141
  %v463 = vunpack.c.l.b16 %v142
  %v464 = vunpack.c.l.b16 %v143
  %v465 = vunpack.c.l.b16 %v144
  %v466 = vunpack.c.l.b16 %v145
  %v467 = vunpack.c.l.b16 %v146
  %v468 = vunpack.c.l.b16 %v147
  %v469 = vunpack.c.l.b16 %v148
  %v470 = vunpack.c.l.b16 %v149
  %v471 = vunpack.c.l.b16 %v150
  %v472 = vunpack.c.l.b16 %v151
  %v473 = vunpack.c.l.b16 %v152
  %v474 = vunpack.c.l.b16 %v153
  %v475 = vunpack.c.l.b16 %v154
  %v476 = vpack.c.b16 %v349, %v348
  %v477 = vpack.c.b16 %v351, %v350
  %v478 = vpack.c.b16 %v353, %v352
  %v479 = vpack.c.b16 %v355, %v354
  %v480 = vpack.c.b16 %v357, %v356
  %v481 = vpack.c.b16 %v359, %v358
  %v482 = vpack.c.b16 %v361, %v360
  %v483 = vpack.c.b16 %v363, %v362
  %v484 = vpack.c.b16 %v365, %v364
  %v485 = vpack.c.b16 %v367, %v366
  %v486 = vpack.c.b16 %v369, %v368
  %v487 = vpack.c.b16 %v371, %v370
  %v488 = vpack.c.b16 %v373, %v372
  %v489 = vpack.c.b16 %v375, %v374
  %v490 = vpack.c.b16 %v377, %v376
  %v491 = vpack.c.b16 %v379, %v378
  %v492 = vpack.c.b16 %v381, %v380
  %v493 = vpack.c.b16 %v383, %v382
  %v494 = vpack.c.b16 %v385, %v384
  %v495 = vpack.c.b16 %v387, %v386
  %v496 = vpack.c.b16 %v389, %v388
  %v497 = vpack.c.b16 %v391, %v390
  %v498 = vpack.c.b16 %v393, %v392
  %v499 = vpack.c.b16 %v395, %v394
  %v500 = vpack.c.b16 %v397, %v396
  %v501 = vpack.c.b16 %v399, %v398
  %v502 = vpack.c.b16 %v401, %v400
  %v503 = vpack.c.b16 %v403, %v402
  %v504 = vpack.c.b16 %v405, %v404
  %v505 = vpack.c.b16 %v407, %v406
  %v506 = vpack.c.b16 %v409, %v408
  %v507 = vpack.c.b16 %v411, %v410
  %v508 = vpack.c.b16 %v413, %v412
  %v509 = vpack.c.b16 %v415, %v414
  %v510 = vpack.c.b16 %v417, %v416
  %v511 = vpack.c.b16 %v419, %v418
  %v512 = vpack.c.b16 %v421, %v420
  %v513 = vpack.c.b16 %v423, %v422
  %v514 = vpack.c.b16 %v425, %v424
  %v515 = vpack.c.b16 %v427, %v426
  %v516 = vpack.c.b16 %v429, %v428
  %v517 = vpack.c.b16 %v431, %v430
  %v518 = vpack.c.b16 %v433, %v432
  %v519 = vpack.c.b16 %v435, %v434
  %v520 = vpack.c.b16 %v437, %v436
  %v521 = vpack.c.b16 %v439, %v438
  %v522 = vpack.c.b16 %v441, %v440
  %v523 = vpack.c.b16 %v443, %v442
  %v524 = vpack.c.b16 %v445, %v444
  %v525 = vpack.c.b16 %v447, %v446
  %v526 = vpack.c.b16 %v449, %v448
  %v527 = vpack.c.b16 %v451, %v450
  %v528 = vpack.c.b16 %v453, %v452
  %v529 = vpack.c.b16 %v455, %v454
  %v530 = vpack.c.b16 %v457, %v456
  %v531 = vpack.c.b16 %v459, %v458
  %v532 = vpack.c.b16 %v461, %v460
  %v533 = vpack.c.b16 %v463, %v462
  %v534 = vpack.c.b16 %v465, %v464
  %v535 = vpack.c.b16 %v467, %v466
  %v536 = vpack.c.b16 %v469, %v468
  %v537 = vpack.c.b16 %v471, %v470
  %v538 = vpack.c.b16 %v473, %v472
  %v539 = vpack.c.b16 %v475, %v474
  %604 = vmatprep.subr.bf16.mxu0 0
  %605 = vmatpush1.bf16.msra.mxu0 %v483
  %606 = vmatprep.subr.bf16.mxu0 0
  %607 = vmatpush1.bf16.msra.mxu0 %v482
  %608 = vmatprep.subr.bf16.mxu0 0
  %609 = vmatpush1.bf16.msra.mxu0 %v481
  %610 = vmatprep.subr.bf16.mxu0 0
  %611 = vmatpush1.bf16.msra.mxu0 %v480
  %612 = vmatprep.subr.bf16.mxu0 0
  %613 = vmatpush1.bf16.msra.mxu0 %v479
  %614 = vmatprep.subr.bf16.mxu0 0
  %615 = vmatpush1.bf16.msra.mxu0 %v478
  %616 = vmatprep.subr.bf16.mxu0 0
  %617 = vmatpush1.bf16.msra.mxu0 %v477
  %618 = vmatprep.subr.bf16.mxu0 0
  %619 = vmatpush1.bf16.msra.mxu0 %v476
  %620 = vmatprep.subr.bf16.mxu0 0
  %621 = vmatpush2.bf16.msra.mxu0 %v491
  %622 = vmatprep.subr.bf16.mxu0 0
  %623 = vmatpush2.bf16.msra.mxu0 %v490
  %624 = vmatprep.subr.bf16.mxu0 0
  %625 = vmatpush2.bf16.msra.mxu0 %v489
  %626 = vmatprep.subr.bf16.mxu0 0
  %627 = vmatpush2.bf16.msra.mxu0 %v488
  %628 = vmatprep.subr.bf16.mxu0 0
  %629 = vmatpush2.bf16.msra.mxu0 %v487
  %630 = vmatprep.subr.bf16.mxu0 0
  %631 = vmatpush2.bf16.msra.mxu0 %v486
  %632 = vmatprep.subr.bf16.mxu0 0
  %633 = vmatpush2.bf16.msra.mxu0 %v485
  %634 = vmatprep.subr.bf16.mxu0 0
  %635 = vmatpush2.bf16.msra.mxu0 %v484
  %636 = vmatprep.mubr.bf16.mxu0 %v200
  %637 = vmatmul.mubr.bf16.gmra.mxu0 %v186
  %v638 = vpop.f32.mrf.mxu0
  %v639 = vadd.f32 %v160, %v638
  %v640 = vpop.f32.mrf.mxu0
  %v641 = vpop.f32.mrf.mxu0
  %v642 = vpop.f32.mrf.mxu0
  %643 = vdwg.mxu0
  %644 = vmatprep.subr.bf16.mxu0 0
  %645 = vmatpush1.bf16.msra.mxu0 %v499
  %646 = vmatprep.subr.bf16.mxu0 0
  %647 = vmatpush1.bf16.msra.mxu0 %v498
  %648 = vmatprep.subr.bf16.mxu0 0
  %649 = vmatpush1.bf16.msra.mxu0 %v497
  %650 = vmatprep.subr.bf16.mxu0 0
  %651 = vmatpush1.bf16.msra.mxu0 %v496
  %652 = vmatprep.subr.bf16.mxu0 0
  %653 = vmatpush1.bf16.msra.mxu0 %v495
  %654 = vmatprep.subr.bf16.mxu0 0
  %655 = vmatpush1.bf16.msra.mxu0 %v494
  %656 = vmatprep.subr.bf16.mxu0 0
  %657 = vmatpush1.bf16.msra.mxu0 %v493
  %658 = vmatprep.subr.bf16.mxu0 0
  %659 = vmatpush1.bf16.msra.mxu0 %v492
  %660 = vmatprep.subr.bf16.mxu0 0
  %661 = vmatpush2.bf16.msra.mxu0 %v507
  %662 = vmatprep.subr.bf16.mxu0 0
  %663 = vmatpush2.bf16.msra.mxu0 %v506
  %664 = vmatprep.subr.bf16.mxu0 0
  %665 = vmatpush2.bf16.msra.mxu0 %v505
  %666 = vmatprep.subr.bf16.mxu0 0
  %667 = vmatpush2.bf16.msra.mxu0 %v504
  %668 = vmatprep.subr.bf16.mxu0 0
  %669 = vmatpush2.bf16.msra.mxu0 %v503
  %670 = vmatprep.subr.bf16.mxu0 0
  %671 = vmatpush2.bf16.msra.mxu0 %v502
  %672 = vmatprep.subr.bf16.mxu0 0
  %673 = vmatpush2.bf16.msra.mxu0 %v501
  %674 = vmatprep.subr.bf16.mxu0 0
  %675 = vmatpush2.bf16.msra.mxu0 %v500
  %676 = vmatprep.mubr.bf16.mxu0 %v210
  %677 = vmatmul.mubr.bf16.gmra.mxu0 %v208
  %v678 = vpop.f32.mrf.mxu0
  %v679 = vadd.f32 %v639, %v678
  %v680 = vpop.f32.mrf.mxu0
  %v681 = vpop.f32.mrf.mxu0
  %v682 = vpop.f32.mrf.mxu0
  %683 = vdwg.mxu0
  %684 = vmatprep.subr.bf16.mxu0 0
  %685 = vmatpush1.bf16.msra.mxu0 %v515
  %686 = vmatprep.subr.bf16.mxu0 0
  %687 = vmatpush1.bf16.msra.mxu0 %v514
  %688 = vmatprep.subr.bf16.mxu0 0
  %689 = vmatpush1.bf16.msra.mxu0 %v513
  %690 = vmatprep.subr.bf16.mxu0 0
  %691 = vmatpush1.bf16.msra.mxu0 %v512
  %692 = vmatprep.subr.bf16.mxu0 0
  %693 = vmatpush1.bf16.msra.mxu0 %v511
  %694 = vmatprep.subr.bf16.mxu0 0
  %695 = vmatpush1.bf16.msra.mxu0 %v510
  %696 = vmatprep.subr.bf16.mxu0 0
  %697 = vmatpush1.bf16.msra.mxu0 %v509
  %698 = vmatprep.subr.bf16.mxu0 0
  %699 = vmatpush1.bf16.msra.mxu0 %v508
  %700 = vmatprep.subr.bf16.mxu0 0
  %701 = vmatpush2.bf16.msra.mxu0 %v523
  %702 = vmatprep.subr.bf16.mxu0 0
  %703 = vmatpush2.bf16.msra.mxu0 %v522
  %704 = vmatprep.subr.bf16.mxu0 0
  %705 = vmatpush2.bf16.msra.mxu0 %v521
  %706 = vmatprep.subr.bf16.mxu0 0
  %707 = vmatpush2.bf16.msra.mxu0 %v520
  %708 = vmatprep.subr.bf16.mxu0 0
  %709 = vmatpush2.bf16.msra.mxu0 %v519
  %710 = vmatprep.subr.bf16.mxu0 0
  %711 = vmatpush2.bf16.msra.mxu0 %v518
  %712 = vmatprep.subr.bf16.mxu0 0
  %713 = vmatpush2.bf16.msra.mxu0 %v517
  %714 = vmatprep.subr.bf16.mxu0 0
  %715 = vmatpush2.bf16.msra.mxu0 %v516
  %716 = vmatprep.mubr.bf16.mxu0 %v207
  %717 = vmatmul.mubr.bf16.gmra.mxu0 %v193
  %v718 = vpop.f32.mrf.mxu0
  %v719 = vadd.f32 %v679, %v718
  %v720 = vpop.f32.mrf.mxu0
  %v721 = vpop.f32.mrf.mxu0
  %v722 = vpop.f32.mrf.mxu0
  %723 = vdwg.mxu0
  %724 = vmatprep.subr.bf16.mxu0 0
  %725 = vmatpush1.bf16.msra.mxu0 %v531
  %726 = vmatprep.subr.bf16.mxu0 0
  %727 = vmatpush1.bf16.msra.mxu0 %v530
  %728 = vmatprep.subr.bf16.mxu0 0
  %729 = vmatpush1.bf16.msra.mxu0 %v529
  %730 = vmatprep.subr.bf16.mxu0 0
  %731 = vmatpush1.bf16.msra.mxu0 %v528
  %732 = vmatprep.subr.bf16.mxu0 0
  %733 = vmatpush1.bf16.msra.mxu0 %v527
  %734 = vmatprep.subr.bf16.mxu0 0
  %735 = vmatpush1.bf16.msra.mxu0 %v526
  %736 = vmatprep.subr.bf16.mxu0 0
  %737 = vmatpush1.bf16.msra.mxu0 %v525
  %738 = vmatprep.subr.bf16.mxu0 0
  %739 = vmatpush1.bf16.msra.mxu0 %v524
  %740 = vmatprep.subr.bf16.mxu0 0
  %741 = vmatpush2.bf16.msra.mxu0 %v539
  %742 = vmatprep.subr.bf16.mxu0 0
  %743 = vmatpush2.bf16.msra.mxu0 %v538
  %744 = vmatprep.subr.bf16.mxu0 0
  %745 = vmatpush2.bf16.msra.mxu0 %v537
  %746 = vmatprep.subr.bf16.mxu0 0
  %747 = vmatpush2.bf16.msra.mxu0 %v536
  %748 = vmatprep.subr.bf16.mxu0 0
  %749 = vmatpush2.bf16.msra.mxu0 %v535
  %750 = vmatprep.subr.bf16.mxu0 0
  %751 = vmatpush2.bf16.msra.mxu0 %v534
  %752 = vmatprep.subr.bf16.mxu0 0
  %753 = vmatpush2.bf16.msra.mxu0 %v533
  %754 = vmatprep.subr.bf16.mxu0 0
  %755 = vmatpush2.bf16.msra.mxu0 %v532
  %756 = vmatprep.mubr.bf16.mxu0 %v211
  %757 = vmatmul.mubr.bf16.gmra.mxu0 %v209
  %v758 = vpop.f32.mrf.mxu0
  %v759 = vadd.f32 %v719, %v758
  %v760 = vpop.f32.mrf.mxu0
  %v761 = vpop.f32.mrf.mxu0
  %v762 = vpop.f32.mrf.mxu0
  %763 = vdwg.mxu0
  %vm764 = vcmask 648192
  %765 = vst.msk [vmem:[%s6] sm:$0x3] %vm764, %v759
  %v766 = vld [vmem:[%s3] sm:$0x3]
  %v767 = vadd.f32 %v766, 1e-07
  %v768 = vlog2.pop %v767
  %v769 = vmul.f32 %v768, 0.6931472
  %v770 = vsub.f32 0.0, %v769
  %v771 = vadd.f32 %v770, 1e-07
  %v772 = vlog2.pop %v771
  %v773 = vmul.f32 %v772, 0.6931472
  %v774 = vsub.f32 0.0, %v773
  %v775 = vadd.f32 %v759, %v774
  %v776 = vmul.f32 %v775, 2.0
  %vm777 = vcmask 74752
  %v778 = vsel %vm777, %v776, -inf
  %779 = vmax.xlane.f32.xlu0 %v778
  %v780 = vpop.xlane.xlu0 %779
  %v781 = vsub.f32 %v776, %v780
  %v782 = vmul.f32 %v781, 1.442695
  %v783 = vpow.pop %v782
  %v784 = vsel %vm777, %v783, 0.0
  %785 = vadd.xlane.f32.xlu0 %v784
  %v786 = vpop.xlane.xlu0 %785
  %v787 = vrcp.pop %v786
  %v788 = vmul.f32 %v783, %v787
  %789 = vst.msk [vmem:[#allocation2] sm:$0x3] %vm777, %v788
  %vm790 = vcmask 156752
  %v791 = vsel %vm790, %v776, -inf
  %792 = vmax.xlane.f32.xlu0 %v791
  %v793 = vpop.xlane.xlu0 %792
  %v794 = vsub.f32 %v776, %v793
  %v795 = vmul.f32 %v794, 1.442695
  %v796 = vpow.pop %v795
  %798 = vrot.lane.b32.xlu0 %v796, 118
  %v799 = vpop.permute.xlu0 %798
  %v801 = vsel %vm777, %v799, 0.0
  %802 = vadd.xlane.f32.xlu0 %v801
  %v803 = vpop.xlane.xlu0 %802
  %v804 = vrcp.pop %v803
  %v805 = vmul.f32 %v796, %v804
  %806 = vst.msk [vmem:[#allocation2] sm:$0x3] %vm790, %v805
  %vm807 = vcmask 238752
  %v808 = vsel %vm807, %v776, -inf
  %809 = vmax.xlane.f32.xlu0 %v808
  %v810 = vpop.xlane.xlu0 %809
  %v811 = vsub.f32 %v776, %v810
  %v812 = vmul.f32 %v811, 1.442695
  %v813 = vpow.pop %v812
  %815 = vrot.lane.b32.xlu0 %v813, 108
  %v816 = vpop.permute.xlu0 %815
  %v818 = vsel %vm777, %v816, 0.0
  %819 = vadd.xlane.f32.xlu0 %v818
  %v820 = vpop.xlane.xlu0 %819
  %v821 = vrcp.pop %v820
  %v822 = vmul.f32 %v813, %v821
  %823 = vst.msk [vmem:[#allocation2] sm:$0x3] %vm807, %v822
  %vm824 = vcmask 320752
  %v825 = vsel %vm824, %v776, -inf
  %826 = vmax.xlane.f32.xlu0 %v825
  %v827 = vpop.xlane.xlu0 %826
  %v828 = vsub.f32 %v776, %v827
  %v829 = vmul.f32 %v828, 1.442695
  %v830 = vpow.pop %v829
  %832 = vrot.lane.b32.xlu0 %v830, 98
  %v833 = vpop.permute.xlu0 %832
  %v835 = vsel %vm777, %v833, 0.0
  %836 = vadd.xlane.f32.xlu0 %v835
  %v837 = vpop.xlane.xlu0 %836
  %v838 = vrcp.pop %v837
  %v839 = vmul.f32 %v830, %v838
  %840 = vst.msk [vmem:[#allocation2] sm:$0x3] %vm824, %v839
  %vm841 = vcmask 402752
  %v842 = vsel %vm841, %v776, -inf
  %843 = vmax.xlane.f32.xlu0 %v842
  %v844 = vpop.xlane.xlu0 %843
  %v845 = vsub.f32 %v776, %v844
  %v846 = vmul.f32 %v845, 1.442695
  %v847 = vpow.pop %v846
  %849 = vrot.lane.b32.xlu0 %v847, 88
  %v850 = vpop.permute.xlu0 %849
  %v852 = vsel %vm777, %v850, 0.0
  %853 = vadd.xlane.f32.xlu0 %v852
  %v854 = vpop.xlane.xlu0 %853
  %v855 = vrcp.pop %v854
  %v856 = vmul.f32 %v847, %v855
  %857 = vst.msk [vmem:[#allocation2] sm:$0x3] %vm841, %v856
  %vm858 = vcmask 484752
  %v859 = vsel %vm858, %v776, -inf
  %860 = vmax.xlane.f32.xlu0 %v859
  %v861 = vpop.xlane.xlu0 %860
  %v862 = vsub.f32 %v776, %v861
  %v863 = vmul.f32 %v862, 1.442695
  %v864 = vpow.pop %v863
  %866 = vrot.lane.b32.xlu0 %v864, 78
  %v867 = vpop.permute.xlu0 %866
  %v869 = vsel %vm777, %v867, 0.0
  %870 = vadd.xlane.f32.xlu0 %v869
  %v871 = vpop.xlane.xlu0 %870
  %v872 = vrcp.pop %v871
  %v873 = vmul.f32 %v864, %v872
  %874 = vst.msk [vmem:[#allocation2] sm:$0x3] %vm858, %v873
  %vm875 = vcmask 566752
  %v876 = vsel %vm875, %v776, -inf
  %877 = vmax.xlane.f32.xlu0 %v876
  %v878 = vpop.xlane.xlu0 %877
  %v879 = vsub.f32 %v776, %v878
  %v880 = vmul.f32 %v879, 1.442695
  %v881 = vpow.pop %v880
  %883 = vrot.lane.b32.xlu0 %v881, 68
  %v884 = vpop.permute.xlu0 %883
  %v886 = vsel %vm777, %v884, 0.0
  %887 = vadd.xlane.f32.xlu0 %v886
  %v888 = vpop.xlane.xlu0 %887
  %v889 = vrcp.pop %v888
  %v890 = vmul.f32 %v881, %v889
  %891 = vst.msk [vmem:[#allocation2] sm:$0x3] %vm875, %v890
  %vm892 = vcmask 648752
  %v893 = vsel %vm892, %v776, -inf
  %894 = vmax.xlane.f32.xlu0 %v893
  %v895 = vpop.xlane.xlu0 %894
  %v896 = vsub.f32 %v776, %v895
  %v897 = vmul.f32 %v896, 1.442695
  %v898 = vpow.pop %v897
  %900 = vrot.lane.b32.xlu0 %v898, 58
  %v901 = vpop.permute.xlu0 %900
  %v903 = vsel %vm777, %v901, 0.0
  %904 = vadd.xlane.f32.xlu0 %v903
  %v905 = vpop.xlane.xlu0 %904
  %v906 = vrcp.pop %v905
  %v907 = vmul.f32 %v898, %v906
  %908 = vst.msk [vmem:[#allocation2] sm:$0x3] %vm892, %v907
  %v909 = vld [vmem:[#allocation2] sm:$0x3]
  %v910 = vpack.c.bf16 %v909, %v909
  %v911 = vld [vmem:[%s4] sm:$0xff]
  %v912 = vld [vmem:[%s4 + $0x8] sm:$0xff]
  %v913 = vld [vmem:[%s4 + $0x10] sm:$0xff]
  %v914 = vld [vmem:[%s4 + $0x18] sm:$0xff]
  %v915 = vld [vmem:[%s4 + $0x20] sm:$0xff]
  %v916 = vld [vmem:[%s4 + $0x28] sm:$0xff]
  %v917 = vld [vmem:[%s4 + $0x30] sm:$0xff]
  %v918 = vld [vmem:[%s4 + $0x38] sm:$0xff]
  %v919 = vld [vmem:[%s4 + $0x40] sm:$0xff]
  %v920 = vld [vmem:[%s4 + $0x48] sm:$0xff]
  %v921 = vld [vmem:[%s4 + $0x50] sm:$0xff]
  %v922 = vld [vmem:[%s4 + $0x58] sm:$0xff]
  %v923 = vld [vmem:[%s4 + $0x60] sm:$0xff]
  %v924 = vld [vmem:[%s4 + $0x68] sm:$0xff]
  %v925 = vld [vmem:[%s4 + $0x70] sm:$0xff]
  %v926 = vld [vmem:[%s4 + $0x78] sm:$0xff]
  %v927 = vld [vmem:[%s4 + $0x80] sm:$0xff]
  %v928 = vld [vmem:[%s4 + $0x88] sm:$0xff]
  %v929 = vld [vmem:[%s4 + $0x90] sm:$0xff]
  %v930 = vld [vmem:[%s4 + $0x98] sm:$0xff]
  %v931 = vld [vmem:[%s4 + $0xa0] sm:$0xff]
  %v932 = vld [vmem:[%s4 + $0xa8] sm:$0xff]
  %v933 = vld [vmem:[%s4 + $0xb0] sm:$0xff]
  %v934 = vld [vmem:[%s4 + $0xb8] sm:$0xff]
  %v935 = vld [vmem:[%s4 + $0xc0] sm:$0xff]
  %v936 = vld [vmem:[%s4 + $0xc8] sm:$0xff]
  %v937 = vld [vmem:[%s4 + $0xd0] sm:$0xff]
  %v938 = vld [vmem:[%s4 + $0xd8] sm:$0xff]
  %v939 = vld [vmem:[%s4 + $0xe0] sm:$0xff]
  %v940 = vld [vmem:[%s4 + $0xe8] sm:$0xff]
  %v941 = vld [vmem:[%s4 + $0xf0] sm:$0xff]
  %v942 = vld [vmem:[%s4 + $0xf8] sm:$0xff]
  %v943 = vld [vmem:[%s4 + $0x100] sm:$0xff]
  %v944 = vld [vmem:[%s4 + $0x108] sm:$0xff]
  %v945 = vld [vmem:[%s4 + $0x110] sm:$0xff]
  %v946 = vld [vmem:[%s4 + $0x118] sm:$0xff]
  %v947 = vld [vmem:[%s4 + $0x120] sm:$0xff]
  %v948 = vld [vmem:[%s4 + $0x128] sm:$0xff]
  %v949 = vld [vmem:[%s4 + $0x130] sm:$0xff]
  %v950 = vld [vmem:[%s4 + $0x138] sm:$0xff]
  %v951 = vld [vmem:[%s5] sm:$0xff]
  %v953 = vlaneseq
  %v954 = vshrl.u32 %v953, 7
  %v955 = vsub.s32 0, %v954
  %v956 = vrot.slane %v951, %v955
  %v957 = vlaneseq
  %v958 = vshrl.u32 %v957, 7
  %v959 = vsub.s32 1, %v958
  %v960 = vrot.slane %v951, %v959
  %v961 = vlaneseq
  %v962 = vshrl.u32 %v961, 7
  %v963 = vsub.s32 2, %v962
  %v964 = vrot.slane %v951, %v963
  %v965 = vlaneseq
  %v966 = vshrl.u32 %v965, 7
  %v967 = vsub.s32 3, %v966
  %v968 = vrot.slane %v951, %v967
  %v969 = vlaneseq
  %v970 = vshrl.u32 %v969, 7
  %v971 = vsub.s32 4, %v970
  %v972 = vrot.slane %v951, %v971
  %v973 = vlaneseq
  %v974 = vshrl.u32 %v973, 7
  %v975 = vsub.s32 5, %v974
  %v976 = vrot.slane %v951, %v975
  %v977 = vlaneseq
  %v978 = vshrl.u32 %v977, 7
  %v979 = vsub.s32 6, %v978
  %v980 = vrot.slane %v951, %v979
  %v981 = vlaneseq
  %v982 = vshrl.u32 %v981, 7
  %v983 = vsub.s32 7, %v982
  %v984 = vrot.slane %v951, %v983
  %v1033 = vunpack.c.l.b16 %v911
  %v1034 = vunpack.c.h.b16 %v911
  %v1035 = vunpack.c.l.b16 %v912
  %v1036 = vunpack.c.h.b16 %v912
  %v1037 = vunpack.c.l.b16 %v913
  %v1038 = vunpack.c.h.b16 %v913
  %v1039 = vunpack.c.l.b16 %v914
  %v1040 = vunpack.c.h.b16 %v914
  %v1041 = vunpack.c.l.b16 %v915
  %v1042 = vunpack.c.h.b16 %v915
  %v1043 = vunpack.c.l.b16 %v916
  %v1044 = vunpack.c.h.b16 %v916
  %v1045 = vunpack.c.l.b16 %v917
  %v1046 = vunpack.c.h.b16 %v917
  %v1047 = vunpack.c.l.b16 %v918
  %v1048 = vunpack.c.h.b16 %v918
  %v1049 = vunpack.c.l.b16 %v919
  %v1050 = vunpack.c.h.b16 %v919
  %v1051 = vunpack.c.l.b16 %v920
  %v1052 = vunpack.c.h.b16 %v920
  %v1053 = vunpack.c.l.b16 %v921
  %v1054 = vunpack.c.h.b16 %v921
  %v1055 = vunpack.c.l.b16 %v922
  %v1056 = vunpack.c.h.b16 %v922
  %v1057 = vunpack.c.l.b16 %v923
  %v1058 = vunpack.c.h.b16 %v923
  %v1059 = vunpack.c.l.b16 %v924
  %v1060 = vunpack.c.h.b16 %v924
  %v1061 = vunpack.c.l.b16 %v925
  %v1062 = vunpack.c.h.b16 %v925
  %v1063 = vunpack.c.l.b16 %v926
  %v1064 = vunpack.c.h.b16 %v926
  %v1065 = vunpack.c.l.b16 %v927
  %v1066 = vunpack.c.h.b16 %v927
  %v1067 = vunpack.c.l.b16 %v928
  %v1068 = vunpack.c.h.b16 %v928
  %v1069 = vunpack.c.l.b16 %v929
  %v1070 = vunpack.c.h.b16 %v929
  %v1071 = vunpack.c.l.b16 %v930
  %v1072 = vunpack.c.h.b16 %v930
  %v1073 = vunpack.c.l.b16 %v931
  %v1074 = vunpack.c.h.b16 %v931
  %v1075 = vunpack.c.l.b16 %v932
  %v1076 = vunpack.c.h.b16 %v932
  %v1077 = vunpack.c.l.b16 %v933
  %v1078 = vunpack.c.h.b16 %v933
  %v1079 = vunpack.c.l.b16 %v934
  %v1080 = vunpack.c.h.b16 %v934
  %v1081 = vunpack.c.l.b16 %v935
  %v1082 = vunpack.c.h.b16 %v935
  %v1083 = vunpack.c.l.b16 %v936
  %v1084 = vunpack.c.h.b16 %v936
  %v1085 = vunpack.c.l.b16 %v937
  %v1086 = vunpack.c.h.b16 %v937
  %v1087 = vunpack.c.l.b16 %v938
  %v1088 = vunpack.c.h.b16 %v938
  %v1089 = vunpack.c.l.b16 %v939
  %v1090 = vunpack.c.h.b16 %v939
  %v1091 = vunpack.c.l.b16 %v940
  %v1092 = vunpack.c.h.b16 %v940
  %v1093 = vunpack.c.l.b16 %v941
  %v1094 = vunpack.c.h.b16 %v941
  %v1095 = vunpack.c.l.b16 %v942
  %v1096 = vunpack.c.h.b16 %v942
  %v1097 = vunpack.c.l.b16 %v943
  %v1098 = vunpack.c.h.b16 %v943
  %v1099 = vunpack.c.l.b16 %v944
  %v1100 = vunpack.c.h.b16 %v944
  %v1101 = vunpack.c.l.b16 %v945
  %v1102 = vunpack.c.h.b16 %v945
  %v1103 = vunpack.c.l.b16 %v946
  %v1104 = vunpack.c.h.b16 %v946
  %v1105 = vunpack.c.l.b16 %v947
  %v1106 = vunpack.c.h.b16 %v947
  %v1107 = vunpack.c.l.b16 %v948
  %v1108 = vunpack.c.h.b16 %v948
  %v1109 = vunpack.c.l.b16 %v949
  %v1110 = vunpack.c.h.b16 %v949
  %v1111 = vunpack.c.l.b16 %v950
  %v1112 = vunpack.c.h.b16 %v950
  %v1113 = vpack.c.b16 %v1041, %v1033
  %v1114 = vpack.c.b16 %v1042, %v1034
  %v1115 = vpack.c.b16 %v1043, %v1035
  %v1116 = vpack.c.b16 %v1044, %v1036
  %v1117 = vpack.c.b16 %v1045, %v1037
  %v1118 = vpack.c.b16 %v1046, %v1038
  %v1119 = vpack.c.b16 %v1047, %v1039
  %v1120 = vpack.c.b16 %v1048, %v1040
  %v1121 = vpack.c.b16 %v1057, %v1049
  %v1122 = vpack.c.b16 %v1058, %v1050
  %v1123 = vpack.c.b16 %v1059, %v1051
  %v1124 = vpack.c.b16 %v1060, %v1052
  %v1125 = vpack.c.b16 %v1061, %v1053
  %v1126 = vpack.c.b16 %v1062, %v1054
  %v1127 = vpack.c.b16 %v1063, %v1055
  %v1128 = vpack.c.b16 %v1064, %v1056
  %v1129 = vpack.c.b16 %v1073, %v1065
  %v1130 = vpack.c.b16 %v1074, %v1066
  %v1131 = vpack.c.b16 %v1075, %v1067
  %v1132 = vpack.c.b16 %v1076, %v1068
  %v1133 = vpack.c.b16 %v1077, %v1069
  %v1134 = vpack.c.b16 %v1078, %v1070
  %v1135 = vpack.c.b16 %v1079, %v1071
  %v1136 = vpack.c.b16 %v1080, %v1072
  %v1137 = vpack.c.b16 %v1089, %v1081
  %v1138 = vpack.c.b16 %v1090, %v1082
  %v1139 = vpack.c.b16 %v1091, %v1083
  %v1140 = vpack.c.b16 %v1092, %v1084
  %v1141 = vpack.c.b16 %v1093, %v1085
  %v1142 = vpack.c.b16 %v1094, %v1086
  %v1143 = vpack.c.b16 %v1095, %v1087
  %v1144 = vpack.c.b16 %v1096, %v1088
  %v1145 = vpack.c.b16 %v1105, %v1097
  %v1146 = vpack.c.b16 %v1106, %v1098
  %v1147 = vpack.c.b16 %v1107, %v1099
  %v1148 = vpack.c.b16 %v1108, %v1100
  %v1149 = vpack.c.b16 %v1109, %v1101
  %v1150 = vpack.c.b16 %v1110, %v1102
  %v1151 = vpack.c.b16 %v1111, %v1103
  %v1152 = vpack.c.b16 %v1112, %v1104
  %vm1193 = vcmask 654336
  %v1195 = vsel %vm1193, %v910, 0
  %1197 = vmatprep.subr.bf16.mxu0 0
  %1198 = vmatpush1.bf16.msra.mxu0 0
  %1199 = vmatprep.subr.bf16.mxu0 0
  %1200 = vmatpush1.bf16.msra.mxu0 0
  %1201 = vmatprep.subr.bf16.mxu0 0
  %1202 = vmatpush1.bf16.msra.mxu0 0
  %1203 = vmatprep.subr.bf16.mxu0 %v1146
  %1204 = vmatpush1.bf16.msra.mxu0 %v1145
  %1205 = vmatprep.subr.bf16.mxu0 %v1138
  %1206 = vmatpush1.bf16.msra.mxu0 %v1137
  %1207 = vmatprep.subr.bf16.mxu0 %v1130
  %1208 = vmatpush1.bf16.msra.mxu0 %v1129
  %1209 = vmatprep.subr.bf16.mxu0 %v1122
  %1210 = vmatpush1.bf16.msra.mxu0 %v1121
  %1211 = vmatprep.subr.bf16.mxu0 %v1114
  %1212 = vmatpush1.bf16.msra.mxu0 %v1113
  %1213 = vmatprep.subr.bf16.mxu0 0
  %1214 = vmatpush2.bf16.msra.mxu0 0
  %1215 = vmatprep.subr.bf16.mxu0 0
  %1216 = vmatpush2.bf16.msra.mxu0 0
  %1217 = vmatprep.subr.bf16.mxu0 0
  %1218 = vmatpush2.bf16.msra.mxu0 0
  %1219 = vmatprep.subr.bf16.mxu0 0
  %1220 = vmatpush2.bf16.msra.mxu0 0
  %1221 = vmatprep.subr.bf16.mxu0 0
  %1222 = vmatpush2.bf16.msra.mxu0 0
  %1223 = vmatprep.subr.bf16.mxu0 0
  %1224 = vmatpush2.bf16.msra.mxu0 0
  %1225 = vmatprep.subr.bf16.mxu0 0
  %1226 = vmatpush2.bf16.msra.mxu0 0
  %1227 = vmatprep.subr.bf16.mxu0 0
  %1228 = vmatpush2.bf16.msra.mxu0 0
  %1229 = vmatprep.mubr.bf16.mxu0 0
  %1230 = vmatmul.mubr.bf16.gmra.mxu0 %v1195
  %v1231 = vpop.f32.mrf.mxu0
  %v1232 = vadd.f32 %v956, %v1231
  %v1233 = vpop.f32.mrf.mxu0
  %v1234 = vadd.f32 %v960, %v1233
  %v1235 = vpop.f32.mrf.mxu0
  %v1236 = vpop.f32.mrf.mxu0
  %1237 = vdwg.mxu0
  %1238 = vmatprep.subr.bf16.mxu0 0
  %1239 = vmatpush1.bf16.msra.mxu0 0
  %1240 = vmatprep.subr.bf16.mxu0 0
  %1241 = vmatpush1.bf16.msra.mxu0 0
  %1242 = vmatprep.subr.bf16.mxu0 0
  %1243 = vmatpush1.bf16.msra.mxu0 0
  %1244 = vmatprep.subr.bf16.mxu0 %v1148
  %1245 = vmatpush1.bf16.msra.mxu0 %v1147
  %1246 = vmatprep.subr.bf16.mxu0 %v1140
  %1247 = vmatpush1.bf16.msra.mxu0 %v1139
  %1248 = vmatprep.subr.bf16.mxu0 %v1132
  %1249 = vmatpush1.bf16.msra.mxu0 %v1131
  %1250 = vmatprep.subr.bf16.mxu0 %v1124
  %1251 = vmatpush1.bf16.msra.mxu0 %v1123
  %1252 = vmatprep.subr.bf16.mxu0 %v1116
  %1253 = vmatpush1.bf16.msra.mxu0 %v1115
  %1254 = vmatprep.subr.bf16.mxu0 0
  %1255 = vmatpush2.bf16.msra.mxu0 0
  %1256 = vmatprep.subr.bf16.mxu0 0
  %1257 = vmatpush2.bf16.msra.mxu0 0
  %1258 = vmatprep.subr.bf16.mxu0 0
  %1259 = vmatpush2.bf16.msra.mxu0 0
  %1260 = vmatprep.subr.bf16.mxu0 0
  %1261 = vmatpush2.bf16.msra.mxu0 0
  %1262 = vmatprep.subr.bf16.mxu0 0
  %1263 = vmatpush2.bf16.msra.mxu0 0
  %1264 = vmatprep.subr.bf16.mxu0 0
  %1265 = vmatpush2.bf16.msra.mxu0 0
  %1266 = vmatprep.subr.bf16.mxu0 0
  %1267 = vmatpush2.bf16.msra.mxu0 0
  %1268 = vmatprep.subr.bf16.mxu0 0
  %1269 = vmatpush2.bf16.msra.mxu0 0
  %1270 = vmatprep.mubr.bf16.mxu0 0
  %1271 = vmatmul.mubr.bf16.gmra.mxu0 %v1195
  %v1272 = vpop.f32.mrf.mxu0
  %v1273 = vadd.f32 %v964, %v1272
  %v1274 = vpop.f32.mrf.mxu0
  %v1275 = vadd.f32 %v968, %v1274
  %v1276 = vpop.f32.mrf.mxu0
  %v1277 = vpop.f32.mrf.mxu0
  %1278 = vdwg.mxu0
  %1279 = vmatprep.subr.bf16.mxu0 0
  %1280 = vmatpush1.bf16.msra.mxu0 0
  %1281 = vmatprep.subr.bf16.mxu0 0
  %1282 = vmatpush1.bf16.msra.mxu0 0
  %1283 = vmatprep.subr.bf16.mxu0 0
  %1284 = vmatpush1.bf16.msra.mxu0 0
  %1285 = vmatprep.subr.bf16.mxu0 %v1150
  %1286 = vmatpush1.bf16.msra.mxu0 %v1149
  %1287 = vmatprep.subr.bf16.mxu0 %v1142
  %1288 = vmatpush1.bf16.msra.mxu0 %v1141
  %1289 = vmatprep.subr.bf16.mxu0 %v1134
  %1290 = vmatpush1.bf16.msra.mxu0 %v1133
  %1291 = vmatprep.subr.bf16.mxu0 %v1126
  %1292 = vmatpush1.bf16.msra.mxu0 %v1125
  %1293 = vmatprep.subr.bf16.mxu0 %v1118
  %1294 = vmatpush1.bf16.msra.mxu0 %v1117
  %1295 = vmatprep.subr.bf16.mxu0 0
  %1296 = vmatpush2.bf16.msra.mxu0 0
  %1297 = vmatprep.subr.bf16.mxu0 0
  %1298 = vmatpush2.bf16.msra.mxu0 0
  %1299 = vmatprep.subr.bf16.mxu0 0
  %1300 = vmatpush2.bf16.msra.mxu0 0
  %1301 = vmatprep.subr.bf16.mxu0 0
  %1302 = vmatpush2.bf16.msra.mxu0 0
  %1303 = vmatprep.subr.bf16.mxu0 0
  %1304 = vmatpush2.bf16.msra.mxu0 0
  %1305 = vmatprep.subr.bf16.mxu0 0
  %1306 = vmatpush2.bf16.msra.mxu0 0
  %1307 = vmatprep.subr.bf16.mxu0 0
  %1308 = vmatpush2.bf16.msra.mxu0 0
  %1309 = vmatprep.subr.bf16.mxu0 0
  %1310 = vmatpush2.bf16.msra.mxu0 0
  %1311 = vmatprep.mubr.bf16.mxu0 0
  %1312 = vmatmul.mubr.bf16.gmra.mxu0 %v1195
  %v1313 = vpop.f32.mrf.mxu0
  %v1314 = vadd.f32 %v972, %v1313
  %v1315 = vpop.f32.mrf.mxu0
  %v1316 = vadd.f32 %v976, %v1315
  %v1317 = vpop.f32.mrf.mxu0
  %v1318 = vpop.f32.mrf.mxu0
  %1319 = vdwg.mxu0
  %1320 = vmatprep.subr.bf16.mxu0 0
  %1321 = vmatpush1.bf16.msra.mxu0 0
  %1322 = vmatprep.subr.bf16.mxu0 0
  %1323 = vmatpush1.bf16.msra.mxu0 0
  %1324 = vmatprep.subr.bf16.mxu0 0
  %1325 = vmatpush1.bf16.msra.mxu0 0
  %1326 = vmatprep.subr.bf16.mxu0 %v1152
  %1327 = vmatpush1.bf16.msra.mxu0 %v1151
  %1328 = vmatprep.subr.bf16.mxu0 %v1144
  %1329 = vmatpush1.bf16.msra.mxu0 %v1143
  %1330 = vmatprep.subr.bf16.mxu0 %v1136
  %1331 = vmatpush1.bf16.msra.mxu0 %v1135
  %1332 = vmatprep.subr.bf16.mxu0 %v1128
  %1333 = vmatpush1.bf16.msra.mxu0 %v1127
  %1334 = vmatprep.subr.bf16.mxu0 %v1120
  %1335 = vmatpush1.bf16.msra.mxu0 %v1119
  %1336 = vmatprep.subr.bf16.mxu0 0
  %1337 = vmatpush2.bf16.msra.mxu0 0
  %1338 = vmatprep.subr.bf16.mxu0 0
  %1339 = vmatpush2.bf16.msra.mxu0 0
  %1340 = vmatprep.subr.bf16.mxu0 0
  %1341 = vmatpush2.bf16.msra.mxu0 0
  %1342 = vmatprep.subr.bf16.mxu0 0
  %1343 = vmatpush2.bf16.msra.mxu0 0
  %1344 = vmatprep.subr.bf16.mxu0 0
  %1345 = vmatpush2.bf16.msra.mxu0 0
  %1346 = vmatprep.subr.bf16.mxu0 0
  %1347 = vmatpush2.bf16.msra.mxu0 0
  %1348 = vmatprep.subr.bf16.mxu0 0
  %1349 = vmatpush2.bf16.msra.mxu0 0
  %1350 = vmatprep.subr.bf16.mxu0 0
  %1351 = vmatpush2.bf16.msra.mxu0 0
  %1352 = vmatprep.mubr.bf16.mxu0 0
  %1353 = vmatmul.mubr.bf16.gmra.mxu0 %v1195
  %v1354 = vpop.f32.mrf.mxu0
  %v1355 = vadd.f32 %v980, %v1354
  %v1356 = vpop.f32.mrf.mxu0
  %v1357 = vadd.f32 %v984, %v1356
  %v1358 = vpop.f32.mrf.mxu0
  %v1359 = vpop.f32.mrf.mxu0
  %1360 = vdwg.mxu0
  %v1361 = vpack.c.bf16 %v1232, %v1232
  %v1362 = vpack.c.bf16 %v1234, %v1234
  %v1363 = vpack.c.bf16 %v1273, %v1273
  %v1364 = vpack.c.bf16 %v1275, %v1275
  %v1365 = vpack.c.bf16 %v1314, %v1314
  %v1366 = vpack.c.bf16 %v1316, %v1316
  %v1367 = vpack.c.bf16 %v1355, %v1355
  %v1368 = vpack.c.bf16 %v1357, %v1357
  %v1377 = vcombine.low %v1361, %v1362
  %v1378 = vcombine.low %v1363, %v1364
  %v1379 = vcombine.low %v1365, %v1366
  %v1380 = vcombine.low %v1367, %v1368
  %v1382 = vunpack.c.l.s4 1966171168
  %v1383 = vunpack.c.0.s8 %v1382
  %v1384 = vlaneseq
  %v1385 = vshrl.u32 %v1384, 7
  %v1386 = vsub.s32 %v1383, %v1385
  %v1387 = vrot.slane %v1377, %v1386
  %v1389 = vunpack.c.l.s4 1966171168
  %v1390 = vunpack.c.0.s8 %v1389
  %v1391 = vlaneseq
  %v1392 = vshrl.u32 %v1391, 7
  %v1393 = vsub.s32 %v1390, %v1392
  %v1394 = vrot.slane %v1378, %v1393
  %v1396 = vunpack.c.l.s4 1966171168
  %v1397 = vunpack.c.0.s8 %v1396
  %v1398 = vlaneseq
  %v1399 = vshrl.u32 %v1398, 7
  %v1400 = vsub.s32 %v1397, %v1399
  %v1401 = vrot.slane %v1379, %v1400
  %v1403 = vunpack.c.l.s4 1966171168
  %v1404 = vunpack.c.0.s8 %v1403
  %v1405 = vlaneseq
  %v1406 = vshrl.u32 %v1405, 7
  %v1407 = vsub.s32 %v1404, %v1406
  %v1408 = vrot.slane %v1380, %v1407
  %v1409 = vcombine.low %v1387, %v1394
  %v1410 = vcombine.low %v1401, %v1408
  %v1412 = vunpack.c.l.s4 1966171168
  %v1413 = vunpack.c.0.s8 %v1412
  %v1414 = vlaneseq
  %v1415 = vshrl.u32 %v1414, 7
  %v1416 = vsub.s32 %v1413, %v1415
  %v1417 = vrot.slane %v1409, %v1416
  %v1419 = vunpack.c.l.s4 1966171168
  %v1420 = vunpack.c.0.s8 %v1419
  %v1421 = vlaneseq
  %v1422 = vshrl.u32 %v1421, 7
  %v1423 = vsub.s32 %v1420, %v1422
  %v1424 = vrot.slane %v1410, %v1423
  %v1425 = vcombine.low %v1417, %v1424
  %1427 = vst [vmem:[%s7] sm:$0xff] %v1425
  // Predicated region
  $region26: #{cvae_forward.10} parent=0 // pred_check
    _
  $region27: #{cvae_forward.10} parent=0 // pred_check_branch
    %1429 = sbr.rel (0) target = $region29
  $region28: #{cvae_forward.10} parent=0 // pred_region
    _
  $region29: #{cvae_forward.10} parent=0 // pred_fallthru
    _
  // Predicated region
  $region30: #{cvae_forward.10} parent=0 // pred_check
    _
  $region31: #{cvae_forward.10} parent=0 // pred_check_branch
    %1431 = sbr.rel (0) target = $region33
  $region32: #{cvae_forward.10} parent=0 // pred_region
    _
  $region33: #{cvae_forward.10} parent=0 // pred_fallthru
    _
  // Predicated region
  $region34: #{cvae_forward.10} parent=0 // pred_check
    _
  $region35: #{cvae_forward.10} parent=0 // pred_check_branch
    %1433 = sbr.rel (0) target = $region37
  $region36: #{cvae_forward.10} parent=0 // pred_region
    _
  $region37: #{cvae_forward.10} parent=0 // pred_fallthru
    _
  // Predicated region
  $region38: #{cvae_forward.10} parent=0 // pred_check
    _
  $region39: #{cvae_forward.10} parent=0 // pred_check_branch
    %1435 = sbr.rel (0) target = $region41
  $region40: #{cvae_forward.10} parent=0 // pred_region
    _
  $region41: #{cvae_forward.10} parent=0 // pred_fallthru
    _

// kernel: cvae_forward.11
$region0: #{cvae_forward.11}
  #allocation0 [shape = 'u32[]', space=smem, size = 0x4, offset = 0x4, fixed_abs, tag = 'smem constant byte address 0x4 - core index']
  #allocation1 [shape = 'u32[144,128]{1,0:T(1,128)}', space=vmem, size = 0x12000, scoped, tag = 'internal scratch']
  %s0 = inlined_call_operand.vmem [shape: bf16[576,128], index: 0, kind: input, shape index: {}]
  %s1 = inlined_call_operand.vmem [shape: bf16[32,576], index: 1, kind: input, shape index: {}]
  %s2 = inlined_call_operand.vmem [shape: f32[32,1], index: 2, kind: input, shape index: {}]
  %s3 = inlined_call_operand.vmem [shape: f32[32,1], index: 3, kind: input, shape index: {}]
  %s4 = inlined_call_operand.vmem [shape: bf16[32,128], index: 4, kind: output, shape index: {}]
  %s5 = sld [smem:[#allocation0]]
  $region26: #{cvae_forward.11} parent=0
    _
  %s7 = ssub.s32 1, %s5
  %s8 = scalar_select 0, %s7, %s5
  // Predicated region
  $region2: #{cvae_forward.11} parent=0 // pred_check
    _
  $region3: #{cvae_forward.11} parent=0 // pred_check_branch
    %10 = sbr.rel (0) target = $region5
  $region4: #{cvae_forward.11} parent=0 // pred_region
    _
  $region5: #{cvae_forward.11} parent=0 // pred_fallthru
    _
  // Predicated region
  $region6: #{cvae_forward.11} parent=0 // pred_check
    _
  $region7: #{cvae_forward.11} parent=0 // pred_check_branch
    %12 = sbr.rel (0) target = $region9
  $region8: #{cvae_forward.11} parent=0 // pred_region
    _
  $region9: #{cvae_forward.11} parent=0 // pred_fallthru
    _
  // Predicated region
  $region10: #{cvae_forward.11} parent=0 // pred_check
    _
  $region11: #{cvae_forward.11} parent=0 // pred_check_branch
    %14 = sbr.rel (0) target = $region13
  $region12: #{cvae_forward.11} parent=0 // pred_region
    _
  $region13: #{cvae_forward.11} parent=0 // pred_fallthru
    _
  // Predicated region
  $region14: #{cvae_forward.11} parent=0 // pred_check
    _
  $region15: #{cvae_forward.11} parent=0 // pred_check_branch
    %16 = sbr.rel (0) target = $region17
  $region16: #{cvae_forward.11} parent=0 // pred_region
    _
  $region17: #{cvae_forward.11} parent=0 // pred_fallthru
    _
  %v18 = vld [vmem:[%s1] sm:$0xff]
  %v19 = vld [vmem:[%s1 + $0x8] sm:$0xff]
  %v20 = vld [vmem:[%s1 + $0x10] sm:$0xf]
  %v21 = vld [vmem:[%s1 + $0x14] sm:$0xff]
  %v22 = vld [vmem:[%s1 + $0x1c] sm:$0xff]
  %v23 = vld [vmem:[%s1 + $0x24] sm:$0xf]
  %v24 = vld [vmem:[%s1 + $0x28] sm:$0xff]
  %v25 = vld [vmem:[%s1 + $0x30] sm:$0xff]
  %v26 = vld [vmem:[%s1 + $0x38] sm:$0xf]
  %v27 = vld [vmem:[%s1 + $0x3c] sm:$0xff]
  %v28 = vld [vmem:[%s1 + $0x44] sm:$0xff]
  %v29 = vld [vmem:[%s1 + $0x4c] sm:$0xf]
  %v30 = vld [vmem:[%s0] sm:$0xf]
  %v31 = vld [vmem:[%s0 + $0x4] sm:$0xf]
  %v32 = vld [vmem:[%s0 + $0x8] sm:$0xf]
  %v33 = vld [vmem:[%s0 + $0xc] sm:$0xf]
  %v34 = vld [vmem:[%s0 + $0x10] sm:$0xf]
  %v35 = vld [vmem:[%s0 + $0x14] sm:$0xf]
  %v36 = vld [vmem:[%s0 + $0x18] sm:$0xf]
  %v37 = vld [vmem:[%s0 + $0x1c] sm:$0xf]
  %v38 = vld [vmem:[%s0 + $0x20] sm:$0xf]
  %v39 = vld [vmem:[%s0 + $0x24] sm:$0xf]
  %v40 = vld [vmem:[%s0 + $0x28] sm:$0xf]
  %v41 = vld [vmem:[%s0 + $0x2c] sm:$0xf]
  %v42 = vld [vmem:[%s0 + $0x30] sm:$0xf]
  %v43 = vld [vmem:[%s0 + $0x34] sm:$0xf]
  %v44 = vld [vmem:[%s0 + $0x38] sm:$0xf]
  %v45 = vld [vmem:[%s0 + $0x3c] sm:$0xf]
  %v46 = vld [vmem:[%s0 + $0x40] sm:$0xf]
  %v47 = vld [vmem:[%s0 + $0x44] sm:$0xf]
  %v48 = vld [vmem:[%s0 + $0x48] sm:$0xf]
  %v49 = vld [vmem:[%s0 + $0x4c] sm:$0xf]
  %v50 = vld [vmem:[%s0 + $0x50] sm:$0xf]
  %v51 = vld [vmem:[%s0 + $0x54] sm:$0xf]
  %v52 = vld [vmem:[%s0 + $0x58] sm:$0xf]
  %v53 = vld [vmem:[%s0 + $0x5c] sm:$0xf]
  %v54 = vld [vmem:[%s0 + $0x60] sm:$0xf]
  %v55 = vld [vmem:[%s0 + $0x64] sm:$0xf]
  %v56 = vld [vmem:[%s0 + $0x68] sm:$0xf]
  %v57 = vld [vmem:[%s0 + $0x6c] sm:$0xf]
  %v58 = vld [vmem:[%s0 + $0x70] sm:$0xf]
  %v59 = vld [vmem:[%s0 + $0x74] sm:$0xf]
  %v60 = vld [vmem:[%s0 + $0x78] sm:$0xf]
  %v61 = vld [vmem:[%s0 + $0x7c] sm:$0xf]
  %v62 = vld [vmem:[%s0 + $0x80] sm:$0xf]
  %v63 = vld [vmem:[%s0 + $0x84] sm:$0xf]
  %v64 = vld [vmem:[%s0 + $0x88] sm:$0xf]
  %v65 = vld [vmem:[%s0 + $0x8c] sm:$0xf]
  %v66 = vld [vmem:[%s0 + $0x90] sm:$0xf]
  %v67 = vld [vmem:[%s0 + $0x94] sm:$0xf]
  %v68 = vld [vmem:[%s0 + $0x98] sm:$0xf]
  %v69 = vld [vmem:[%s0 + $0x9c] sm:$0xf]
  %v70 = vld [vmem:[%s0 + $0xa0] sm:$0xf]
  %v71 = vld [vmem:[%s0 + $0xa4] sm:$0xf]
  %v72 = vld [vmem:[%s0 + $0xa8] sm:$0xf]
  %v73 = vld [vmem:[%s0 + $0xac] sm:$0xf]
  %v74 = vld [vmem:[%s0 + $0xb0] sm:$0xf]
  %v75 = vld [vmem:[%s0 + $0xb4] sm:$0xf]
  %v76 = vld [vmem:[%s0 + $0xb8] sm:$0xf]
  %v77 = vld [vmem:[%s0 + $0xbc] sm:$0xf]
  %v78 = vld [vmem:[%s0 + $0xc0] sm:$0xf]
  %v79 = vld [vmem:[%s0 + $0xc4] sm:$0xf]
  %v80 = vld [vmem:[%s0 + $0xc8] sm:$0xf]
  %v81 = vld [vmem:[%s0 + $0xcc] sm:$0xf]
  %v82 = vld [vmem:[%s0 + $0xd0] sm:$0xf]
  %v83 = vld [vmem:[%s0 + $0xd4] sm:$0xf]
  %v84 = vld [vmem:[%s0 + $0xd8] sm:$0xf]
  %v85 = vld [vmem:[%s0 + $0xdc] sm:$0xf]
  %v86 = vld [vmem:[%s0 + $0xe0] sm:$0xf]
  %v87 = vld [vmem:[%s0 + $0xe4] sm:$0xf]
  %v88 = vld [vmem:[%s0 + $0xe8] sm:$0xf]
  %v89 = vld [vmem:[%s0 + $0xec] sm:$0xf]
  %v90 = vld [vmem:[%s0 + $0xf0] sm:$0xf]
  %v91 = vld [vmem:[%s0 + $0xf4] sm:$0xf]
  %v92 = vld [vmem:[%s0 + $0xf8] sm:$0xf]
  %v93 = vld [vmem:[%s0 + $0xfc] sm:$0xf]
  %v94 = vld [vmem:[%s0 + $0x100] sm:$0xf]
  %v95 = vld [vmem:[%s0 + $0x104] sm:$0xf]
  %v96 = vld [vmem:[%s0 + $0x108] sm:$0xf]
  %v97 = vld [vmem:[%s0 + $0x10c] sm:$0xf]
  %v98 = vld [vmem:[%s0 + $0x110] sm:$0xf]
  %v99 = vld [vmem:[%s0 + $0x114] sm:$0xf]
  %v100 = vld [vmem:[%s0 + $0x118] sm:$0xf]
  %v101 = vld [vmem:[%s0 + $0x11c] sm:$0xf]
  %v114 = vunpack.c.l.b16 %v18
  %v115 = vunpack.c.h.b16 %v18
  %v116 = vunpack.c.l.b16 %v19
  %v117 = vunpack.c.h.b16 %v19
  %v118 = vunpack.c.l.b16 %v20
  %v119 = vunpack.c.l.b16 %v21
  %v120 = vunpack.c.h.b16 %v21
  %v121 = vunpack.c.l.b16 %v22
  %v122 = vunpack.c.h.b16 %v22
  %v123 = vunpack.c.l.b16 %v23
  %v124 = vunpack.c.l.b16 %v24
  %v125 = vunpack.c.h.b16 %v24
  %v126 = vunpack.c.l.b16 %v25
  %v127 = vunpack.c.h.b16 %v25
  %v128 = vunpack.c.l.b16 %v26
  %v129 = vunpack.c.l.b16 %v27
  %v130 = vunpack.c.h.b16 %v27
  %v131 = vunpack.c.l.b16 %v28
  %v132 = vunpack.c.h.b16 %v28
  %v133 = vunpack.c.l.b16 %v29
  %v134 = vpack.c.b16 %v119, %v114
  %v135 = vpack.c.b16 %v120, %v115
  %v136 = vpack.c.b16 %v121, %v116
  %v137 = vpack.c.b16 %v122, %v117
  %v138 = vpack.c.b16 %v123, %v118
  %v139 = vpack.c.b16 %v129, %v124
  %v140 = vpack.c.b16 %v130, %v125
  %v141 = vpack.c.b16 %v131, %v126
  %v142 = vpack.c.b16 %v132, %v127
  %v143 = vpack.c.b16 %v133, %v128
  %v224 = vunpack.c.l.b16 %v30
  %v225 = vunpack.c.l.b16 %v31
  %v226 = vunpack.c.l.b16 %v32
  %v227 = vunpack.c.l.b16 %v33
  %v228 = vunpack.c.l.b16 %v34
  %v229 = vunpack.c.l.b16 %v35
  %v230 = vunpack.c.l.b16 %v36
  %v231 = vunpack.c.l.b16 %v37
  %v232 = vunpack.c.l.b16 %v38
  %v233 = vunpack.c.l.b16 %v39
  %v234 = vunpack.c.l.b16 %v40
  %v235 = vunpack.c.l.b16 %v41
  %v236 = vunpack.c.l.b16 %v42
  %v237 = vunpack.c.l.b16 %v43
  %v238 = vunpack.c.l.b16 %v44
  %v239 = vunpack.c.l.b16 %v45
  %v240 = vunpack.c.l.b16 %v46
  %v241 = vunpack.c.l.b16 %v47
  %v242 = vunpack.c.l.b16 %v48
  %v243 = vunpack.c.l.b16 %v49
  %v244 = vunpack.c.l.b16 %v50
  %v245 = vunpack.c.l.b16 %v51
  %v246 = vunpack.c.l.b16 %v52
  %v247 = vunpack.c.l.b16 %v53
  %v248 = vunpack.c.l.b16 %v54
  %v249 = vunpack.c.l.b16 %v55
  %v250 = vunpack.c.l.b16 %v56
  %v251 = vunpack.c.l.b16 %v57
  %v252 = vunpack.c.l.b16 %v58
  %v253 = vunpack.c.l.b16 %v59
  %v254 = vunpack.c.l.b16 %v60
  %v255 = vunpack.c.l.b16 %v61
  %v256 = vunpack.c.l.b16 %v62
  %v257 = vunpack.c.l.b16 %v63
  %v258 = vunpack.c.l.b16 %v64
  %v259 = vunpack.c.l.b16 %v65
  %v260 = vunpack.c.l.b16 %v66
  %v261 = vunpack.c.l.b16 %v67
  %v262 = vunpack.c.l.b16 %v68
  %v263 = vunpack.c.l.b16 %v69
  %v264 = vunpack.c.l.b16 %v70
  %v265 = vunpack.c.l.b16 %v71
  %v266 = vunpack.c.l.b16 %v72
  %v267 = vunpack.c.l.b16 %v73
  %v268 = vunpack.c.l.b16 %v74
  %v269 = vunpack.c.l.b16 %v75
  %v270 = vunpack.c.l.b16 %v76
  %v271 = vunpack.c.l.b16 %v77
  %v272 = vunpack.c.l.b16 %v78
  %v273 = vunpack.c.l.b16 %v79
  %v274 = vunpack.c.l.b16 %v80
  %v275 = vunpack.c.l.b16 %v81
  %v276 = vunpack.c.l.b16 %v82
  %v277 = vunpack.c.l.b16 %v83
  %v278 = vunpack.c.l.b16 %v84
  %v279 = vunpack.c.l.b16 %v85
  %v280 = vunpack.c.l.b16 %v86
  %v281 = vunpack.c.l.b16 %v87
  %v282 = vunpack.c.l.b16 %v88
  %v283 = vunpack.c.l.b16 %v89
  %v284 = vunpack.c.l.b16 %v90
  %v285 = vunpack.c.l.b16 %v91
  %v286 = vunpack.c.l.b16 %v92
  %v287 = vunpack.c.l.b16 %v93
  %v288 = vunpack.c.l.b16 %v94
  %v289 = vunpack.c.l.b16 %v95
  %v290 = vunpack.c.l.b16 %v96
  %v291 = vunpack.c.l.b16 %v97
  %v292 = vunpack.c.l.b16 %v98
  %v293 = vunpack.c.l.b16 %v99
  %v294 = vunpack.c.l.b16 %v100
  %v295 = vunpack.c.l.b16 %v101
  %v296 = vpack.c.b16 %v225, %v224
  %v297 = vpack.c.b16 %v227, %v226
  %v298 = vpack.c.b16 %v229, %v228
  %v299 = vpack.c.b16 %v231, %v230
  %v300 = vpack.c.b16 %v233, %v232
  %v301 = vpack.c.b16 %v235, %v234
  %v302 = vpack.c.b16 %v237, %v236
  %v303 = vpack.c.b16 %v239, %v238
  %v304 = vpack.c.b16 %v241, %v240
  %v305 = vpack.c.b16 %v243, %v242
  %v306 = vpack.c.b16 %v245, %v244
  %v307 = vpack.c.b16 %v247, %v246
  %v308 = vpack.c.b16 %v249, %v248
  %v309 = vpack.c.b16 %v251, %v250
  %v310 = vpack.c.b16 %v253, %v252
  %v311 = vpack.c.b16 %v255, %v254
  %v312 = vpack.c.b16 %v257, %v256
  %v313 = vpack.c.b16 %v259, %v258
  %v314 = vpack.c.b16 %v261, %v260
  %v315 = vpack.c.b16 %v263, %v262
  %v316 = vpack.c.b16 %v265, %v264
  %v317 = vpack.c.b16 %v267, %v266
  %v318 = vpack.c.b16 %v269, %v268
  %v319 = vpack.c.b16 %v271, %v270
  %v320 = vpack.c.b16 %v273, %v272
  %v321 = vpack.c.b16 %v275, %v274
  %v322 = vpack.c.b16 %v277, %v276
  %v323 = vpack.c.b16 %v279, %v278
  %v324 = vpack.c.b16 %v281, %v280
  %v325 = vpack.c.b16 %v283, %v282
  %v326 = vpack.c.b16 %v285, %v284
  %v327 = vpack.c.b16 %v287, %v286
  %v328 = vpack.c.b16 %v289, %v288
  %v329 = vpack.c.b16 %v291, %v290
  %v330 = vpack.c.b16 %v293, %v292
  %v331 = vpack.c.b16 %v295, %v294
  %vm368 = vcmask 523264
  %v370 = vsel %vm368, %v138, 0
  %v373 = vsel %vm368, %v143, 0
  %375 = vmatprep.subr.bf16.mxu0 0
  %376 = vmatpush1.bf16.msra.mxu0 %v303
  %377 = vmatprep.subr.bf16.mxu0 0
  %378 = vmatpush1.bf16.msra.mxu0 %v302
  %379 = vmatprep.subr.bf16.mxu0 0
  %380 = vmatpush1.bf16.msra.mxu0 %v301
  %381 = vmatprep.subr.bf16.mxu0 0
  %382 = vmatpush1.bf16.msra.mxu0 %v300
  %383 = vmatprep.subr.bf16.mxu0 0
  %384 = vmatpush1.bf16.msra.mxu0 %v299
  %385 = vmatprep.subr.bf16.mxu0 0
  %386 = vmatpush1.bf16.msra.mxu0 %v298
  %387 = vmatprep.subr.bf16.mxu0 0
  %388 = vmatpush1.bf16.msra.mxu0 %v297
  %389 = vmatprep.subr.bf16.mxu0 0
  %390 = vmatpush1.bf16.msra.mxu0 %v296
  %391 = vmatprep.subr.bf16.mxu0 0
  %392 = vmatpush2.bf16.msra.mxu0 %v311
  %393 = vmatprep.subr.bf16.mxu0 0
  %394 = vmatpush2.bf16.msra.mxu0 %v310
  %395 = vmatprep.subr.bf16.mxu0 0
  %396 = vmatpush2.bf16.msra.mxu0 %v309
  %397 = vmatprep.subr.bf16.mxu0 0
  %398 = vmatpush2.bf16.msra.mxu0 %v308
  %399 = vmatprep.subr.bf16.mxu0 0
  %400 = vmatpush2.bf16.msra.mxu0 %v307
  %401 = vmatprep.subr.bf16.mxu0 0
  %402 = vmatpush2.bf16.msra.mxu0 %v306
  %403 = vmatprep.subr.bf16.mxu0 0
  %404 = vmatpush2.bf16.msra.mxu0 %v305
  %405 = vmatprep.subr.bf16.mxu0 0
  %406 = vmatpush2.bf16.msra.mxu0 %v304
  %407 = vmatprep.mubr.bf16.mxu0 %v135
  %408 = vmatmul.mubr.bf16.gmra.mxu0 %v134
  %v409 = vpop.f32.mrf.mxu0
  %v410 = vadd.f32 0.0, %v409
  %v411 = vpop.f32.mrf.mxu0
  %v412 = vpop.f32.mrf.mxu0
  %v413 = vadd.f32 0.0, %v412
  %v414 = vpop.f32.mrf.mxu0
  %415 = vmatprep.mubr.bf16.mxu0 %v140
  %416 = vmatmul.mubr.bf16.gmra.mxu0 %v139
  %v417 = vpop.f32.mrf.mxu0
  %v418 = vadd.f32 0.0, %v417
  %v419 = vpop.f32.mrf.mxu0
  %v420 = vpop.f32.mrf.mxu0
  %v421 = vadd.f32 0.0, %v420
  %v422 = vpop.f32.mrf.mxu0
  %423 = vdwg.mxu0
  %424 = vmatprep.subr.bf16.mxu0 0
  %425 = vmatpush1.bf16.msra.mxu0 %v319
  %426 = vmatprep.subr.bf16.mxu0 0
  %427 = vmatpush1.bf16.msra.mxu0 %v318
  %428 = vmatprep.subr.bf16.mxu0 0
  %429 = vmatpush1.bf16.msra.mxu0 %v317
  %430 = vmatprep.subr.bf16.mxu0 0
  %431 = vmatpush1.bf16.msra.mxu0 %v316
  %432 = vmatprep.subr.bf16.mxu0 0
  %433 = vmatpush1.bf16.msra.mxu0 %v315
  %434 = vmatprep.subr.bf16.mxu0 0
  %435 = vmatpush1.bf16.msra.mxu0 %v314
  %436 = vmatprep.subr.bf16.mxu0 0
  %437 = vmatpush1.bf16.msra.mxu0 %v313
  %438 = vmatprep.subr.bf16.mxu0 0
  %439 = vmatpush1.bf16.msra.mxu0 %v312
  %440 = vmatprep.subr.bf16.mxu0 0
  %441 = vmatpush2.bf16.msra.mxu0 %v327
  %442 = vmatprep.subr.bf16.mxu0 0
  %443 = vmatpush2.bf16.msra.mxu0 %v326
  %444 = vmatprep.subr.bf16.mxu0 0
  %445 = vmatpush2.bf16.msra.mxu0 %v325
  %446 = vmatprep.subr.bf16.mxu0 0
  %447 = vmatpush2.bf16.msra.mxu0 %v324
  %448 = vmatprep.subr.bf16.mxu0 0
  %449 = vmatpush2.bf16.msra.mxu0 %v323
  %450 = vmatprep.subr.bf16.mxu0 0
  %451 = vmatpush2.bf16.msra.mxu0 %v322
  %452 = vmatprep.subr.bf16.mxu0 0
  %453 = vmatpush2.bf16.msra.mxu0 %v321
  %454 = vmatprep.subr.bf16.mxu0 0
  %455 = vmatpush2.bf16.msra.mxu0 %v320
  %456 = vmatprep.mubr.bf16.mxu0 %v137
  %457 = vmatmul.mubr.bf16.gmra.mxu0 %v136
  %v458 = vpop.f32.mrf.mxu0
  %v459 = vadd.f32 %v410, %v458
  %v460 = vpop.f32.mrf.mxu0
  %v461 = vpop.f32.mrf.mxu0
  %v462 = vadd.f32 %v413, %v461
  %v463 = vpop.f32.mrf.mxu0
  %464 = vmatprep.mubr.bf16.mxu0 %v142
  %465 = vmatmul.mubr.bf16.gmra.mxu0 %v141
  %v466 = vpop.f32.mrf.mxu0
  %v467 = vadd.f32 %v418, %v466
  %v468 = vpop.f32.mrf.mxu0
  %v469 = vpop.f32.mrf.mxu0
  %v470 = vadd.f32 %v421, %v469
  %v471 = vpop.f32.mrf.mxu0
  %472 = vdwg.mxu0
  %473 = vmatprep.subr.bf16.mxu0 0
  %474 = vmatpush1.bf16.msra.mxu0 0
  %475 = vmatprep.subr.bf16.mxu0 0
  %476 = vmatpush1.bf16.msra.mxu0 0
  %477 = vmatprep.subr.bf16.mxu0 0
  %478 = vmatpush1.bf16.msra.mxu0 0
  %479 = vmatprep.subr.bf16.mxu0 0
  %480 = vmatpush1.bf16.msra.mxu0 0
  %481 = vmatprep.subr.bf16.mxu0 0
  %482 = vmatpush1.bf16.msra.mxu0 %v331
  %483 = vmatprep.subr.bf16.mxu0 0
  %484 = vmatpush1.bf16.msra.mxu0 %v330
  %485 = vmatprep.subr.bf16.mxu0 0
  %486 = vmatpush1.bf16.msra.mxu0 %v329
  %487 = vmatprep.subr.bf16.mxu0 0
  %488 = vmatpush1.bf16.msra.mxu0 %v328
  %489 = vmatprep.subr.bf16.mxu0 0
  %490 = vmatpush2.bf16.msra.mxu0 0
  %491 = vmatprep.subr.bf16.mxu0 0
  %492 = vmatpush2.bf16.msra.mxu0 0
  %493 = vmatprep.subr.bf16.mxu0 0
  %494 = vmatpush2.bf16.msra.mxu0 0
  %495 = vmatprep.subr.bf16.mxu0 0
  %496 = vmatpush2.bf16.msra.mxu0 0
  %497 = vmatprep.subr.bf16.mxu0 0
  %498 = vmatpush2.bf16.msra.mxu0 0
  %499 = vmatprep.subr.bf16.mxu0 0
  %500 = vmatpush2.bf16.msra.mxu0 0
  %501 = vmatprep.subr.bf16.mxu0 0
  %502 = vmatpush2.bf16.msra.mxu0 0
  %503 = vmatprep.subr.bf16.mxu0 0
  %504 = vmatpush2.bf16.msra.mxu0 0
  %505 = vmatprep.mubr.bf16.mxu0 0
  %506 = vmatmul.mubr.bf16.gmra.mxu0 %v370
  %v507 = vpop.f32.mrf.mxu0
  %v508 = vadd.f32 %v459, %v507
  %v509 = vpop.f32.mrf.mxu0
  %v510 = vpop.f32.mrf.mxu0
  %v511 = vadd.f32 %v462, %v510
  %v512 = vpop.f32.mrf.mxu0
  %513 = vmatprep.mubr.bf16.mxu0 0
  %514 = vmatmul.mubr.bf16.gmra.mxu0 %v373
  %v515 = vpop.f32.mrf.mxu0
  %v516 = vadd.f32 %v467, %v515
  %v517 = vpop.f32.mrf.mxu0
  %v518 = vpop.f32.mrf.mxu0
  %v519 = vadd.f32 %v470, %v518
  %v520 = vpop.f32.mrf.mxu0
  %521 = vdwg.mxu0
  %522 = vadd.xlane.f32.xlu0 %v508
  %v523 = vpop.xlane.xlu0 %522
  %524 = vadd.xlane.f32.xlu0 %v511
  %v525 = vpop.xlane.xlu0 %524
  %526 = vadd.xlane.f32.xlu0 %v516
  %v527 = vpop.xlane.xlu0 %526
  %528 = vadd.xlane.f32.xlu0 %v519
  %v529 = vpop.xlane.xlu0 %528
  %v530 = vmul.f32 %v523, 0.0078125
  %v531 = vmul.f32 %v525, 0.0078125
  %v532 = vmul.f32 %v527, 0.0078125
  %v533 = vmul.f32 %v529, 0.0078125
  %v534 = vmul.f32 %v508, %v508
  %v535 = vmul.f32 %v511, %v511
  %v536 = vmul.f32 %v516, %v516
  %v537 = vmul.f32 %v519, %v519
  %538 = vadd.xlane.f32.xlu0 %v534
  %v539 = vpop.xlane.xlu0 %538
  %540 = vadd.xlane.f32.xlu0 %v535
  %v541 = vpop.xlane.xlu0 %540
  %542 = vadd.xlane.f32.xlu0 %v536
  %v543 = vpop.xlane.xlu0 %542
  %544 = vadd.xlane.f32.xlu0 %v537
  %v545 = vpop.xlane.xlu0 %544
  %v546 = vmul.f32 %v539, 0.0078125
  %v547 = vmul.f32 %v541, 0.0078125
  %v548 = vmul.f32 %v543, 0.0078125
  %v549 = vmul.f32 %v545, 0.0078125
  %v550 = vmul.f32 %v530, %v530
  %v551 = vmul.f32 %v531, %v531
  %v552 = vmul.f32 %v532, %v532
  %v553 = vmul.f32 %v533, %v533
  %v554 = vsub.f32 %v546, %v550
  %v555 = vsub.f32 %v547, %v551
  %v556 = vsub.f32 %v548, %v552
  %v557 = vsub.f32 %v549, %v553
  %v558 = vmax.f32 %v554, 0.0
  %v559 = vmax.f32 %v555, 0.0
  %v560 = vmax.f32 %v556, 0.0
  %v561 = vmax.f32 %v557, 0.0
  %v562 = vadd.f32 %v558, 1e-05
  %v563 = vadd.f32 %v559, 1e-05
  %v564 = vadd.f32 %v560, 1e-05
  %v565 = vadd.f32 %v561, 1e-05
  %v566 = vrsqrt.pop %v562
  %v567 = vrsqrt.pop %v563
  %v568 = vrsqrt.pop %v564
  %v569 = vrsqrt.pop %v565
  %v570 = vld [vmem:[%s2] sm:$0xff]
  %v571 = vld [vmem:[%s2 + $0x8] sm:$0xff]
  %v572 = vld [vmem:[%s2 + $0x10] sm:$0xff]
  %v573 = vld [vmem:[%s2 + $0x18] sm:$0xff]
  %v574 = vmul.f32 %v566, %v570
  %v575 = vmul.f32 %v567, %v571
  %v576 = vmul.f32 %v568, %v572
  %v577 = vmul.f32 %v569, %v573
  %v578 = vsub.f32 %v508, %v530
  %v579 = vsub.f32 %v511, %v531
  %v580 = vsub.f32 %v516, %v532
  %v581 = vsub.f32 %v519, %v533
  %583 = vset.pattern.permute.xlu0 0
  %584 = vperm.xlu0 %583, %v574
  %v585 = vpop.permute.xlu0 %584
  %588 = vset.pattern.permute.xlu0 0
  %589 = vperm.xlu0 %588, %v575
  %v590 = vpop.permute.xlu0 %589
  %593 = vset.pattern.permute.xlu0 0
  %594 = vperm.xlu0 %593, %v576
  %v595 = vpop.permute.xlu0 %594
  %598 = vset.pattern.permute.xlu0 0
  %599 = vperm.xlu0 %598, %v577
  %v600 = vpop.permute.xlu0 %599
  %v602 = vmul.f32 %v578, %v585
  %v603 = vmul.f32 %v579, %v590
  %v604 = vmul.f32 %v580, %v595
  %v605 = vmul.f32 %v581, %v600
  %v606 = vld [vmem:[%s3] sm:$0xff]
  %v607 = vld [vmem:[%s3 + $0x8] sm:$0xff]
  %v608 = vld [vmem:[%s3 + $0x10] sm:$0xff]
  %v609 = vld [vmem:[%s3 + $0x18] sm:$0xff]
  %611 = vset.pattern.permute.xlu0 0
  %612 = vperm.xlu0 %611, %v606
  %v613 = vpop.permute.xlu0 %612
  %616 = vset.pattern.permute.xlu0 0
  %617 = vperm.xlu0 %616, %v607
  %v618 = vpop.permute.xlu0 %617
  %621 = vset.pattern.permute.xlu0 0
  %622 = vperm.xlu0 %621, %v608
  %v623 = vpop.permute.xlu0 %622
  %626 = vset.pattern.permute.xlu0 0
  %627 = vperm.xlu0 %626, %v609
  %v628 = vpop.permute.xlu0 %627
  %v630 = vadd.f32 %v602, %v613
  %v631 = vadd.f32 %v603, %v618
  %v632 = vadd.f32 %v604, %v623
  %v633 = vadd.f32 %v605, %v628
  %v634 = vmax.f32 %v630, 0.0
  %v635 = vmax.f32 %v631, 0.0
  %v636 = vmax.f32 %v632, 0.0
  %v637 = vmax.f32 %v633, 0.0
  %v638 = vpack.c.bf16 %v635, %v634
  %v639 = vpack.c.bf16 %v637, %v636
  %v642 = vunpack.c.l.b16 %v638
  %v643 = vunpack.c.h.b16 %v638
  %v644 = vunpack.c.l.b16 %v639
  %v645 = vunpack.c.h.b16 %v639
  %v646 = vpack.c.b16 %v642, %v642
  %v647 = vpack.c.b16 %v643, %v643
  %v648 = vpack.c.b16 %v644, %v644
  %v649 = vpack.c.b16 %v645, %v645
  %654 = vst [vmem:[%s4] sm:$0xf] %v646
  %655 = vst [vmem:[%s4 + $0x4] sm:$0xf] %v647
  %656 = vst [vmem:[%s4 + $0x8] sm:$0xf] %v648
  %657 = vst [vmem:[%s4 + $0xc] sm:$0xf] %v649
  // Predicated region
  $region18: #{cvae_forward.11} parent=0 // pred_check
    _
  $region19: #{cvae_forward.11} parent=0 // pred_check_branch
    %659 = sbr.rel (0) target = $region21
  $region20: #{cvae_forward.11} parent=0 // pred_region
    _
  $region21: #{cvae_forward.11} parent=0 // pred_fallthru
    _
  // Predicated region
  $region22: #{cvae_forward.11} parent=0 // pred_check
    _
  $region23: #{cvae_forward.11} parent=0 // pred_check_branch
    %661 = sbr.rel (0) target = $region25
  $region24: #{cvae_forward.11} parent=0 // pred_region
    _
  $region25: #{cvae_forward.11} parent=0 // pred_fallthru
    _

// kernel: cvae_forward.12
$region0: #{cvae_forward.12}
  #allocation0 [shape = 'u32[]', space=smem, size = 0x4, offset = 0x4, fixed_abs, tag = 'smem constant byte address 0x4 - core index']
  #allocation1 [shape = 'u32[144,128]{1,0:T(1,128)}', space=vmem, size = 0x12000, scoped, tag = 'internal scratch']
  %s0 = inlined_call_operand.vmem [shape: bf16[288,512], index: 0, kind: input, shape index: {}]
  %s1 = inlined_call_operand.vmem [shape: bf16[16,288], index: 1, kind: input, shape index: {}]
  %s2 = inlined_call_operand.vmem [shape: f32[16,1], index: 2, kind: input, shape index: {}]
  %s3 = inlined_call_operand.vmem [shape: f32[16,1], index: 3, kind: input, shape index: {}]
  %s4 = inlined_call_operand.vmem [shape: bf16[16,512], index: 4, kind: output, shape index: {}]
  %s5 = sld [smem:[#allocation0]]
  $region26: #{cvae_forward.12} parent=0
    _
  %s7 = ssub.s32 1, %s5
  %s8 = scalar_select 0, %s7, %s5
  // Predicated region
  $region2: #{cvae_forward.12} parent=0 // pred_check
    _
  $region3: #{cvae_forward.12} parent=0 // pred_check_branch
    %10 = sbr.rel (0) target = $region5
  $region4: #{cvae_forward.12} parent=0 // pred_region
    _
  $region5: #{cvae_forward.12} parent=0 // pred_fallthru
    _
  // Predicated region
  $region6: #{cvae_forward.12} parent=0 // pred_check
    _
  $region7: #{cvae_forward.12} parent=0 // pred_check_branch
    %12 = sbr.rel (0) target = $region9
  $region8: #{cvae_forward.12} parent=0 // pred_region
    _
  $region9: #{cvae_forward.12} parent=0 // pred_fallthru
    _
  // Predicated region
  $region10: #{cvae_forward.12} parent=0 // pred_check
    _
  $region11: #{cvae_forward.12} parent=0 // pred_check_branch
    %14 = sbr.rel (0) target = $region13
  $region12: #{cvae_forward.12} parent=0 // pred_region
    _
  $region13: #{cvae_forward.12} parent=0 // pred_fallthru
    _
  // Predicated region
  $region14: #{cvae_forward.12} parent=0 // pred_check
    _
  $region15: #{cvae_forward.12} parent=0 // pred_check_branch
    %16 = sbr.rel (0) target = $region17
  $region16: #{cvae_forward.12} parent=0 // pred_region
    _
  $region17: #{cvae_forward.12} parent=0 // pred_fallthru
    _
  %v18 = vld [vmem:[%s1] sm:$0xff]
  %v19 = vld [vmem:[%s1 + $0x8] sm:$0xf]
  %v20 = vld [vmem:[%s1 + $0xc] sm:$0xff]
  %v21 = vld [vmem:[%s1 + $0x14] sm:$0xf]
  %v22 = vld [vmem:[%s0] sm:$0xff]
  %v23 = vld [vmem:[%s0 + $0x8] sm:$0xff]
  %v24 = vld [vmem:[%s0 + $0x10] sm:$0xff]
  %v25 = vld [vmem:[%s0 + $0x18] sm:$0xff]
  %v26 = vld [vmem:[%s0 + $0x20] sm:$0xff]
  %v27 = vld [vmem:[%s0 + $0x28] sm:$0xff]
  %v28 = vld [vmem:[%s0 + $0x30] sm:$0xff]
  %v29 = vld [vmem:[%s0 + $0x38] sm:$0xff]
  %v30 = vld [vmem:[%s0 + $0x40] sm:$0xff]
  %v31 = vld [vmem:[%s0 + $0x48] sm:$0xff]
  %v32 = vld [vmem:[%s0 + $0x50] sm:$0xff]
  %v33 = vld [vmem:[%s0 + $0x58] sm:$0xff]
  %v34 = vld [vmem:[%s0 + $0x60] sm:$0xff]
  %v35 = vld [vmem:[%s0 + $0x68] sm:$0xff]
  %v36 = vld [vmem:[%s0 + $0x70] sm:$0xff]
  %v37 = vld [vmem:[%s0 + $0x78] sm:$0xff]
  %v38 = vld [vmem:[%s0 + $0x80] sm:$0xff]
  %v39 = vld [vmem:[%s0 + $0x88] sm:$0xff]
  %v40 = vld [vmem:[%s0 + $0x90] sm:$0xff]
  %v41 = vld [vmem:[%s0 + $0x98] sm:$0xff]
  %v42 = vld [vmem:[%s0 + $0xa0] sm:$0xff]
  %v43 = vld [vmem:[%s0 + $0xa8] sm:$0xff]
  %v44 = vld [vmem:[%s0 + $0xb0] sm:$0xff]
  %v45 = vld [vmem:[%s0 + $0xb8] sm:$0xff]
  %v46 = vld [vmem:[%s0 + $0xc0] sm:$0xff]
  %v47 = vld [vmem:[%s0 + $0xc8] sm:$0xff]
  %v48 = vld [vmem:[%s0 + $0xd0] sm:$0xff]
  %v49 = vld [vmem:[%s0 + $0xd8] sm:$0xff]
  %v50 = vld [vmem:[%s0 + $0xe0] sm:$0xff]
  %v51 = vld [vmem:[%s0 + $0xe8] sm:$0xff]
  %v52 = vld [vmem:[%s0 + $0xf0] sm:$0xff]
  %v53 = vld [vmem:[%s0 + $0xf8] sm:$0xff]
  %v54 = vld [vmem:[%s0 + $0x100] sm:$0xff]
  %v55 = vld [vmem:[%s0 + $0x108] sm:$0xff]
  %v56 = vld [vmem:[%s0 + $0x110] sm:$0xff]
  %v57 = vld [vmem:[%s0 + $0x118] sm:$0xff]
  %v58 = vld [vmem:[%s0 + $0x120] sm:$0xff]
  %v59 = vld [vmem:[%s0 + $0x128] sm:$0xff]
  %v60 = vld [vmem:[%s0 + $0x130] sm:$0xff]
  %v61 = vld [vmem:[%s0 + $0x138] sm:$0xff]
  %v62 = vld [vmem:[%s0 + $0x140] sm:$0xff]
  %v63 = vld [vmem:[%s0 + $0x148] sm:$0xff]
  %v64 = vld [vmem:[%s0 + $0x150] sm:$0xff]
  %v65 = vld [vmem:[%s0 + $0x158] sm:$0xff]
  %v66 = vld [vmem:[%s0 + $0x160] sm:$0xff]
  %v67 = vld [vmem:[%s0 + $0x168] sm:$0xff]
  %v68 = vld [vmem:[%s0 + $0x170] sm:$0xff]
  %v69 = vld [vmem:[%s0 + $0x178] sm:$0xff]
  %v70 = vld [vmem:[%s0 + $0x180] sm:$0xff]
  %v71 = vld [vmem:[%s0 + $0x188] sm:$0xff]
  %v72 = vld [vmem:[%s0 + $0x190] sm:$0xff]
  %v73 = vld [vmem:[%s0 + $0x198] sm:$0xff]
  %v74 = vld [vmem:[%s0 + $0x1a0] sm:$0xff]
  %v75 = vld [vmem:[%s0 + $0x1a8] sm:$0xff]
  %v76 = vld [vmem:[%s0 + $0x1b0] sm:$0xff]
  %v77 = vld [vmem:[%s0 + $0x1b8] sm:$0xff]
  %v78 = vld [vmem:[%s0 + $0x1c0] sm:$0xff]
  %v79 = vld [vmem:[%s0 + $0x1c8] sm:$0xff]
  %v80 = vld [vmem:[%s0 + $0x1d0] sm:$0xff]
  %v81 = vld [vmem:[%s0 + $0x1d8] sm:$0xff]
  %v82 = vld [vmem:[%s0 + $0x1e0] sm:$0xff]
  %v83 = vld [vmem:[%s0 + $0x1e8] sm:$0xff]
  %v84 = vld [vmem:[%s0 + $0x1f0] sm:$0xff]
  %v85 = vld [vmem:[%s0 + $0x1f8] sm:$0xff]
  %v86 = vld [vmem:[%s0 + $0x200] sm:$0xff]
  %v87 = vld [vmem:[%s0 + $0x208] sm:$0xff]
  %v88 = vld [vmem:[%s0 + $0x210] sm:$0xff]
  %v89 = vld [vmem:[%s0 + $0x218] sm:$0xff]
  %v90 = vld [vmem:[%s0 + $0x220] sm:$0xff]
  %v91 = vld [vmem:[%s0 + $0x228] sm:$0xff]
  %v92 = vld [vmem:[%s0 + $0x230] sm:$0xff]
  %v93 = vld [vmem:[%s0 + $0x238] sm:$0xff]
  %v98 = vunpack.c.l.b16 %v18
  %v99 = vunpack.c.h.b16 %v18
  %v100 = vunpack.c.l.b16 %v19
  %v101 = vunpack.c.l.b16 %v20
  %v102 = vunpack.c.h.b16 %v20
  %v103 = vunpack.c.l.b16 %v21
  %v104 = vpack.c.b16 %v101, %v98
  %v105 = vpack.c.b16 %v102, %v99
  %v106 = vpack.c.b16 %v103, %v100
  %v181 = vunpack.c.l.b16 %v22
  %v182 = vunpack.c.h.b16 %v22
  %v183 = vunpack.c.l.b16 %v23
  %v184 = vunpack.c.h.b16 %v23
  %v185 = vunpack.c.l.b16 %v24
  %v186 = vunpack.c.h.b16 %v24
  %v187 = vunpack.c.l.b16 %v25
  %v188 = vunpack.c.h.b16 %v25
  %v189 = vunpack.c.l.b16 %v26
  %v190 = vunpack.c.h.b16 %v26
  %v191 = vunpack.c.l.b16 %v27
  %v192 = vunpack.c.h.b16 %v27
  %v193 = vunpack.c.l.b16 %v28
  %v194 = vunpack.c.h.b16 %v28
  %v195 = vunpack.c.l.b16 %v29
  %v196 = vunpack.c.h.b16 %v29
  %v197 = vunpack.c.l.b16 %v30
  %v198 = vunpack.c.h.b16 %v30
  %v199 = vunpack.c.l.b16 %v31
  %v200 = vunpack.c.h.b16 %v31
  %v201 = vunpack.c.l.b16 %v32
  %v202 = vunpack.c.h.b16 %v32
  %v203 = vunpack.c.l.b16 %v33
  %v204 = vunpack.c.h.b16 %v33
  %v205 = vunpack.c.l.b16 %v34
  %v206 = vunpack.c.h.b16 %v34
  %v207 = vunpack.c.l.b16 %v35
  %v208 = vunpack.c.h.b16 %v35
  %v209 = vunpack.c.l.b16 %v36
  %v210 = vunpack.c.h.b16 %v36
  %v211 = vunpack.c.l.b16 %v37
  %v212 = vunpack.c.h.b16 %v37
  %v213 = vunpack.c.l.b16 %v38
  %v214 = vunpack.c.h.b16 %v38
  %v215 = vunpack.c.l.b16 %v39
  %v216 = vunpack.c.h.b16 %v39
  %v217 = vunpack.c.l.b16 %v40
  %v218 = vunpack.c.h.b16 %v40
  %v219 = vunpack.c.l.b16 %v41
  %v220 = vunpack.c.h.b16 %v41
  %v221 = vunpack.c.l.b16 %v42
  %v222 = vunpack.c.h.b16 %v42
  %v223 = vunpack.c.l.b16 %v43
  %v224 = vunpack.c.h.b16 %v43
  %v225 = vunpack.c.l.b16 %v44
  %v226 = vunpack.c.h.b16 %v44
  %v227 = vunpack.c.l.b16 %v45
  %v228 = vunpack.c.h.b16 %v45
  %v229 = vunpack.c.l.b16 %v46
  %v230 = vunpack.c.h.b16 %v46
  %v231 = vunpack.c.l.b16 %v47
  %v232 = vunpack.c.h.b16 %v47
  %v233 = vunpack.c.l.b16 %v48
  %v234 = vunpack.c.h.b16 %v48
  %v235 = vunpack.c.l.b16 %v49
  %v236 = vunpack.c.h.b16 %v49
  %v237 = vunpack.c.l.b16 %v50
  %v238 = vunpack.c.h.b16 %v50
  %v239 = vunpack.c.l.b16 %v51
  %v240 = vunpack.c.h.b16 %v51
  %v241 = vunpack.c.l.b16 %v52
  %v242 = vunpack.c.h.b16 %v52
  %v243 = vunpack.c.l.b16 %v53
  %v244 = vunpack.c.h.b16 %v53
  %v245 = vunpack.c.l.b16 %v54
  %v246 = vunpack.c.h.b16 %v54
  %v247 = vunpack.c.l.b16 %v55
  %v248 = vunpack.c.h.b16 %v55
  %v249 = vunpack.c.l.b16 %v56
  %v250 = vunpack.c.h.b16 %v56
  %v251 = vunpack.c.l.b16 %v57
  %v252 = vunpack.c.h.b16 %v57
  %v253 = vunpack.c.l.b16 %v58
  %v254 = vunpack.c.h.b16 %v58
  %v255 = vunpack.c.l.b16 %v59
  %v256 = vunpack.c.h.b16 %v59
  %v257 = vunpack.c.l.b16 %v60
  %v258 = vunpack.c.h.b16 %v60
  %v259 = vunpack.c.l.b16 %v61
  %v260 = vunpack.c.h.b16 %v61
  %v261 = vunpack.c.l.b16 %v62
  %v262 = vunpack.c.h.b16 %v62
  %v263 = vunpack.c.l.b16 %v63
  %v264 = vunpack.c.h.b16 %v63
  %v265 = vunpack.c.l.b16 %v64
  %v266 = vunpack.c.h.b16 %v64
  %v267 = vunpack.c.l.b16 %v65
  %v268 = vunpack.c.h.b16 %v65
  %v269 = vunpack.c.l.b16 %v66
  %v270 = vunpack.c.h.b16 %v66
  %v271 = vunpack.c.l.b16 %v67
  %v272 = vunpack.c.h.b16 %v67
  %v273 = vunpack.c.l.b16 %v68
  %v274 = vunpack.c.h.b16 %v68
  %v275 = vunpack.c.l.b16 %v69
  %v276 = vunpack.c.h.b16 %v69
  %v277 = vunpack.c.l.b16 %v70
  %v278 = vunpack.c.h.b16 %v70
  %v279 = vunpack.c.l.b16 %v71
  %v280 = vunpack.c.h.b16 %v71
  %v281 = vunpack.c.l.b16 %v72
  %v282 = vunpack.c.h.b16 %v72
  %v283 = vunpack.c.l.b16 %v73
  %v284 = vunpack.c.h.b16 %v73
  %v285 = vunpack.c.l.b16 %v74
  %v286 = vunpack.c.h.b16 %v74
  %v287 = vunpack.c.l.b16 %v75
  %v288 = vunpack.c.h.b16 %v75
  %v289 = vunpack.c.l.b16 %v76
  %v290 = vunpack.c.h.b16 %v76
  %v291 = vunpack.c.l.b16 %v77
  %v292 = vunpack.c.h.b16 %v77
  %v293 = vunpack.c.l.b16 %v78
  %v294 = vunpack.c.h.b16 %v78
  %v295 = vunpack.c.l.b16 %v79
  %v296 = vunpack.c.h.b16 %v79
  %v297 = vunpack.c.l.b16 %v80
  %v298 = vunpack.c.h.b16 %v80
  %v299 = vunpack.c.l.b16 %v81
  %v300 = vunpack.c.h.b16 %v81
  %v301 = vunpack.c.l.b16 %v82
  %v302 = vunpack.c.h.b16 %v82
  %v303 = vunpack.c.l.b16 %v83
  %v304 = vunpack.c.h.b16 %v83
  %v305 = vunpack.c.l.b16 %v84
  %v306 = vunpack.c.h.b16 %v84
  %v307 = vunpack.c.l.b16 %v85
  %v308 = vunpack.c.h.b16 %v85
  %v309 = vunpack.c.l.b16 %v86
  %v310 = vunpack.c.h.b16 %v86
  %v311 = vunpack.c.l.b16 %v87
  %v312 = vunpack.c.h.b16 %v87
  %v313 = vunpack.c.l.b16 %v88
  %v314 = vunpack.c.h.b16 %v88
  %v315 = vunpack.c.l.b16 %v89
  %v316 = vunpack.c.h.b16 %v89
  %v317 = vunpack.c.l.b16 %v90
  %v318 = vunpack.c.h.b16 %v90
  %v319 = vunpack.c.l.b16 %v91
  %v320 = vunpack.c.h.b16 %v91
  %v321 = vunpack.c.l.b16 %v92
  %v322 = vunpack.c.h.b16 %v92
  %v323 = vunpack.c.l.b16 %v93
  %v324 = vunpack.c.h.b16 %v93
  %v325 = vpack.c.b16 %v185, %v181
  %v326 = vpack.c.b16 %v186, %v182
  %v327 = vpack.c.b16 %v187, %v183
  %v328 = vpack.c.b16 %v188, %v184
  %v329 = vpack.c.b16 %v193, %v189
  %v330 = vpack.c.b16 %v194, %v190
  %v331 = vpack.c.b16 %v195, %v191
  %v332 = vpack.c.b16 %v196, %v192
  %v333 = vpack.c.b16 %v201, %v197
  %v334 = vpack.c.b16 %v202, %v198
  %v335 = vpack.c.b16 %v203, %v199
  %v336 = vpack.c.b16 %v204, %v200
  %v337 = vpack.c.b16 %v209, %v205
  %v338 = vpack.c.b16 %v210, %v206
  %v339 = vpack.c.b16 %v211, %v207
  %v340 = vpack.c.b16 %v212, %v208
  %v341 = vpack.c.b16 %v217, %v213
  %v342 = vpack.c.b16 %v218, %v214
  %v343 = vpack.c.b16 %v219, %v215
  %v344 = vpack.c.b16 %v220, %v216
  %v345 = vpack.c.b16 %v225, %v221
  %v346 = vpack.c.b16 %v226, %v222
  %v347 = vpack.c.b16 %v227, %v223
  %v348 = vpack.c.b16 %v228, %v224
  %v349 = vpack.c.b16 %v233, %v229
  %v350 = vpack.c.b16 %v234, %v230
  %v351 = vpack.c.b16 %v235, %v231
  %v352 = vpack.c.b16 %v236, %v232
  %v353 = vpack.c.b16 %v241, %v237
  %v354 = vpack.c.b16 %v242, %v238
  %v355 = vpack.c.b16 %v243, %v239
  %v356 = vpack.c.b16 %v244, %v240
  %v357 = vpack.c.b16 %v249, %v245
  %v358 = vpack.c.b16 %v250, %v246
  %v359 = vpack.c.b16 %v251, %v247
  %v360 = vpack.c.b16 %v252, %v248
  %v361 = vpack.c.b16 %v257, %v253
  %v362 = vpack.c.b16 %v258, %v254
  %v363 = vpack.c.b16 %v259, %v255
  %v364 = vpack.c.b16 %v260, %v256
  %v365 = vpack.c.b16 %v265, %v261
  %v366 = vpack.c.b16 %v266, %v262
  %v367 = vpack.c.b16 %v267, %v263
  %v368 = vpack.c.b16 %v268, %v264
  %v369 = vpack.c.b16 %v273, %v269
  %v370 = vpack.c.b16 %v274, %v270
  %v371 = vpack.c.b16 %v275, %v271
  %v372 = vpack.c.b16 %v276, %v272
  %v373 = vpack.c.b16 %v281, %v277
  %v374 = vpack.c.b16 %v282, %v278
  %v375 = vpack.c.b16 %v283, %v279
  %v376 = vpack.c.b16 %v284, %v280
  %v377 = vpack.c.b16 %v289, %v285
  %v378 = vpack.c.b16 %v290, %v286
  %v379 = vpack.c.b16 %v291, %v287
  %v380 = vpack.c.b16 %v292, %v288
  %v381 = vpack.c.b16 %v297, %v293
  %v382 = vpack.c.b16 %v298, %v294
  %v383 = vpack.c.b16 %v299, %v295
  %v384 = vpack.c.b16 %v300, %v296
  %v385 = vpack.c.b16 %v305, %v301
  %v386 = vpack.c.b16 %v306, %v302
  %v387 = vpack.c.b16 %v307, %v303
  %v388 = vpack.c.b16 %v308, %v304
  %v389 = vpack.c.b16 %v313, %v309
  %v390 = vpack.c.b16 %v314, %v310
  %v391 = vpack.c.b16 %v315, %v311
  %v392 = vpack.c.b16 %v316, %v312
  %v393 = vpack.c.b16 %v321, %v317
  %v394 = vpack.c.b16 %v322, %v318
  %v395 = vpack.c.b16 %v323, %v319
  %v396 = vpack.c.b16 %v324, %v320
  %vm469 = vcmask 261120
  %v471 = vsel %vm469, %v106, 0
  %473 = vmatprep.subr.bf16.mxu0 %v354
  %474 = vmatpush1.bf16.msra.mxu0 %v353
  %475 = vmatprep.subr.bf16.mxu0 %v350
  %476 = vmatpush1.bf16.msra.mxu0 %v349
  %477 = vmatprep.subr.bf16.mxu0 %v346
  %478 = vmatpush1.bf16.msra.mxu0 %v345
  %479 = vmatprep.subr.bf16.mxu0 %v342
  %480 = vmatpush1.bf16.msra.mxu0 %v341
  %481 = vmatprep.subr.bf16.mxu0 %v338
  %482 = vmatpush1.bf16.msra.mxu0 %v337
  %483 = vmatprep.subr.bf16.mxu0 %v334
  %484 = vmatpush1.bf16.msra.mxu0 %v333
  %485 = vmatprep.subr.bf16.mxu0 %v330
  %486 = vmatpush1.bf16.msra.mxu0 %v329
  %487 = vmatprep.subr.bf16.mxu0 %v326
  %488 = vmatpush1.bf16.msra.mxu0 %v325
  %489 = vmatprep.subr.bf16.mxu0 %v386
  %490 = vmatpush2.bf16.msra.mxu0 %v385
  %491 = vmatprep.subr.bf16.mxu0 %v382
  %492 = vmatpush2.bf16.msra.mxu0 %v381
  %493 = vmatprep.subr.bf16.mxu0 %v378
  %494 = vmatpush2.bf16.msra.mxu0 %v377
  %495 = vmatprep.subr.bf16.mxu0 %v374
  %496 = vmatpush2.bf16.msra.mxu0 %v373
  %497 = vmatprep.subr.bf16.mxu0 %v370
  %498 = vmatpush2.bf16.msra.mxu0 %v369
  %499 = vmatprep.subr.bf16.mxu0 %v366
  %500 = vmatpush2.bf16.msra.mxu0 %v365
  %501 = vmatprep.subr.bf16.mxu0 %v362
  %502 = vmatpush2.bf16.msra.mxu0 %v361
  %503 = vmatprep.subr.bf16.mxu0 %v358
  %504 = vmatpush2.bf16.msra.mxu0 %v357
  %505 = vmatprep.mubr.bf16.mxu0 %v105
  %506 = vmatmul.mubr.bf16.gmra.mxu0 %v104
  %v507 = vpop.f32.mrf.mxu0
  %v508 = vadd.f32 0.0, %v507
  %v509 = vpop.f32.mrf.mxu0
  %v510 = vadd.f32 0.0, %v509
  %v511 = vpop.f32.mrf.mxu0
  %v512 = vadd.f32 0.0, %v511
  %v513 = vpop.f32.mrf.mxu0
  %v514 = vadd.f32 0.0, %v513
  %515 = vdwg.mxu0
  %516 = vmatprep.subr.bf16.mxu0 0
  %517 = vmatpush1.bf16.msra.mxu0 0
  %518 = vmatprep.subr.bf16.mxu0 0
  %519 = vmatpush1.bf16.msra.mxu0 0
  %520 = vmatprep.subr.bf16.mxu0 0
  %521 = vmatpush1.bf16.msra.mxu0 0
  %522 = vmatprep.subr.bf16.mxu0 0
  %523 = vmatpush1.bf16.msra.mxu0 0
  %524 = vmatprep.subr.bf16.mxu0 0
  %525 = vmatpush1.bf16.msra.mxu0 0
  %526 = vmatprep.subr.bf16.mxu0 0
  %527 = vmatpush1.bf16.msra.mxu0 0
  %528 = vmatprep.subr.bf16.mxu0 %v394
  %529 = vmatpush1.bf16.msra.mxu0 %v393
  %530 = vmatprep.subr.bf16.mxu0 %v390
  %531 = vmatpush1.bf16.msra.mxu0 %v389
  %532 = vmatprep.subr.bf16.mxu0 0
  %533 = vmatpush2.bf16.msra.mxu0 0
  %534 = vmatprep.subr.bf16.mxu0 0
  %535 = vmatpush2.bf16.msra.mxu0 0
  %536 = vmatprep.subr.bf16.mxu0 0
  %537 = vmatpush2.bf16.msra.mxu0 0
  %538 = vmatprep.subr.bf16.mxu0 0
  %539 = vmatpush2.bf16.msra.mxu0 0
  %540 = vmatprep.subr.bf16.mxu0 0
  %541 = vmatpush2.bf16.msra.mxu0 0
  %542 = vmatprep.subr.bf16.mxu0 0
  %543 = vmatpush2.bf16.msra.mxu0 0
  %544 = vmatprep.subr.bf16.mxu0 0
  %545 = vmatpush2.bf16.msra.mxu0 0
  %546 = vmatprep.subr.bf16.mxu0 0
  %547 = vmatpush2.bf16.msra.mxu0 0
  %548 = vmatprep.mubr.bf16.mxu0 0
  %549 = vmatmul.mubr.bf16.gmra.mxu0 %v471
  %v550 = vpop.f32.mrf.mxu0
  %v551 = vadd.f32 %v508, %v550
  %v552 = vpop.f32.mrf.mxu0
  %v553 = vadd.f32 %v510, %v552
  %v554 = vpop.f32.mrf.mxu0
  %v555 = vadd.f32 %v512, %v554
  %v556 = vpop.f32.mrf.mxu0
  %v557 = vadd.f32 %v514, %v556
  %558 = vdwg.mxu0
  %559 = vmatprep.subr.bf16.mxu0 %v356
  %560 = vmatpush1.bf16.msra.mxu0 %v355
  %561 = vmatprep.subr.bf16.mxu0 %v352
  %562 = vmatpush1.bf16.msra.mxu0 %v351
  %563 = vmatprep.subr.bf16.mxu0 %v348
  %564 = vmatpush1.bf16.msra.mxu0 %v347
  %565 = vmatprep.subr.bf16.mxu0 %v344
  %566 = vmatpush1.bf16.msra.mxu0 %v343
  %567 = vmatprep.subr.bf16.mxu0 %v340
  %568 = vmatpush1.bf16.msra.mxu0 %v339
  %569 = vmatprep.subr.bf16.mxu0 %v336
  %570 = vmatpush1.bf16.msra.mxu0 %v335
  %571 = vmatprep.subr.bf16.mxu0 %v332
  %572 = vmatpush1.bf16.msra.mxu0 %v331
  %573 = vmatprep.subr.bf16.mxu0 %v328
  %574 = vmatpush1.bf16.msra.mxu0 %v327
  %575 = vmatprep.subr.bf16.mxu0 %v388
  %576 = vmatpush2.bf16.msra.mxu0 %v387
  %577 = vmatprep.subr.bf16.mxu0 %v384
  %578 = vmatpush2.bf16.msra.mxu0 %v383
  %579 = vmatprep.subr.bf16.mxu0 %v380
  %580 = vmatpush2.bf16.msra.mxu0 %v379
  %581 = vmatprep.subr.bf16.mxu0 %v376
  %582 = vmatpush2.bf16.msra.mxu0 %v375
  %583 = vmatprep.subr.bf16.mxu0 %v372
  %584 = vmatpush2.bf16.msra.mxu0 %v371
  %585 = vmatprep.subr.bf16.mxu0 %v368
  %586 = vmatpush2.bf16.msra.mxu0 %v367
  %587 = vmatprep.subr.bf16.mxu0 %v364
  %588 = vmatpush2.bf16.msra.mxu0 %v363
  %589 = vmatprep.subr.bf16.mxu0 %v360
  %590 = vmatpush2.bf16.msra.mxu0 %v359
  %591 = vmatprep.mubr.bf16.mxu0 %v105
  %592 = vmatmul.mubr.bf16.gmra.mxu0 %v104
  %v593 = vpop.f32.mrf.mxu0
  %v594 = vadd.f32 0.0, %v593
  %v595 = vpop.f32.mrf.mxu0
  %v596 = vadd.f32 0.0, %v595
  %v597 = vpop.f32.mrf.mxu0
  %v598 = vadd.f32 0.0, %v597
  %v599 = vpop.f32.mrf.mxu0
  %v600 = vadd.f32 0.0, %v599
  %601 = vdwg.mxu0
  %602 = vmatprep.subr.bf16.mxu0 0
  %603 = vmatpush1.bf16.msra.mxu0 0
  %604 = vmatprep.subr.bf16.mxu0 0
  %605 = vmatpush1.bf16.msra.mxu0 0
  %606 = vmatprep.subr.bf16.mxu0 0
  %607 = vmatpush1.bf16.msra.mxu0 0
  %608 = vmatprep.subr.bf16.mxu0 0
  %609 = vmatpush1.bf16.msra.mxu0 0
  %610 = vmatprep.subr.bf16.mxu0 0
  %611 = vmatpush1.bf16.msra.mxu0 0
  %612 = vmatprep.subr.bf16.mxu0 0
  %613 = vmatpush1.bf16.msra.mxu0 0
  %614 = vmatprep.subr.bf16.mxu0 %v396
  %615 = vmatpush1.bf16.msra.mxu0 %v395
  %616 = vmatprep.subr.bf16.mxu0 %v392
  %617 = vmatpush1.bf16.msra.mxu0 %v391
  %618 = vmatprep.subr.bf16.mxu0 0
  %619 = vmatpush2.bf16.msra.mxu0 0
  %620 = vmatprep.subr.bf16.mxu0 0
  %621 = vmatpush2.bf16.msra.mxu0 0
  %622 = vmatprep.subr.bf16.mxu0 0
  %623 = vmatpush2.bf16.msra.mxu0 0
  %624 = vmatprep.subr.bf16.mxu0 0
  %625 = vmatpush2.bf16.msra.mxu0 0
  %626 = vmatprep.subr.bf16.mxu0 0
  %627 = vmatpush2.bf16.msra.mxu0 0
  %628 = vmatprep.subr.bf16.mxu0 0
  %629 = vmatpush2.bf16.msra.mxu0 0
  %630 = vmatprep.subr.bf16.mxu0 0
  %631 = vmatpush2.bf16.msra.mxu0 0
  %632 = vmatprep.subr.bf16.mxu0 0
  %633 = vmatpush2.bf16.msra.mxu0 0
  %634 = vmatprep.mubr.bf16.mxu0 0
  %635 = vmatmul.mubr.bf16.gmra.mxu0 %v471
  %v636 = vpop.f32.mrf.mxu0
  %v637 = vadd.f32 %v594, %v636
  %v638 = vpop.f32.mrf.mxu0
  %v639 = vadd.f32 %v596, %v638
  %v640 = vpop.f32.mrf.mxu0
  %v641 = vadd.f32 %v598, %v640
  %v642 = vpop.f32.mrf.mxu0
  %v643 = vadd.f32 %v600, %v642
  %644 = vdwg.mxu0
  %v645 = vadd.f32 %v551, %v553
  %v646 = vadd.f32 %v645, %v637
  %v647 = vadd.f32 %v646, %v639
  %648 = vadd.xlane.f32.xlu0 %v647
  %v649 = vpop.xlane.xlu0 %648
  %v650 = vadd.f32 %v555, %v557
  %v651 = vadd.f32 %v650, %v641
  %v652 = vadd.f32 %v651, %v643
  %653 = vadd.xlane.f32.xlu0 %v652
  %v654 = vpop.xlane.xlu0 %653
  %v655 = vmul.f32 %v649, 0.001953125
  %v656 = vmul.f32 %v654, 0.001953125
  %v657 = vmul.f32 %v551, %v551
  %v658 = vmul.f32 %v553, %v553
  %v659 = vmul.f32 %v637, %v637
  %v660 = vmul.f32 %v639, %v639
  %v661 = vmul.f32 %v555, %v555
  %v662 = vmul.f32 %v557, %v557
  %v663 = vmul.f32 %v641, %v641
  %v664 = vmul.f32 %v643, %v643
  %v665 = vadd.f32 %v657, %v658
  %v666 = vadd.f32 %v665, %v659
  %v667 = vadd.f32 %v666, %v660
  %668 = vadd.xlane.f32.xlu0 %v667
  %v669 = vpop.xlane.xlu0 %668
  %v670 = vadd.f32 %v661, %v662
  %v671 = vadd.f32 %v670, %v663
  %v672 = vadd.f32 %v671, %v664
  %673 = vadd.xlane.f32.xlu0 %v672
  %v674 = vpop.xlane.xlu0 %673
  %v675 = vmul.f32 %v669, 0.001953125
  %v676 = vmul.f32 %v674, 0.001953125
  %v677 = vmul.f32 %v655, %v655
  %v678 = vmul.f32 %v656, %v656
  %v679 = vsub.f32 %v675, %v677
  %v680 = vsub.f32 %v676, %v678
  %v681 = vmax.f32 %v679, 0.0
  %v682 = vmax.f32 %v680, 0.0
  %v683 = vadd.f32 %v681, 1e-05
  %v684 = vadd.f32 %v682, 1e-05
  %v685 = vrsqrt.pop %v683
  %v686 = vrsqrt.pop %v684
  %v687 = vld [vmem:[%s2] sm:$0xff]
  %v688 = vld [vmem:[%s2 + $0x8] sm:$0xff]
  %v689 = vmul.f32 %v685, %v687
  %v690 = vmul.f32 %v686, %v688
  %v691 = vsub.f32 %v551, %v655
  %v692 = vsub.f32 %v553, %v655
  %v693 = vsub.f32 %v637, %v655
  %v694 = vsub.f32 %v639, %v655
  %v695 = vsub.f32 %v555, %v656
  %v696 = vsub.f32 %v557, %v656
  %v697 = vsub.f32 %v641, %v656
  %v698 = vsub.f32 %v643, %v656
  %700 = vset.pattern.permute.xlu0 0
  %701 = vperm.xlu0 %700, %v689
  %v702 = vpop.permute.xlu0 %701
  %705 = vset.pattern.permute.xlu0 0
  %706 = vperm.xlu0 %705, %v690
  %v707 = vpop.permute.xlu0 %706
  %v709 = vmul.f32 %v691, %v702
  %v710 = vmul.f32 %v692, %v702
  %v711 = vmul.f32 %v693, %v702
  %v712 = vmul.f32 %v694, %v702
  %v713 = vmul.f32 %v695, %v707
  %v714 = vmul.f32 %v696, %v707
  %v715 = vmul.f32 %v697, %v707
  %v716 = vmul.f32 %v698, %v707
  %v717 = vld [vmem:[%s3] sm:$0xff]
  %v718 = vld [vmem:[%s3 + $0x8] sm:$0xff]
  %720 = vset.pattern.permute.xlu0 0
  %721 = vperm.xlu0 %720, %v717
  %v722 = vpop.permute.xlu0 %721
  %725 = vset.pattern.permute.xlu0 0
  %726 = vperm.xlu0 %725, %v718
  %v727 = vpop.permute.xlu0 %726
  %v729 = vadd.f32 %v709, %v722
  %v730 = vadd.f32 %v710, %v722
  %v731 = vadd.f32 %v711, %v722
  %v732 = vadd.f32 %v712, %v722
  %v733 = vadd.f32 %v713, %v727
  %v734 = vadd.f32 %v714, %v727
  %v735 = vadd.f32 %v715, %v727
  %v736 = vadd.f32 %v716, %v727
  %v737 = vmax.f32 %v729, 0.0
  %v738 = vmax.f32 %v730, 0.0
  %v739 = vmax.f32 %v731, 0.0
  %v740 = vmax.f32 %v732, 0.0
  %v741 = vmax.f32 %v733, 0.0
  %v742 = vmax.f32 %v734, 0.0
  %v743 = vmax.f32 %v735, 0.0
  %v744 = vmax.f32 %v736, 0.0
  %v745 = vpack.c.bf16 %v741, %v737
  %v746 = vpack.c.bf16 %v742, %v738
  %v747 = vpack.c.bf16 %v743, %v739
  %v748 = vpack.c.bf16 %v744, %v740
  %v753 = vunpack.c.l.b16 %v745
  %v754 = vunpack.c.l.b16 %v746
  %v755 = vunpack.c.l.b16 %v747
  %v756 = vunpack.c.l.b16 %v748
  %v757 = vunpack.c.h.b16 %v745
  %v758 = vunpack.c.h.b16 %v746
  %v759 = vunpack.c.h.b16 %v747
  %v760 = vunpack.c.h.b16 %v748
  %v761 = vpack.c.b16 %v754, %v753
  %v762 = vpack.c.b16 %v756, %v755
  %v763 = vpack.c.b16 %v758, %v757
  %v764 = vpack.c.b16 %v760, %v759
  %769 = vst [vmem:[%s4] sm:$0xff] %v761
  %770 = vst [vmem:[%s4 + $0x8] sm:$0xff] %v762
  %771 = vst [vmem:[%s4 + $0x10] sm:$0xff] %v763
  %772 = vst [vmem:[%s4 + $0x18] sm:$0xff] %v764
  // Predicated region
  $region18: #{cvae_forward.12} parent=0 // pred_check
    _
  $region19: #{cvae_forward.12} parent=0 // pred_check_branch
    %774 = sbr.rel (0) target = $region21
  $region20: #{cvae_forward.12} parent=0 // pred_region
    _
  $region21: #{cvae_forward.12} parent=0 // pred_fallthru
    _
  // Predicated region
  $region22: #{cvae_forward.12} parent=0 // pred_check
    _
  $region23: #{cvae_forward.12} parent=0 // pred_check_branch
    %776 = sbr.rel (0) target = $region25
  $region24: #{cvae_forward.12} parent=0 // pred_region
    _
  $region25: #{cvae_forward.12} parent=0 // pred_fallthru
    _

// kernel: cvae_forward.13
$region0: #{cvae_forward.13}
  #allocation0 [shape = 'u32[]', space=smem, size = 0x4, offset = 0x4, fixed_abs, tag = 'smem constant byte address 0x4 - core index']
  #allocation1 [shape = 'u32[144,128]{1,0:T(1,128)}', space=vmem, size = 0x12000, scoped, tag = 'internal scratch']
  #allocation2 [shape = 'f32[1,1]{1,0:T(1,128)S(1)}', space=vmem, size = 0x200, scoped, tag = 'scoped memory for cvae_forward.13']
  %s0 = inlined_call_operand.vmem [shape: bf16[144,1568], index: 0, kind: input, shape index: {}]
  %s1 = inlined_call_operand.vmem [shape: bf16[16,144], index: 1, kind: input, shape index: {}]
  %s2 = inlined_call_operand.vmem [shape: f32[16,1], index: 2, kind: input, shape index: {}]
  %s3 = inlined_call_operand.vmem [shape: f32[16,1], index: 3, kind: input, shape index: {}]
  %s4 = inlined_call_operand.vmem [shape: f32[16,1], index: 4, kind: input, shape index: {}]
  %s5 = inlined_call_operand.<no memory space> [shape: f32[1,1], index: 5, kind: input, shape index: {}]
  %s6 = inlined_call_operand.vmem [shape: f32[1,1568], index: 6, kind: output, shape index: {}]
  %s7 = sld [smem:[#allocation0]]
  $region34: #{cvae_forward.13} parent=0
    _
  %s9 = ssub.s32 1, %s7
  %s10 = scalar_select 0, %s9, %s7
  %v11 = vstv %s5
  %12 = vst [vmem:[#allocation2] sm:$0x1] %v11
  // Predicated region
  $region2: #{cvae_forward.13} parent=0 // pred_check
    _
  $region3: #{cvae_forward.13} parent=0 // pred_check_branch
    %14 = sbr.rel (0) target = $region5
  $region4: #{cvae_forward.13} parent=0 // pred_region
    _
  $region5: #{cvae_forward.13} parent=0 // pred_fallthru
    _
  // Predicated region
  $region6: #{cvae_forward.13} parent=0 // pred_check
    _
  $region7: #{cvae_forward.13} parent=0 // pred_check_branch
    %16 = sbr.rel (0) target = $region9
  $region8: #{cvae_forward.13} parent=0 // pred_region
    _
  $region9: #{cvae_forward.13} parent=0 // pred_fallthru
    _
  // Predicated region
  $region10: #{cvae_forward.13} parent=0 // pred_check
    _
  $region11: #{cvae_forward.13} parent=0 // pred_check_branch
    %18 = sbr.rel (0) target = $region13
  $region12: #{cvae_forward.13} parent=0 // pred_region
    _
  $region13: #{cvae_forward.13} parent=0 // pred_fallthru
    _
  // Predicated region
  $region14: #{cvae_forward.13} parent=0 // pred_check
    _
  $region15: #{cvae_forward.13} parent=0 // pred_check_branch
    %20 = sbr.rel (0) target = $region17
  $region16: #{cvae_forward.13} parent=0 // pred_region
    _
  $region17: #{cvae_forward.13} parent=0 // pred_fallthru
    _
  // Predicated region
  $region18: #{cvae_forward.13} parent=0 // pred_check
    _
  $region19: #{cvae_forward.13} parent=0 // pred_check_branch
    %22 = sbr.rel (0) target = $region21
  $region20: #{cvae_forward.13} parent=0 // pred_region
    _
  $region21: #{cvae_forward.13} parent=0 // pred_fallthru
    _
  // Predicated region
  $region22: #{cvae_forward.13} parent=0 // pred_check
    _
  $region23: #{cvae_forward.13} parent=0 // pred_check_branch
    %24 = sbr.rel (0) target = $region25
  $region24: #{cvae_forward.13} parent=0 // pred_region
    _
  $region25: #{cvae_forward.13} parent=0 // pred_fallthru
    _
  %v26 = vld [vmem:[%s1] sm:$0xff]
  %v27 = vld [vmem:[%s1 + $0x8] sm:$0xff]
  %v28 = vld [vmem:[%s0] sm:$0xff]
  %v29 = vld [vmem:[%s0 + $0x8] sm:$0xff]
  %v30 = vld [vmem:[%s0 + $0x10] sm:$0xff]
  %v31 = vld [vmem:[%s0 + $0x18] sm:$0xff]
  %v32 = vld [vmem:[%s0 + $0x20] sm:$0xff]
  %v33 = vld [vmem:[%s0 + $0x28] sm:$0xff]
  %v34 = vld [vmem:[%s0 + $0x30] sm:$0xf]
  %v35 = vld [vmem:[%s0 + $0x34] sm:$0xff]
  %v36 = vld [vmem:[%s0 + $0x3c] sm:$0xff]
  %v37 = vld [vmem:[%s0 + $0x44] sm:$0xff]
  %v38 = vld [vmem:[%s0 + $0x4c] sm:$0xff]
  %v39 = vld [vmem:[%s0 + $0x54] sm:$0xff]
  %v40 = vld [vmem:[%s0 + $0x5c] sm:$0xff]
  %v41 = vld [vmem:[%s0 + $0x64] sm:$0xf]
  %v42 = vld [vmem:[%s0 + $0x68] sm:$0xff]
  %v43 = vld [vmem:[%s0 + $0x70] sm:$0xff]
  %v44 = vld [vmem:[%s0 + $0x78] sm:$0xff]
  %v45 = vld [vmem:[%s0 + $0x80] sm:$0xff]
  %v46 = vld [vmem:[%s0 + $0x88] sm:$0xff]
  %v47 = vld [vmem:[%s0 + $0x90] sm:$0xff]
  %v48 = vld [vmem:[%s0 + $0x98] sm:$0xf]
  %v49 = vld [vmem:[%s0 + $0x9c] sm:$0xff]
  %v50 = vld [vmem:[%s0 + $0xa4] sm:$0xff]
  %v51 = vld [vmem:[%s0 + $0xac] sm:$0xff]
  %v52 = vld [vmem:[%s0 + $0xb4] sm:$0xff]
  %v53 = vld [vmem:[%s0 + $0xbc] sm:$0xff]
  %v54 = vld [vmem:[%s0 + $0xc4] sm:$0xff]
  %v55 = vld [vmem:[%s0 + $0xcc] sm:$0xf]
  %v56 = vld [vmem:[%s0 + $0xd0] sm:$0xff]
  %v57 = vld [vmem:[%s0 + $0xd8] sm:$0xff]
  %v58 = vld [vmem:[%s0 + $0xe0] sm:$0xff]
  %v59 = vld [vmem:[%s0 + $0xe8] sm:$0xff]
  %v60 = vld [vmem:[%s0 + $0xf0] sm:$0xff]
  %v61 = vld [vmem:[%s0 + $0xf8] sm:$0xff]
  %v62 = vld [vmem:[%s0 + $0x100] sm:$0xf]
  %v63 = vld [vmem:[%s0 + $0x104] sm:$0xff]
  %v64 = vld [vmem:[%s0 + $0x10c] sm:$0xff]
  %v65 = vld [vmem:[%s0 + $0x114] sm:$0xff]
  %v66 = vld [vmem:[%s0 + $0x11c] sm:$0xff]
  %v67 = vld [vmem:[%s0 + $0x124] sm:$0xff]
  %v68 = vld [vmem:[%s0 + $0x12c] sm:$0xff]
  %v69 = vld [vmem:[%s0 + $0x134] sm:$0xf]
  %v70 = vld [vmem:[%s0 + $0x138] sm:$0xff]
  %v71 = vld [vmem:[%s0 + $0x140] sm:$0xff]
  %v72 = vld [vmem:[%s0 + $0x148] sm:$0xff]
  %v73 = vld [vmem:[%s0 + $0x150] sm:$0xff]
  %v74 = vld [vmem:[%s0 + $0x158] sm:$0xff]
  %v75 = vld [vmem:[%s0 + $0x160] sm:$0xff]
  %v76 = vld [vmem:[%s0 + $0x168] sm:$0xf]
  %v77 = vld [vmem:[%s0 + $0x16c] sm:$0xff]
  %v78 = vld [vmem:[%s0 + $0x174] sm:$0xff]
  %v79 = vld [vmem:[%s0 + $0x17c] sm:$0xff]
  %v80 = vld [vmem:[%s0 + $0x184] sm:$0xff]
  %v81 = vld [vmem:[%s0 + $0x18c] sm:$0xff]
  %v82 = vld [vmem:[%s0 + $0x194] sm:$0xff]
  %v83 = vld [vmem:[%s0 + $0x19c] sm:$0xf]
  %v84 = vld [vmem:[%s0 + $0x1a0] sm:$0xff]
  %v85 = vld [vmem:[%s0 + $0x1a8] sm:$0xff]
  %v86 = vld [vmem:[%s0 + $0x1b0] sm:$0xff]
  %v87 = vld [vmem:[%s0 + $0x1b8] sm:$0xff]
  %v88 = vld [vmem:[%s0 + $0x1c0] sm:$0xff]
  %v89 = vld [vmem:[%s0 + $0x1c8] sm:$0xff]
  %v90 = vld [vmem:[%s0 + $0x1d0] sm:$0xf]
  %v91 = vld [vmem:[%s0 + $0x1d4] sm:$0xff]
  %v92 = vld [vmem:[%s0 + $0x1dc] sm:$0xff]
  %v93 = vld [vmem:[%s0 + $0x1e4] sm:$0xff]
  %v94 = vld [vmem:[%s0 + $0x1ec] sm:$0xff]
  %v95 = vld [vmem:[%s0 + $0x1f4] sm:$0xff]
  %v96 = vld [vmem:[%s0 + $0x1fc] sm:$0xff]
  %v97 = vld [vmem:[%s0 + $0x204] sm:$0xf]
  %v98 = vld [vmem:[%s0 + $0x208] sm:$0xff]
  %v99 = vld [vmem:[%s0 + $0x210] sm:$0xff]
  %v100 = vld [vmem:[%s0 + $0x218] sm:$0xff]
  %v101 = vld [vmem:[%s0 + $0x220] sm:$0xff]
  %v102 = vld [vmem:[%s0 + $0x228] sm:$0xff]
  %v103 = vld [vmem:[%s0 + $0x230] sm:$0xff]
  %v104 = vld [vmem:[%s0 + $0x238] sm:$0xf]
  %v105 = vld [vmem:[%s0 + $0x23c] sm:$0xff]
  %v106 = vld [vmem:[%s0 + $0x244] sm:$0xff]
  %v107 = vld [vmem:[%s0 + $0x24c] sm:$0xff]
  %v108 = vld [vmem:[%s0 + $0x254] sm:$0xff]
  %v109 = vld [vmem:[%s0 + $0x25c] sm:$0xff]
  %v110 = vld [vmem:[%s0 + $0x264] sm:$0xff]
  %v111 = vld [vmem:[%s0 + $0x26c] sm:$0xf]
  %v112 = vld [vmem:[%s0 + $0x270] sm:$0xff]
  %v113 = vld [vmem:[%s0 + $0x278] sm:$0xff]
  %v114 = vld [vmem:[%s0 + $0x280] sm:$0xff]
  %v115 = vld [vmem:[%s0 + $0x288] sm:$0xff]
  %v116 = vld [vmem:[%s0 + $0x290] sm:$0xff]
  %v117 = vld [vmem:[%s0 + $0x298] sm:$0xff]
  %v118 = vld [vmem:[%s0 + $0x2a0] sm:$0xf]
  %v119 = vld [vmem:[%s0 + $0x2a4] sm:$0xff]
  %v120 = vld [vmem:[%s0 + $0x2ac] sm:$0xff]
  %v121 = vld [vmem:[%s0 + $0x2b4] sm:$0xff]
  %v122 = vld [vmem:[%s0 + $0x2bc] sm:$0xff]
  %v123 = vld [vmem:[%s0 + $0x2c4] sm:$0xff]
  %v124 = vld [vmem:[%s0 + $0x2cc] sm:$0xff]
  %v125 = vld [vmem:[%s0 + $0x2d4] sm:$0xf]
  %v126 = vld [vmem:[%s0 + $0x2d8] sm:$0xff]
  %v127 = vld [vmem:[%s0 + $0x2e0] sm:$0xff]
  %v128 = vld [vmem:[%s0 + $0x2e8] sm:$0xff]
  %v129 = vld [vmem:[%s0 + $0x2f0] sm:$0xff]
  %v130 = vld [vmem:[%s0 + $0x2f8] sm:$0xff]
  %v131 = vld [vmem:[%s0 + $0x300] sm:$0xff]
  %v132 = vld [vmem:[%s0 + $0x308] sm:$0xf]
  %v133 = vld [vmem:[%s0 + $0x30c] sm:$0xff]
  %v134 = vld [vmem:[%s0 + $0x314] sm:$0xff]
  %v135 = vld [vmem:[%s0 + $0x31c] sm:$0xff]
  %v136 = vld [vmem:[%s0 + $0x324] sm:$0xff]
  %v137 = vld [vmem:[%s0 + $0x32c] sm:$0xff]
  %v138 = vld [vmem:[%s0 + $0x334] sm:$0xff]
  %v139 = vld [vmem:[%s0 + $0x33c] sm:$0xf]
  %v140 = vld [vmem:[%s0 + $0x340] sm:$0xff]
  %v141 = vld [vmem:[%s0 + $0x348] sm:$0xff]
  %v142 = vld [vmem:[%s0 + $0x350] sm:$0xff]
  %v143 = vld [vmem:[%s0 + $0x358] sm:$0xff]
  %v144 = vld [vmem:[%s0 + $0x360] sm:$0xff]
  %v145 = vld [vmem:[%s0 + $0x368] sm:$0xff]
  %v146 = vld [vmem:[%s0 + $0x370] sm:$0xf]
  %v147 = vld [vmem:[%s0 + $0x374] sm:$0xff]
  %v148 = vld [vmem:[%s0 + $0x37c] sm:$0xff]
  %v149 = vld [vmem:[%s0 + $0x384] sm:$0xff]
  %v150 = vld [vmem:[%s0 + $0x38c] sm:$0xff]
  %v151 = vld [vmem:[%s0 + $0x394] sm:$0xff]
  %v152 = vld [vmem:[%s0 + $0x39c] sm:$0xff]
  %v153 = vld [vmem:[%s0 + $0x3a4] sm:$0xf]
  %v156 = vunpack.c.l.b16 %v26
  %v157 = vunpack.c.h.b16 %v26
  %v158 = vunpack.c.l.b16 %v27
  %v159 = vunpack.c.h.b16 %v27
  %v160 = vpack.c.b16 %v158, %v156
  %v161 = vpack.c.b16 %v159, %v157
  %v289 = vunpack.c.l.b16 %v28
  %v290 = vunpack.c.h.b16 %v28
  %v291 = vunpack.c.l.b16 %v29
  %v292 = vunpack.c.h.b16 %v29
  %v293 = vunpack.c.l.b16 %v30
  %v294 = vunpack.c.h.b16 %v30
  %v295 = vunpack.c.l.b16 %v31
  %v296 = vunpack.c.h.b16 %v31
  %v297 = vunpack.c.l.b16 %v32
  %v298 = vunpack.c.h.b16 %v32
  %v299 = vunpack.c.l.b16 %v33
  %v300 = vunpack.c.h.b16 %v33
  %v301 = vunpack.c.l.b16 %v34
  %v302 = vunpack.c.l.b16 %v35
  %v303 = vunpack.c.h.b16 %v35
  %v304 = vunpack.c.l.b16 %v36
  %v305 = vunpack.c.h.b16 %v36
  %v306 = vunpack.c.l.b16 %v37
  %v307 = vunpack.c.h.b16 %v37
  %v308 = vunpack.c.l.b16 %v38
  %v309 = vunpack.c.h.b16 %v38
  %v310 = vunpack.c.l.b16 %v39
  %v311 = vunpack.c.h.b16 %v39
  %v312 = vunpack.c.l.b16 %v40
  %v313 = vunpack.c.h.b16 %v40
  %v314 = vunpack.c.l.b16 %v41
  %v315 = vunpack.c.l.b16 %v42
  %v316 = vunpack.c.h.b16 %v42
  %v317 = vunpack.c.l.b16 %v43
  %v318 = vunpack.c.h.b16 %v43
  %v319 = vunpack.c.l.b16 %v44
  %v320 = vunpack.c.h.b16 %v44
  %v321 = vunpack.c.l.b16 %v45
  %v322 = vunpack.c.h.b16 %v45
  %v323 = vunpack.c.l.b16 %v46
  %v324 = vunpack.c.h.b16 %v46
  %v325 = vunpack.c.l.b16 %v47
  %v326 = vunpack.c.h.b16 %v47
  %v327 = vunpack.c.l.b16 %v48
  %v328 = vunpack.c.l.b16 %v49
  %v329 = vunpack.c.h.b16 %v49
  %v330 = vunpack.c.l.b16 %v50
  %v331 = vunpack.c.h.b16 %v50
  %v332 = vunpack.c.l.b16 %v51
  %v333 = vunpack.c.h.b16 %v51
  %v334 = vunpack.c.l.b16 %v52
  %v335 = vunpack.c.h.b16 %v52
  %v336 = vunpack.c.l.b16 %v53
  %v337 = vunpack.c.h.b16 %v53
  %v338 = vunpack.c.l.b16 %v54
  %v339 = vunpack.c.h.b16 %v54
  %v340 = vunpack.c.l.b16 %v55
  %v341 = vunpack.c.l.b16 %v56
  %v342 = vunpack.c.h.b16 %v56
  %v343 = vunpack.c.l.b16 %v57
  %v344 = vunpack.c.h.b16 %v57
  %v345 = vunpack.c.l.b16 %v58
  %v346 = vunpack.c.h.b16 %v58
  %v347 = vunpack.c.l.b16 %v59
  %v348 = vunpack.c.h.b16 %v59
  %v349 = vunpack.c.l.b16 %v60
  %v350 = vunpack.c.h.b16 %v60
  %v351 = vunpack.c.l.b16 %v61
  %v352 = vunpack.c.h.b16 %v61
  %v353 = vunpack.c.l.b16 %v62
  %v354 = vunpack.c.l.b16 %v63
  %v355 = vunpack.c.h.b16 %v63
  %v356 = vunpack.c.l.b16 %v64
  %v357 = vunpack.c.h.b16 %v64
  %v358 = vunpack.c.l.b16 %v65
  %v359 = vunpack.c.h.b16 %v65
  %v360 = vunpack.c.l.b16 %v66
  %v361 = vunpack.c.h.b16 %v66
  %v362 = vunpack.c.l.b16 %v67
  %v363 = vunpack.c.h.b16 %v67
  %v364 = vunpack.c.l.b16 %v68
  %v365 = vunpack.c.h.b16 %v68
  %v366 = vunpack.c.l.b16 %v69
  %v367 = vunpack.c.l.b16 %v70
  %v368 = vunpack.c.h.b16 %v70
  %v369 = vunpack.c.l.b16 %v71
  %v370 = vunpack.c.h.b16 %v71
  %v371 = vunpack.c.l.b16 %v72
  %v372 = vunpack.c.h.b16 %v72
  %v373 = vunpack.c.l.b16 %v73
  %v374 = vunpack.c.h.b16 %v73
  %v375 = vunpack.c.l.b16 %v74
  %v376 = vunpack.c.h.b16 %v74
  %v377 = vunpack.c.l.b16 %v75
  %v378 = vunpack.c.h.b16 %v75
  %v379 = vunpack.c.l.b16 %v76
  %v380 = vunpack.c.l.b16 %v77
  %v381 = vunpack.c.h.b16 %v77
  %v382 = vunpack.c.l.b16 %v78
  %v383 = vunpack.c.h.b16 %v78
  %v384 = vunpack.c.l.b16 %v79
  %v385 = vunpack.c.h.b16 %v79
  %v386 = vunpack.c.l.b16 %v80
  %v387 = vunpack.c.h.b16 %v80
  %v388 = vunpack.c.l.b16 %v81
  %v389 = vunpack.c.h.b16 %v81
  %v390 = vunpack.c.l.b16 %v82
  %v391 = vunpack.c.h.b16 %v82
  %v392 = vunpack.c.l.b16 %v83
  %v393 = vunpack.c.l.b16 %v84
  %v394 = vunpack.c.h.b16 %v84
  %v395 = vunpack.c.l.b16 %v85
  %v396 = vunpack.c.h.b16 %v85
  %v397 = vunpack.c.l.b16 %v86
  %v398 = vunpack.c.h.b16 %v86
  %v399 = vunpack.c.l.b16 %v87
  %v400 = vunpack.c.h.b16 %v87
  %v401 = vunpack.c.l.b16 %v88
  %v402 = vunpack.c.h.b16 %v88
  %v403 = vunpack.c.l.b16 %v89
  %v404 = vunpack.c.h.b16 %v89
  %v405 = vunpack.c.l.b16 %v90
  %v406 = vunpack.c.l.b16 %v91
  %v407 = vunpack.c.h.b16 %v91
  %v408 = vunpack.c.l.b16 %v92
  %v409 = vunpack.c.h.b16 %v92
  %v410 = vunpack.c.l.b16 %v93
  %v411 = vunpack.c.h.b16 %v93
  %v412 = vunpack.c.l.b16 %v94
  %v413 = vunpack.c.h.b16 %v94
  %v414 = vunpack.c.l.b16 %v95
  %v415 = vunpack.c.h.b16 %v95
  %v416 = vunpack.c.l.b16 %v96
  %v417 = vunpack.c.h.b16 %v96
  %v418 = vunpack.c.l.b16 %v97
  %v419 = vunpack.c.l.b16 %v98
  %v420 = vunpack.c.h.b16 %v98
  %v421 = vunpack.c.l.b16 %v99
  %v422 = vunpack.c.h.b16 %v99
  %v423 = vunpack.c.l.b16 %v100
  %v424 = vunpack.c.h.b16 %v100
  %v425 = vunpack.c.l.b16 %v101
  %v426 = vunpack.c.h.b16 %v101
  %v427 = vunpack.c.l.b16 %v102
  %v428 = vunpack.c.h.b16 %v102
  %v429 = vunpack.c.l.b16 %v103
  %v430 = vunpack.c.h.b16 %v103
  %v431 = vunpack.c.l.b16 %v104
  %v432 = vunpack.c.l.b16 %v105
  %v433 = vunpack.c.h.b16 %v105
  %v434 = vunpack.c.l.b16 %v106
  %v435 = vunpack.c.h.b16 %v106
  %v436 = vunpack.c.l.b16 %v107
  %v437 = vunpack.c.h.b16 %v107
  %v438 = vunpack.c.l.b16 %v108
  %v439 = vunpack.c.h.b16 %v108
  %v440 = vunpack.c.l.b16 %v109
  %v441 = vunpack.c.h.b16 %v109
  %v442 = vunpack.c.l.b16 %v110
  %v443 = vunpack.c.h.b16 %v110
  %v444 = vunpack.c.l.b16 %v111
  %v445 = vunpack.c.l.b16 %v112
  %v446 = vunpack.c.h.b16 %v112
  %v447 = vunpack.c.l.b16 %v113
  %v448 = vunpack.c.h.b16 %v113
  %v449 = vunpack.c.l.b16 %v114
  %v450 = vunpack.c.h.b16 %v114
  %v451 = vunpack.c.l.b16 %v115
  %v452 = vunpack.c.h.b16 %v115
  %v453 = vunpack.c.l.b16 %v116
  %v454 = vunpack.c.h.b16 %v116
  %v455 = vunpack.c.l.b16 %v117
  %v456 = vunpack.c.h.b16 %v117
  %v457 = vunpack.c.l.b16 %v118
  %v458 = vunpack.c.l.b16 %v119
  %v459 = vunpack.c.h.b16 %v119
  %v460 = vunpack.c.l.b16 %v120
  %v461 = vunpack.c.h.b16 %v120
  %v462 = vunpack.c.l.b16 %v121
  %v463 = vunpack.c.h.b16 %v121
  %v464 = vunpack.c.l.b16 %v122
  %v465 = vunpack.c.h.b16 %v122
  %v466 = vunpack.c.l.b16 %v123
  %v467 = vunpack.c.h.b16 %v123
  %v468 = vunpack.c.l.b16 %v124
  %v469 = vunpack.c.h.b16 %v124
  %v470 = vunpack.c.l.b16 %v125
  %v471 = vunpack.c.l.b16 %v126
  %v472 = vunpack.c.h.b16 %v126
  %v473 = vunpack.c.l.b16 %v127
  %v474 = vunpack.c.h.b16 %v127
  %v475 = vunpack.c.l.b16 %v128
  %v476 = vunpack.c.h.b16 %v128
  %v477 = vunpack.c.l.b16 %v129
  %v478 = vunpack.c.h.b16 %v129
  %v479 = vunpack.c.l.b16 %v130
  %v480 = vunpack.c.h.b16 %v130
  %v481 = vunpack.c.l.b16 %v131
  %v482 = vunpack.c.h.b16 %v131
  %v483 = vunpack.c.l.b16 %v132
  %v484 = vunpack.c.l.b16 %v133
  %v485 = vunpack.c.h.b16 %v133
  %v486 = vunpack.c.l.b16 %v134
  %v487 = vunpack.c.h.b16 %v134
  %v488 = vunpack.c.l.b16 %v135
  %v489 = vunpack.c.h.b16 %v135
  %v490 = vunpack.c.l.b16 %v136
  %v491 = vunpack.c.h.b16 %v136
  %v492 = vunpack.c.l.b16 %v137
  %v493 = vunpack.c.h.b16 %v137
  %v494 = vunpack.c.l.b16 %v138
  %v495 = vunpack.c.h.b16 %v138
  %v496 = vunpack.c.l.b16 %v139
  %v497 = vunpack.c.l.b16 %v140
  %v498 = vunpack.c.h.b16 %v140
  %v499 = vunpack.c.l.b16 %v141
  %v500 = vunpack.c.h.b16 %v141
  %v501 = vunpack.c.l.b16 %v142
  %v502 = vunpack.c.h.b16 %v142
  %v503 = vunpack.c.l.b16 %v143
  %v504 = vunpack.c.h.b16 %v143
  %v505 = vunpack.c.l.b16 %v144
  %v506 = vunpack.c.h.b16 %v144
  %v507 = vunpack.c.l.b16 %v145
  %v508 = vunpack.c.h.b16 %v145
  %v509 = vunpack.c.l.b16 %v146
  %v510 = vunpack.c.l.b16 %v147
  %v511 = vunpack.c.h.b16 %v147
  %v512 = vunpack.c.l.b16 %v148
  %v513 = vunpack.c.h.b16 %v148
  %v514 = vunpack.c.l.b16 %v149
  %v515 = vunpack.c.h.b16 %v149
  %v516 = vunpack.c.l.b16 %v150
  %v517 = vunpack.c.h.b16 %v150
  %v518 = vunpack.c.l.b16 %v151
  %v519 = vunpack.c.h.b16 %v151
  %v520 = vunpack.c.l.b16 %v152
  %v521 = vunpack.c.h.b16 %v152
  %v522 = vunpack.c.l.b16 %v153
  %v523 = vpack.c.b16 %v302, %v289
  %v524 = vpack.c.b16 %v303, %v290
  %v525 = vpack.c.b16 %v304, %v291
  %v526 = vpack.c.b16 %v305, %v292
  %v527 = vpack.c.b16 %v306, %v293
  %v528 = vpack.c.b16 %v307, %v294
  %v529 = vpack.c.b16 %v308, %v295
  %v530 = vpack.c.b16 %v309, %v296
  %v531 = vpack.c.b16 %v310, %v297
  %v532 = vpack.c.b16 %v311, %v298
  %v533 = vpack.c.b16 %v312, %v299
  %v534 = vpack.c.b16 %v313, %v300
  %v535 = vpack.c.b16 %v314, %v301
  %v536 = vpack.c.b16 %v328, %v315
  %v537 = vpack.c.b16 %v329, %v316
  %v538 = vpack.c.b16 %v330, %v317
  %v539 = vpack.c.b16 %v331, %v318
  %v540 = vpack.c.b16 %v332, %v319
  %v541 = vpack.c.b16 %v333, %v320
  %v542 = vpack.c.b16 %v334, %v321
  %v543 = vpack.c.b16 %v335, %v322
  %v544 = vpack.c.b16 %v336, %v323
  %v545 = vpack.c.b16 %v337, %v324
  %v546 = vpack.c.b16 %v338, %v325
  %v547 = vpack.c.b16 %v339, %v326
  %v548 = vpack.c.b16 %v340, %v327
  %v549 = vpack.c.b16 %v354, %v341
  %v550 = vpack.c.b16 %v355, %v342
  %v551 = vpack.c.b16 %v356, %v343
  %v552 = vpack.c.b16 %v357, %v344
  %v553 = vpack.c.b16 %v358, %v345
  %v554 = vpack.c.b16 %v359, %v346
  %v555 = vpack.c.b16 %v360, %v347
  %v556 = vpack.c.b16 %v361, %v348
  %v557 = vpack.c.b16 %v362, %v349
  %v558 = vpack.c.b16 %v363, %v350
  %v559 = vpack.c.b16 %v364, %v351
  %v560 = vpack.c.b16 %v365, %v352
  %v561 = vpack.c.b16 %v366, %v353
  %v562 = vpack.c.b16 %v380, %v367
  %v563 = vpack.c.b16 %v381, %v368
  %v564 = vpack.c.b16 %v382, %v369
  %v565 = vpack.c.b16 %v383, %v370
  %v566 = vpack.c.b16 %v384, %v371
  %v567 = vpack.c.b16 %v385, %v372
  %v568 = vpack.c.b16 %v386, %v373
  %v569 = vpack.c.b16 %v387, %v374
  %v570 = vpack.c.b16 %v388, %v375
  %v571 = vpack.c.b16 %v389, %v376
  %v572 = vpack.c.b16 %v390, %v377
  %v573 = vpack.c.b16 %v391, %v378
  %v574 = vpack.c.b16 %v392, %v379
  %v575 = vpack.c.b16 %v406, %v393
  %v576 = vpack.c.b16 %v407, %v394
  %v577 = vpack.c.b16 %v408, %v395
  %v578 = vpack.c.b16 %v409, %v396
  %v579 = vpack.c.b16 %v410, %v397
  %v580 = vpack.c.b16 %v411, %v398
  %v581 = vpack.c.b16 %v412, %v399
  %v582 = vpack.c.b16 %v413, %v400
  %v583 = vpack.c.b16 %v414, %v401
  %v584 = vpack.c.b16 %v415, %v402
  %v585 = vpack.c.b16 %v416, %v403
  %v586 = vpack.c.b16 %v417, %v404
  %v587 = vpack.c.b16 %v418, %v405
  %v588 = vpack.c.b16 %v432, %v419
  %v589 = vpack.c.b16 %v433, %v420
  %v590 = vpack.c.b16 %v434, %v421
  %v591 = vpack.c.b16 %v435, %v422
  %v592 = vpack.c.b16 %v436, %v423
  %v593 = vpack.c.b16 %v437, %v424
  %v594 = vpack.c.b16 %v438, %v425
  %v595 = vpack.c.b16 %v439, %v426
  %v596 = vpack.c.b16 %v440, %v427
  %v597 = vpack.c.b16 %v441, %v428
  %v598 = vpack.c.b16 %v442, %v429
  %v599 = vpack.c.b16 %v443, %v430
  %v600 = vpack.c.b16 %v444, %v431
  %v601 = vpack.c.b16 %v458, %v445
  %v602 = vpack.c.b16 %v459, %v446
  %v603 = vpack.c.b16 %v460, %v447
  %v604 = vpack.c.b16 %v461, %v448
  %v605 = vpack.c.b16 %v462, %v449
  %v606 = vpack.c.b16 %v463, %v450
  %v607 = vpack.c.b16 %v464, %v451
  %v608 = vpack.c.b16 %v465, %v452
  %v609 = vpack.c.b16 %v466, %v453
  %v610 = vpack.c.b16 %v467, %v454
  %v611 = vpack.c.b16 %v468, %v455
  %v612 = vpack.c.b16 %v469, %v456
  %v613 = vpack.c.b16 %v470, %v457
  %v614 = vpack.c.b16 %v484, %v471
  %v615 = vpack.c.b16 %v485, %v472
  %v616 = vpack.c.b16 %v486, %v473
  %v617 = vpack.c.b16 %v487, %v474
  %v618 = vpack.c.b16 %v488, %v475
  %v619 = vpack.c.b16 %v489, %v476
  %v620 = vpack.c.b16 %v490, %v477
  %v621 = vpack.c.b16 %v491, %v478
  %v622 = vpack.c.b16 %v492, %v479
  %v623 = vpack.c.b16 %v493, %v480
  %v624 = vpack.c.b16 %v494, %v481
  %v625 = vpack.c.b16 %v495, %v482
  %v626 = vpack.c.b16 %v496, %v483
  %v627 = vpack.c.b16 %v510, %v497
  %v628 = vpack.c.b16 %v511, %v498
  %v629 = vpack.c.b16 %v512, %v499
  %v630 = vpack.c.b16 %v513, %v500
  %v631 = vpack.c.b16 %v514, %v501
  %v632 = vpack.c.b16 %v515, %v502
  %v633 = vpack.c.b16 %v516, %v503
  %v634 = vpack.c.b16 %v517, %v504
  %v635 = vpack.c.b16 %v518, %v505
  %v636 = vpack.c.b16 %v519, %v506
  %v637 = vpack.c.b16 %v520, %v507
  %v638 = vpack.c.b16 %v521, %v508
  %v639 = vpack.c.b16 %v522, %v509
  %vm757 = vcmask 130048
  %v759 = vsel %vm757, %v161, 0
  %761 = vmatprep.subr.bf16.mxu0 %v615
  %762 = vmatpush1.bf16.msra.mxu0 %v614
  %763 = vmatprep.subr.bf16.mxu0 %v602
  %764 = vmatpush1.bf16.msra.mxu0 %v601
  %765 = vmatprep.subr.bf16.mxu0 %v589
  %766 = vmatpush1.bf16.msra.mxu0 %v588
  %767 = vmatprep.subr.bf16.mxu0 %v576
  %768 = vmatpush1.bf16.msra.mxu0 %v575
  %769 = vmatprep.subr.bf16.mxu0 %v563
  %770 = vmatpush1.bf16.msra.mxu0 %v562
  %771 = vmatprep.subr.bf16.mxu0 %v550
  %772 = vmatpush1.bf16.msra.mxu0 %v549
  %773 = vmatprep.subr.bf16.mxu0 %v537
  %774 = vmatpush1.bf16.msra.mxu0 %v536
  %775 = vmatprep.subr.bf16.mxu0 %v524
  %776 = vmatpush1.bf16.msra.mxu0 %v523
  %777 = vmatprep.subr.bf16.mxu0 0
  %778 = vmatpush2.bf16.msra.mxu0 0
  %779 = vmatprep.subr.bf16.mxu0 0
  %780 = vmatpush2.bf16.msra.mxu0 0
  %781 = vmatprep.subr.bf16.mxu0 0
  %782 = vmatpush2.bf16.msra.mxu0 0
  %783 = vmatprep.subr.bf16.mxu0 0
  %784 = vmatpush2.bf16.msra.mxu0 0
  %785 = vmatprep.subr.bf16.mxu0 0
  %786 = vmatpush2.bf16.msra.mxu0 0
  %787 = vmatprep.subr.bf16.mxu0 0
  %788 = vmatpush2.bf16.msra.mxu0 0
  %789 = vmatprep.subr.bf16.mxu0 0
  %790 = vmatpush2.bf16.msra.mxu0 0
  %791 = vmatprep.subr.bf16.mxu0 %v628
  %792 = vmatpush2.bf16.msra.mxu0 %v627
  %793 = vmatprep.mubr.bf16.mxu0 %v759
  %794 = vmatmul.mubr.bf16.gmra.mxu0 %v160
  %v795 = vpop.f32.mrf.mxu0
  %v796 = vadd.f32 0.0, %v795
  %v797 = vpop.f32.mrf.mxu0
  %v798 = vadd.f32 0.0, %v797
  %v799 = vpop.f32.mrf.mxu0
  %v800 = vadd.f32 0.0, %v799
  %v801 = vpop.f32.mrf.mxu0
  %v802 = vadd.f32 0.0, %v801
  %803 = vdwg.mxu0
  %804 = vmatprep.subr.bf16.mxu0 %v617
  %805 = vmatpush1.bf16.msra.mxu0 %v616
  %806 = vmatprep.subr.bf16.mxu0 %v604
  %807 = vmatpush1.bf16.msra.mxu0 %v603
  %808 = vmatprep.subr.bf16.mxu0 %v591
  %809 = vmatpush1.bf16.msra.mxu0 %v590
  %810 = vmatprep.subr.bf16.mxu0 %v578
  %811 = vmatpush1.bf16.msra.mxu0 %v577
  %812 = vmatprep.subr.bf16.mxu0 %v565
  %813 = vmatpush1.bf16.msra.mxu0 %v564
  %814 = vmatprep.subr.bf16.mxu0 %v552
  %815 = vmatpush1.bf16.msra.mxu0 %v551
  %816 = vmatprep.subr.bf16.mxu0 %v539
  %817 = vmatpush1.bf16.msra.mxu0 %v538
  %818 = vmatprep.subr.bf16.mxu0 %v526
  %819 = vmatpush1.bf16.msra.mxu0 %v525
  %820 = vmatprep.subr.bf16.mxu0 0
  %821 = vmatpush2.bf16.msra.mxu0 0
  %822 = vmatprep.subr.bf16.mxu0 0
  %823 = vmatpush2.bf16.msra.mxu0 0
  %824 = vmatprep.subr.bf16.mxu0 0
  %825 = vmatpush2.bf16.msra.mxu0 0
  %826 = vmatprep.subr.bf16.mxu0 0
  %827 = vmatpush2.bf16.msra.mxu0 0
  %828 = vmatprep.subr.bf16.mxu0 0
  %829 = vmatpush2.bf16.msra.mxu0 0
  %830 = vmatprep.subr.bf16.mxu0 0
  %831 = vmatpush2.bf16.msra.mxu0 0
  %832 = vmatprep.subr.bf16.mxu0 0
  %833 = vmatpush2.bf16.msra.mxu0 0
  %834 = vmatprep.subr.bf16.mxu0 %v630
  %835 = vmatpush2.bf16.msra.mxu0 %v629
  %836 = vmatprep.mubr.bf16.mxu0 %v759
  %837 = vmatmul.mubr.bf16.gmra.mxu0 %v160
  %v838 = vpop.f32.mrf.mxu0
  %v839 = vadd.f32 0.0, %v838
  %v840 = vpop.f32.mrf.mxu0
  %v841 = vadd.f32 0.0, %v840
  %v842 = vpop.f32.mrf.mxu0
  %v843 = vadd.f32 0.0, %v842
  %v844 = vpop.f32.mrf.mxu0
  %v845 = vadd.f32 0.0, %v844
  %846 = vdwg.mxu0
  %847 = vmatprep.subr.bf16.mxu0 %v619
  %848 = vmatpush1.bf16.msra.mxu0 %v618
  %849 = vmatprep.subr.bf16.mxu0 %v606
  %850 = vmatpush1.bf16.msra.mxu0 %v605
  %851 = vmatprep.subr.bf16.mxu0 %v593
  %852 = vmatpush1.bf16.msra.mxu0 %v592
  %853 = vmatprep.subr.bf16.mxu0 %v580
  %854 = vmatpush1.bf16.msra.mxu0 %v579
  %855 = vmatprep.subr.bf16.mxu0 %v567
  %856 = vmatpush1.bf16.msra.mxu0 %v566
  %857 = vmatprep.subr.bf16.mxu0 %v554
  %858 = vmatpush1.bf16.msra.mxu0 %v553
  %859 = vmatprep.subr.bf16.mxu0 %v541
  %860 = vmatpush1.bf16.msra.mxu0 %v540
  %861 = vmatprep.subr.bf16.mxu0 %v528
  %862 = vmatpush1.bf16.msra.mxu0 %v527
  %863 = vmatprep.subr.bf16.mxu0 0
  %864 = vmatpush2.bf16.msra.mxu0 0
  %865 = vmatprep.subr.bf16.mxu0 0
  %866 = vmatpush2.bf16.msra.mxu0 0
  %867 = vmatprep.subr.bf16.mxu0 0
  %868 = vmatpush2.bf16.msra.mxu0 0
  %869 = vmatprep.subr.bf16.mxu0 0
  %870 = vmatpush2.bf16.msra.mxu0 0
  %871 = vmatprep.subr.bf16.mxu0 0
  %872 = vmatpush2.bf16.msra.mxu0 0
  %873 = vmatprep.subr.bf16.mxu0 0
  %874 = vmatpush2.bf16.msra.mxu0 0
  %875 = vmatprep.subr.bf16.mxu0 0
  %876 = vmatpush2.bf16.msra.mxu0 0
  %877 = vmatprep.subr.bf16.mxu0 %v632
  %878 = vmatpush2.bf16.msra.mxu0 %v631
  %879 = vmatprep.mubr.bf16.mxu0 %v759
  %880 = vmatmul.mubr.bf16.gmra.mxu0 %v160
  %v881 = vpop.f32.mrf.mxu0
  %v882 = vadd.f32 0.0, %v881
  %v883 = vpop.f32.mrf.mxu0
  %v884 = vadd.f32 0.0, %v883
  %v885 = vpop.f32.mrf.mxu0
  %v886 = vadd.f32 0.0, %v885
  %v887 = vpop.f32.mrf.mxu0
  %v888 = vadd.f32 0.0, %v887
  %889 = vdwg.mxu0
  %890 = vmatprep.subr.bf16.mxu0 %v621
  %891 = vmatpush1.bf16.msra.mxu0 %v620
  %892 = vmatprep.subr.bf16.mxu0 %v608
  %893 = vmatpush1.bf16.msra.mxu0 %v607
  %894 = vmatprep.subr.bf16.mxu0 %v595
  %895 = vmatpush1.bf16.msra.mxu0 %v594
  %896 = vmatprep.subr.bf16.mxu0 %v582
  %897 = vmatpush1.bf16.msra.mxu0 %v581
  %898 = vmatprep.subr.bf16.mxu0 %v569
  %899 = vmatpush1.bf16.msra.mxu0 %v568
  %900 = vmatprep.subr.bf16.mxu0 %v556
  %901 = vmatpush1.bf16.msra.mxu0 %v555
  %902 = vmatprep.subr.bf16.mxu0 %v543
  %903 = vmatpush1.bf16.msra.mxu0 %v542
  %904 = vmatprep.subr.bf16.mxu0 %v530
  %905 = vmatpush1.bf16.msra.mxu0 %v529
  %906 = vmatprep.subr.bf16.mxu0 0
  %907 = vmatpush2.bf16.msra.mxu0 0
  %908 = vmatprep.subr.bf16.mxu0 0
  %909 = vmatpush2.bf16.msra.mxu0 0
  %910 = vmatprep.subr.bf16.mxu0 0
  %911 = vmatpush2.bf16.msra.mxu0 0
  %912 = vmatprep.subr.bf16.mxu0 0
  %913 = vmatpush2.bf16.msra.mxu0 0
  %914 = vmatprep.subr.bf16.mxu0 0
  %915 = vmatpush2.bf16.msra.mxu0 0
  %916 = vmatprep.subr.bf16.mxu0 0
  %917 = vmatpush2.bf16.msra.mxu0 0
  %918 = vmatprep.subr.bf16.mxu0 0
  %919 = vmatpush2.bf16.msra.mxu0 0
  %920 = vmatprep.subr.bf16.mxu0 %v634
  %921 = vmatpush2.bf16.msra.mxu0 %v633
  %922 = vmatprep.mubr.bf16.mxu0 %v759
  %923 = vmatmul.mubr.bf16.gmra.mxu0 %v160
  %v924 = vpop.f32.mrf.mxu0
  %v925 = vadd.f32 0.0, %v924
  %v926 = vpop.f32.mrf.mxu0
  %v927 = vadd.f32 0.0, %v926
  %v928 = vpop.f32.mrf.mxu0
  %v929 = vadd.f32 0.0, %v928
  %v930 = vpop.f32.mrf.mxu0
  %v931 = vadd.f32 0.0, %v930
  %932 = vdwg.mxu0
  %933 = vmatprep.subr.bf16.mxu0 %v623
  %934 = vmatpush1.bf16.msra.mxu0 %v622
  %935 = vmatprep.subr.bf16.mxu0 %v610
  %936 = vmatpush1.bf16.msra.mxu0 %v609
  %937 = vmatprep.subr.bf16.mxu0 %v597
  %938 = vmatpush1.bf16.msra.mxu0 %v596
  %939 = vmatprep.subr.bf16.mxu0 %v584
  %940 = vmatpush1.bf16.msra.mxu0 %v583
  %941 = vmatprep.subr.bf16.mxu0 %v571
  %942 = vmatpush1.bf16.msra.mxu0 %v570
  %943 = vmatprep.subr.bf16.mxu0 %v558
  %944 = vmatpush1.bf16.msra.mxu0 %v557
  %945 = vmatprep.subr.bf16.mxu0 %v545
  %946 = vmatpush1.bf16.msra.mxu0 %v544
  %947 = vmatprep.subr.bf16.mxu0 %v532
  %948 = vmatpush1.bf16.msra.mxu0 %v531
  %949 = vmatprep.subr.bf16.mxu0 0
  %950 = vmatpush2.bf16.msra.mxu0 0
  %951 = vmatprep.subr.bf16.mxu0 0
  %952 = vmatpush2.bf16.msra.mxu0 0
  %953 = vmatprep.subr.bf16.mxu0 0
  %954 = vmatpush2.bf16.msra.mxu0 0
  %955 = vmatprep.subr.bf16.mxu0 0
  %956 = vmatpush2.bf16.msra.mxu0 0
  %957 = vmatprep.subr.bf16.mxu0 0
  %958 = vmatpush2.bf16.msra.mxu0 0
  %959 = vmatprep.subr.bf16.mxu0 0
  %960 = vmatpush2.bf16.msra.mxu0 0
  %961 = vmatprep.subr.bf16.mxu0 0
  %962 = vmatpush2.bf16.msra.mxu0 0
  %963 = vmatprep.subr.bf16.mxu0 %v636
  %964 = vmatpush2.bf16.msra.mxu0 %v635
  %965 = vmatprep.mubr.bf16.mxu0 %v759
  %966 = vmatmul.mubr.bf16.gmra.mxu0 %v160
  %v967 = vpop.f32.mrf.mxu0
  %v968 = vadd.f32 0.0, %v967
  %v969 = vpop.f32.mrf.mxu0
  %v970 = vadd.f32 0.0, %v969
  %v971 = vpop.f32.mrf.mxu0
  %v972 = vadd.f32 0.0, %v971
  %v973 = vpop.f32.mrf.mxu0
  %v974 = vadd.f32 0.0, %v973
  %975 = vdwg.mxu0
  %976 = vmatprep.subr.bf16.mxu0 %v625
  %977 = vmatpush1.bf16.msra.mxu0 %v624
  %978 = vmatprep.subr.bf16.mxu0 %v612
  %979 = vmatpush1.bf16.msra.mxu0 %v611
  %980 = vmatprep.subr.bf16.mxu0 %v599
  %981 = vmatpush1.bf16.msra.mxu0 %v598
  %982 = vmatprep.subr.bf16.mxu0 %v586
  %983 = vmatpush1.bf16.msra.mxu0 %v585
  %984 = vmatprep.subr.bf16.mxu0 %v573
  %985 = vmatpush1.bf16.msra.mxu0 %v572
  %986 = vmatprep.subr.bf16.mxu0 %v560
  %987 = vmatpush1.bf16.msra.mxu0 %v559
  %988 = vmatprep.subr.bf16.mxu0 %v547
  %989 = vmatpush1.bf16.msra.mxu0 %v546
  %990 = vmatprep.subr.bf16.mxu0 %v534
  %991 = vmatpush1.bf16.msra.mxu0 %v533
  %992 = vmatprep.subr.bf16.mxu0 0
  %993 = vmatpush2.bf16.msra.mxu0 0
  %994 = vmatprep.subr.bf16.mxu0 0
  %995 = vmatpush2.bf16.msra.mxu0 0
  %996 = vmatprep.subr.bf16.mxu0 0
  %997 = vmatpush2.bf16.msra.mxu0 0
  %998 = vmatprep.subr.bf16.mxu0 0
  %999 = vmatpush2.bf16.msra.mxu0 0
  %1000 = vmatprep.subr.bf16.mxu0 0
  %1001 = vmatpush2.bf16.msra.mxu0 0
  %1002 = vmatprep.subr.bf16.mxu0 0
  %1003 = vmatpush2.bf16.msra.mxu0 0
  %1004 = vmatprep.subr.bf16.mxu0 0
  %1005 = vmatpush2.bf16.msra.mxu0 0
  %1006 = vmatprep.subr.bf16.mxu0 %v638
  %1007 = vmatpush2.bf16.msra.mxu0 %v637
  %1008 = vmatprep.mubr.bf16.mxu0 %v759
  %1009 = vmatmul.mubr.bf16.gmra.mxu0 %v160
  %v1010 = vpop.f32.mrf.mxu0
  %v1011 = vadd.f32 0.0, %v1010
  %v1012 = vpop.f32.mrf.mxu0
  %v1013 = vadd.f32 0.0, %v1012
  %v1014 = vpop.f32.mrf.mxu0
  %v1015 = vadd.f32 0.0, %v1014
  %v1016 = vpop.f32.mrf.mxu0
  %v1017 = vadd.f32 0.0, %v1016
  %1018 = vdwg.mxu0
  %1019 = vmatprep.subr.bf16.mxu0 0
  %1020 = vmatpush1.bf16.msra.mxu0 %v626
  %1021 = vmatprep.subr.bf16.mxu0 0
  %1022 = vmatpush1.bf16.msra.mxu0 %v613
  %1023 = vmatprep.subr.bf16.mxu0 0
  %1024 = vmatpush1.bf16.msra.mxu0 %v600
  %1025 = vmatprep.subr.bf16.mxu0 0
  %1026 = vmatpush1.bf16.msra.mxu0 %v587
  %1027 = vmatprep.subr.bf16.mxu0 0
  %1028 = vmatpush1.bf16.msra.mxu0 %v574
  %1029 = vmatprep.subr.bf16.mxu0 0
  %1030 = vmatpush1.bf16.msra.mxu0 %v561
  %1031 = vmatprep.subr.bf16.mxu0 0
  %1032 = vmatpush1.bf16.msra.mxu0 %v548
  %1033 = vmatprep.subr.bf16.mxu0 0
  %1034 = vmatpush1.bf16.msra.mxu0 %v535
  %1035 = vmatprep.subr.bf16.mxu0 0
  %1036 = vmatpush2.bf16.msra.mxu0 0
  %1037 = vmatprep.subr.bf16.mxu0 0
  %1038 = vmatpush2.bf16.msra.mxu0 0
  %1039 = vmatprep.subr.bf16.mxu0 0
  %1040 = vmatpush2.bf16.msra.mxu0 0
  %1041 = vmatprep.subr.bf16.mxu0 0
  %1042 = vmatpush2.bf16.msra.mxu0 0
  %1043 = vmatprep.subr.bf16.mxu0 0
  %1044 = vmatpush2.bf16.msra.mxu0 0
  %1045 = vmatprep.subr.bf16.mxu0 0
  %1046 = vmatpush2.bf16.msra.mxu0 0
  %1047 = vmatprep.subr.bf16.mxu0 0
  %1048 = vmatpush2.bf16.msra.mxu0 0
  %1049 = vmatprep.subr.bf16.mxu0 0
  %1050 = vmatpush2.bf16.msra.mxu0 %v639
  %1051 = vmatprep.mubr.bf16.mxu0 %v759
  %1052 = vmatmul.mubr.bf16.gmra.mxu0 %v160
  %v1053 = vpop.f32.mrf.mxu0
  %v1054 = vadd.f32 0.0, %v1053
  %v1055 = vpop.f32.mrf.mxu0
  %v1056 = vpop.f32.mrf.mxu0
  %v1057 = vadd.f32 0.0, %v1056
  %v1058 = vpop.f32.mrf.mxu0
  %1059 = vdwg.mxu0
  %v1060 = vadd.f32 %v796, %v798
  %v1061 = vadd.f32 %v1060, %v839
  %v1062 = vadd.f32 %v1061, %v841
  %v1063 = vadd.f32 %v1062, %v882
  %v1064 = vadd.f32 %v1063, %v884
  %v1065 = vadd.f32 %v1064, %v925
  %v1066 = vadd.f32 %v1065, %v927
  %v1067 = vadd.f32 %v1066, %v968
  %v1068 = vadd.f32 %v1067, %v970
  %v1069 = vadd.f32 %v1068, %v1011
  %v1070 = vadd.f32 %v1069, %v1013
  %vm1071 = vcmask 261120
  %v1072 = vsel %vm1071, %v1054, 0.0
  %v1073 = vadd.f32 %v1070, %v1072
  %1074 = vadd.xlane.f32.xlu0 %v1073
  %v1075 = vpop.xlane.xlu0 %1074
  %v1076 = vadd.f32 %v800, %v802
  %v1077 = vadd.f32 %v1076, %v843
  %v1078 = vadd.f32 %v1077, %v845
  %v1079 = vadd.f32 %v1078, %v886
  %v1080 = vadd.f32 %v1079, %v888
  %v1081 = vadd.f32 %v1080, %v929
  %v1082 = vadd.f32 %v1081, %v931
  %v1083 = vadd.f32 %v1082, %v972
  %v1084 = vadd.f32 %v1083, %v974
  %v1085 = vadd.f32 %v1084, %v1015
  %v1086 = vadd.f32 %v1085, %v1017
  %v1087 = vsel %vm1071, %v1057, 0.0
  %v1088 = vadd.f32 %v1086, %v1087
  %1089 = vadd.xlane.f32.xlu0 %v1088
  %v1090 = vpop.xlane.xlu0 %1089
  %v1091 = vmul.f32 %v1075, 0.0006377551
  %v1092 = vmul.f32 %v1090, 0.0006377551
  %v1093 = vmul.f32 %v796, %v796
  %v1094 = vmul.f32 %v798, %v798
  %v1095 = vmul.f32 %v839, %v839
  %v1096 = vmul.f32 %v841, %v841
  %v1097 = vmul.f32 %v882, %v882
  %v1098 = vmul.f32 %v884, %v884
  %v1099 = vmul.f32 %v925, %v925
  %v1100 = vmul.f32 %v927, %v927
  %v1101 = vmul.f32 %v968, %v968
  %v1102 = vmul.f32 %v970, %v970
  %v1103 = vmul.f32 %v1011, %v1011
  %v1104 = vmul.f32 %v1013, %v1013
  %v1105 = vmul.f32 %v1054, %v1054
  %v1106 = vmul.f32 %v800, %v800
  %v1107 = vmul.f32 %v802, %v802
  %v1108 = vmul.f32 %v843, %v843
  %v1109 = vmul.f32 %v845, %v845
  %v1110 = vmul.f32 %v886, %v886
  %v1111 = vmul.f32 %v888, %v888
  %v1112 = vmul.f32 %v929, %v929
  %v1113 = vmul.f32 %v931, %v931
  %v1114 = vmul.f32 %v972, %v972
  %v1115 = vmul.f32 %v974, %v974
  %v1116 = vmul.f32 %v1015, %v1015
  %v1117 = vmul.f32 %v1017, %v1017
  %v1118 = vmul.f32 %v1057, %v1057
  %v1119 = vadd.f32 %v1093, %v1094
  %v1120 = vadd.f32 %v1119, %v1095
  %v1121 = vadd.f32 %v1120, %v1096
  %v1122 = vadd.f32 %v1121, %v1097
  %v1123 = vadd.f32 %v1122, %v1098
  %v1124 = vadd.f32 %v1123, %v1099
  %v1125 = vadd.f32 %v1124, %v1100
  %v1126 = vadd.f32 %v1125, %v1101
  %v1127 = vadd.f32 %v1126, %v1102
  %v1128 = vadd.f32 %v1127, %v1103
  %v1129 = vadd.f32 %v1128, %v1104
  %v1130 = vsel %vm1071, %v1105, 0.0
  %v1131 = vadd.f32 %v1129, %v1130
  %1132 = vadd.xlane.f32.xlu0 %v1131
  %v1133 = vpop.xlane.xlu0 %1132
  %v1134 = vadd.f32 %v1106, %v1107
  %v1135 = vadd.f32 %v1134, %v1108
  %v1136 = vadd.f32 %v1135, %v1109
  %v1137 = vadd.f32 %v1136, %v1110
  %v1138 = vadd.f32 %v1137, %v1111
  %v1139 = vadd.f32 %v1138, %v1112
  %v1140 = vadd.f32 %v1139, %v1113
  %v1141 = vadd.f32 %v1140, %v1114
  %v1142 = vadd.f32 %v1141, %v1115
  %v1143 = vadd.f32 %v1142, %v1116
  %v1144 = vadd.f32 %v1143, %v1117
  %v1145 = vsel %vm1071, %v1118, 0.0
  %v1146 = vadd.f32 %v1144, %v1145
  %1147 = vadd.xlane.f32.xlu0 %v1146
  %v1148 = vpop.xlane.xlu0 %1147
  %v1149 = vmul.f32 %v1133, 0.0006377551
  %v1150 = vmul.f32 %v1148, 0.0006377551
  %v1151 = vmul.f32 %v1091, %v1091
  %v1152 = vmul.f32 %v1092, %v1092
  %v1153 = vsub.f32 %v1149, %v1151
  %v1154 = vsub.f32 %v1150, %v1152
  %v1155 = vmax.f32 %v1153, 0.0
  %v1156 = vmax.f32 %v1154, 0.0
  %v1157 = vadd.f32 %v1155, 1e-05
  %v1158 = vadd.f32 %v1156, 1e-05
  %v1159 = vrsqrt.pop %v1157
  %v1160 = vrsqrt.pop %v1158
  %v1161 = vld [vmem:[%s2] sm:$0xff]
  %v1162 = vld [vmem:[%s2 + $0x8] sm:$0xff]
  %v1163 = vmul.f32 %v1159, %v1161
  %v1164 = vmul.f32 %v1160, %v1162
  %v1165 = vsub.f32 %v796, %v1091
  %v1166 = vsub.f32 %v798, %v1091
  %v1167 = vsub.f32 %v839, %v1091
  %v1168 = vsub.f32 %v841, %v1091
  %v1169 = vsub.f32 %v882, %v1091
  %v1170 = vsub.f32 %v884, %v1091
  %v1171 = vsub.f32 %v925, %v1091
  %v1172 = vsub.f32 %v927, %v1091
  %v1173 = vsub.f32 %v968, %v1091
  %v1174 = vsub.f32 %v970, %v1091
  %v1175 = vsub.f32 %v1011, %v1091
  %v1176 = vsub.f32 %v1013, %v1091
  %v1177 = vsub.f32 %v1054, %v1091
  %v1178 = vsub.f32 %v800, %v1092
  %v1179 = vsub.f32 %v802, %v1092
  %v1180 = vsub.f32 %v843, %v1092
  %v1181 = vsub.f32 %v845, %v1092
  %v1182 = vsub.f32 %v886, %v1092
  %v1183 = vsub.f32 %v888, %v1092
  %v1184 = vsub.f32 %v929, %v1092
  %v1185 = vsub.f32 %v931, %v1092
  %v1186 = vsub.f32 %v972, %v1092
  %v1187 = vsub.f32 %v974, %v1092
  %v1188 = vsub.f32 %v1015, %v1092
  %v1189 = vsub.f32 %v1017, %v1092
  %v1190 = vsub.f32 %v1057, %v1092
  %1192 = vset.pattern.permute.xlu0 0
  %1193 = vperm.xlu0 %1192, %v1163
  %v1194 = vpop.permute.xlu0 %1193
  %1197 = vset.pattern.permute.xlu0 0
  %1198 = vperm.xlu0 %1197, %v1164
  %v1199 = vpop.permute.xlu0 %1198
  %v1201 = vmul.f32 %v1165, %v1194
  %v1202 = vmul.f32 %v1166, %v1194
  %v1203 = vmul.f32 %v1167, %v1194
  %v1204 = vmul.f32 %v1168, %v1194
  %v1205 = vmul.f32 %v1169, %v1194
  %v1206 = vmul.f32 %v1170, %v1194
  %v1207 = vmul.f32 %v1171, %v1194
  %v1208 = vmul.f32 %v1172, %v1194
  %v1209 = vmul.f32 %v1173, %v1194
  %v1210 = vmul.f32 %v1174, %v1194
  %v1211 = vmul.f32 %v1175, %v1194
  %v1212 = vmul.f32 %v1176, %v1194
  %v1213 = vmul.f32 %v1177, %v1194
  %v1214 = vmul.f32 %v1178, %v1199
  %v1215 = vmul.f32 %v1179, %v1199
  %v1216 = vmul.f32 %v1180, %v1199
  %v1217 = vmul.f32 %v1181, %v1199
  %v1218 = vmul.f32 %v1182, %v1199
  %v1219 = vmul.f32 %v1183, %v1199
  %v1220 = vmul.f32 %v1184, %v1199
  %v1221 = vmul.f32 %v1185, %v1199
  %v1222 = vmul.f32 %v1186, %v1199
  %v1223 = vmul.f32 %v1187, %v1199
  %v1224 = vmul.f32 %v1188, %v1199
  %v1225 = vmul.f32 %v1189, %v1199
  %v1226 = vmul.f32 %v1190, %v1199
  %v1227 = vld [vmem:[%s3] sm:$0xff]
  %v1228 = vld [vmem:[%s3 + $0x8] sm:$0xff]
  %1230 = vset.pattern.permute.xlu0 0
  %1231 = vperm.xlu0 %1230, %v1227
  %v1232 = vpop.permute.xlu0 %1231
  %1235 = vset.pattern.permute.xlu0 0
  %1236 = vperm.xlu0 %1235, %v1228
  %v1237 = vpop.permute.xlu0 %1236
  %v1239 = vadd.f32 %v1201, %v1232
  %v1240 = vadd.f32 %v1202, %v1232
  %v1241 = vadd.f32 %v1203, %v1232
  %v1242 = vadd.f32 %v1204, %v1232
  %v1243 = vadd.f32 %v1205, %v1232
  %v1244 = vadd.f32 %v1206, %v1232
  %v1245 = vadd.f32 %v1207, %v1232
  %v1246 = vadd.f32 %v1208, %v1232
  %v1247 = vadd.f32 %v1209, %v1232
  %v1248 = vadd.f32 %v1210, %v1232
  %v1249 = vadd.f32 %v1211, %v1232
  %v1250 = vadd.f32 %v1212, %v1232
  %v1251 = vadd.f32 %v1213, %v1232
  %v1252 = vadd.f32 %v1214, %v1237
  %v1253 = vadd.f32 %v1215, %v1237
  %v1254 = vadd.f32 %v1216, %v1237
  %v1255 = vadd.f32 %v1217, %v1237
  %v1256 = vadd.f32 %v1218, %v1237
  %v1257 = vadd.f32 %v1219, %v1237
  %v1258 = vadd.f32 %v1220, %v1237
  %v1259 = vadd.f32 %v1221, %v1237
  %v1260 = vadd.f32 %v1222, %v1237
  %v1261 = vadd.f32 %v1223, %v1237
  %v1262 = vadd.f32 %v1224, %v1237
  %v1263 = vadd.f32 %v1225, %v1237
  %v1264 = vadd.f32 %v1226, %v1237
  %vm1265 = vcmp.ge.f32.partialorder %v1239, 0.0
  %vm1266 = vcmp.ge.f32.partialorder %v1240, 0.0
  %vm1267 = vcmp.ge.f32.partialorder %v1241, 0.0
  %vm1268 = vcmp.ge.f32.partialorder %v1242, 0.0
  %vm1269 = vcmp.ge.f32.partialorder %v1243, 0.0
  %vm1270 = vcmp.ge.f32.partialorder %v1244, 0.0
  %vm1271 = vcmp.ge.f32.partialorder %v1245, 0.0
  %vm1272 = vcmp.ge.f32.partialorder %v1246, 0.0
  %vm1273 = vcmp.ge.f32.partialorder %v1247, 0.0
  %vm1274 = vcmp.ge.f32.partialorder %v1248, 0.0
  %vm1275 = vcmp.ge.f32.partialorder %v1249, 0.0
  %vm1276 = vcmp.ge.f32.partialorder %v1250, 0.0
  %vm1277 = vcmp.ge.f32.partialorder %v1251, 0.0
  %vm1278 = vcmp.ge.f32.partialorder %v1252, 0.0
  %vm1279 = vcmp.ge.f32.partialorder %v1253, 0.0
  %vm1280 = vcmp.ge.f32.partialorder %v1254, 0.0
  %vm1281 = vcmp.ge.f32.partialorder %v1255, 0.0
  %vm1282 = vcmp.ge.f32.partialorder %v1256, 0.0
  %vm1283 = vcmp.ge.f32.partialorder %v1257, 0.0
  %vm1284 = vcmp.ge.f32.partialorder %v1258, 0.0
  %vm1285 = vcmp.ge.f32.partialorder %v1259, 0.0
  %vm1286 = vcmp.ge.f32.partialorder %v1260, 0.0
  %vm1287 = vcmp.ge.f32.partialorder %v1261, 0.0
  %vm1288 = vcmp.ge.f32.partialorder %v1262, 0.0
  %vm1289 = vcmp.ge.f32.partialorder %v1263, 0.0
  %vm1290 = vcmp.ge.f32.partialorder %v1264, 0.0
  %v1291 = vmul.f32 %v1239, 0.01
  %v1292 = vmul.f32 %v1240, 0.01
  %v1293 = vmul.f32 %v1241, 0.01
  %v1294 = vmul.f32 %v1242, 0.01
  %v1295 = vmul.f32 %v1243, 0.01
  %v1296 = vmul.f32 %v1244, 0.01
  %v1297 = vmul.f32 %v1245, 0.01
  %v1298 = vmul.f32 %v1246, 0.01
  %v1299 = vmul.f32 %v1247, 0.01
  %v1300 = vmul.f32 %v1248, 0.01
  %v1301 = vmul.f32 %v1249, 0.01
  %v1302 = vmul.f32 %v1250, 0.01
  %v1303 = vmul.f32 %v1251, 0.01
  %v1304 = vmul.f32 %v1252, 0.01
  %v1305 = vmul.f32 %v1253, 0.01
  %v1306 = vmul.f32 %v1254, 0.01
  %v1307 = vmul.f32 %v1255, 0.01
  %v1308 = vmul.f32 %v1256, 0.01
  %v1309 = vmul.f32 %v1257, 0.01
  %v1310 = vmul.f32 %v1258, 0.01
  %v1311 = vmul.f32 %v1259, 0.01
  %v1312 = vmul.f32 %v1260, 0.01
  %v1313 = vmul.f32 %v1261, 0.01
  %v1314 = vmul.f32 %v1262, 0.01
  %v1315 = vmul.f32 %v1263, 0.01
  %v1316 = vmul.f32 %v1264, 0.01
  %v1317 = vsel %vm1265, %v1239, %v1291
  %v1318 = vsel %vm1266, %v1240, %v1292
  %v1319 = vsel %vm1267, %v1241, %v1293
  %v1320 = vsel %vm1268, %v1242, %v1294
  %v1321 = vsel %vm1269, %v1243, %v1295
  %v1322 = vsel %vm1270, %v1244, %v1296
  %v1323 = vsel %vm1271, %v1245, %v1297
  %v1324 = vsel %vm1272, %v1246, %v1298
  %v1325 = vsel %vm1273, %v1247, %v1299
  %v1326 = vsel %vm1274, %v1248, %v1300
  %v1327 = vsel %vm1275, %v1249, %v1301
  %v1328 = vsel %vm1276, %v1250, %v1302
  %v1329 = vsel %vm1277, %v1251, %v1303
  %v1330 = vsel %vm1278, %v1252, %v1304
  %v1331 = vsel %vm1279, %v1253, %v1305
  %v1332 = vsel %vm1280, %v1254, %v1306
  %v1333 = vsel %vm1281, %v1255, %v1307
  %v1334 = vsel %vm1282, %v1256, %v1308
  %v1335 = vsel %vm1283, %v1257, %v1309
  %v1336 = vsel %vm1284, %v1258, %v1310
  %v1337 = vsel %vm1285, %v1259, %v1311
  %v1338 = vsel %vm1286, %v1260, %v1312
  %v1339 = vsel %vm1287, %v1261, %v1313
  %v1340 = vsel %vm1288, %v1262, %v1314
  %v1341 = vsel %vm1289, %v1263, %v1315
  %v1342 = vsel %vm1290, %v1264, %v1316
  %v1343 = vld [vmem:[%s4] sm:$0xff]
  %v1344 = vld [vmem:[%s4 + $0x8] sm:$0xff]
  %1346 = vset.pattern.permute.xlu0 0
  %1347 = vperm.xlu0 %1346, %v1343
  %v1348 = vpop.permute.xlu0 %1347
  %1351 = vset.pattern.permute.xlu0 0
  %1352 = vperm.xlu0 %1351, %v1344
  %v1353 = vpop.permute.xlu0 %1352
  %v1355 = vmul.f32 %v1317, %v1348
  %v1356 = vmul.f32 %v1318, %v1348
  %v1357 = vmul.f32 %v1319, %v1348
  %v1358 = vmul.f32 %v1320, %v1348
  %v1359 = vmul.f32 %v1321, %v1348
  %v1360 = vmul.f32 %v1322, %v1348
  %v1361 = vmul.f32 %v1323, %v1348
  %v1362 = vmul.f32 %v1324, %v1348
  %v1363 = vmul.f32 %v1325, %v1348
  %v1364 = vmul.f32 %v1326, %v1348
  %v1365 = vmul.f32 %v1327, %v1348
  %v1366 = vmul.f32 %v1328, %v1348
  %v1367 = vmul.f32 %v1329, %v1348
  %v1368 = vmul.f32 %v1330, %v1353
  %v1369 = vmul.f32 %v1331, %v1353
  %v1370 = vmul.f32 %v1332, %v1353
  %v1371 = vmul.f32 %v1333, %v1353
  %v1372 = vmul.f32 %v1334, %v1353
  %v1373 = vmul.f32 %v1335, %v1353
  %v1374 = vmul.f32 %v1336, %v1353
  %v1375 = vmul.f32 %v1337, %v1353
  %v1376 = vmul.f32 %v1338, %v1353
  %v1377 = vmul.f32 %v1339, %v1353
  %v1378 = vmul.f32 %v1340, %v1353
  %v1379 = vmul.f32 %v1341, %v1353
  %v1380 = vmul.f32 %v1342, %v1353
  %v1381 = vadd.f32 %v1355, %v1368
  %v1382 = vrot.slane %v1381, 4
  %v1383 = vadd.f32 %v1381, %v1382
  %v1384 = vrot.slane %v1383, 2
  %v1385 = vadd.f32 %v1383, %v1384
  %v1386 = vrot.slane %v1385, 1
  %v1387 = vadd.f32 %v1385, %v1386
  %v1388 = vadd.f32 %v1356, %v1369
  %v1389 = vrot.slane %v1388, 4
  %v1390 = vadd.f32 %v1388, %v1389
  %v1391 = vrot.slane %v1390, 2
  %v1392 = vadd.f32 %v1390, %v1391
  %v1393 = vrot.slane %v1392, 1
  %v1394 = vadd.f32 %v1392, %v1393
  %v1395 = vadd.f32 %v1357, %v1370
  %v1396 = vrot.slane %v1395, 4
  %v1397 = vadd.f32 %v1395, %v1396
  %v1398 = vrot.slane %v1397, 2
  %v1399 = vadd.f32 %v1397, %v1398
  %v1400 = vrot.slane %v1399, 1
  %v1401 = vadd.f32 %v1399, %v1400
  %v1402 = vadd.f32 %v1358, %v1371
  %v1403 = vrot.slane %v1402, 4
  %v1404 = vadd.f32 %v1402, %v1403
  %v1405 = vrot.slane %v1404, 2
  %v1406 = vadd.f32 %v1404, %v1405
  %v1407 = vrot.slane %v1406, 1
  %v1408 = vadd.f32 %v1406, %v1407
  %v1409 = vadd.f32 %v1359, %v1372
  %v1410 = vrot.slane %v1409, 4
  %v1411 = vadd.f32 %v1409, %v1410
  %v1412 = vrot.slane %v1411, 2
  %v1413 = vadd.f32 %v1411, %v1412
  %v1414 = vrot.slane %v1413, 1
  %v1415 = vadd.f32 %v1413, %v1414
  %v1416 = vadd.f32 %v1360, %v1373
  %v1417 = vrot.slane %v1416, 4
  %v1418 = vadd.f32 %v1416, %v1417
  %v1419 = vrot.slane %v1418, 2
  %v1420 = vadd.f32 %v1418, %v1419
  %v1421 = vrot.slane %v1420, 1
  %v1422 = vadd.f32 %v1420, %v1421
  %v1423 = vadd.f32 %v1361, %v1374
  %v1424 = vrot.slane %v1423, 4
  %v1425 = vadd.f32 %v1423, %v1424
  %v1426 = vrot.slane %v1425, 2
  %v1427 = vadd.f32 %v1425, %v1426
  %v1428 = vrot.slane %v1427, 1
  %v1429 = vadd.f32 %v1427, %v1428
  %v1430 = vadd.f32 %v1362, %v1375
  %v1431 = vrot.slane %v1430, 4
  %v1432 = vadd.f32 %v1430, %v1431
  %v1433 = vrot.slane %v1432, 2
  %v1434 = vadd.f32 %v1432, %v1433
  %v1435 = vrot.slane %v1434, 1
  %v1436 = vadd.f32 %v1434, %v1435
  %v1437 = vadd.f32 %v1363, %v1376
  %v1438 = vrot.slane %v1437, 4
  %v1439 = vadd.f32 %v1437, %v1438
  %v1440 = vrot.slane %v1439, 2
  %v1441 = vadd.f32 %v1439, %v1440
  %v1442 = vrot.slane %v1441, 1
  %v1443 = vadd.f32 %v1441, %v1442
  %v1444 = vadd.f32 %v1364, %v1377
  %v1445 = vrot.slane %v1444, 4
  %v1446 = vadd.f32 %v1444, %v1445
  %v1447 = vrot.slane %v1446, 2
  %v1448 = vadd.f32 %v1446, %v1447
  %v1449 = vrot.slane %v1448, 1
  %v1450 = vadd.f32 %v1448, %v1449
  %v1451 = vadd.f32 %v1365, %v1378
  %v1452 = vrot.slane %v1451, 4
  %v1453 = vadd.f32 %v1451, %v1452
  %v1454 = vrot.slane %v1453, 2
  %v1455 = vadd.f32 %v1453, %v1454
  %v1456 = vrot.slane %v1455, 1
  %v1457 = vadd.f32 %v1455, %v1456
  %v1458 = vadd.f32 %v1366, %v1379
  %v1459 = vrot.slane %v1458, 4
  %v1460 = vadd.f32 %v1458, %v1459
  %v1461 = vrot.slane %v1460, 2
  %v1462 = vadd.f32 %v1460, %v1461
  %v1463 = vrot.slane %v1462, 1
  %v1464 = vadd.f32 %v1462, %v1463
  %v1465 = vsel %vm1071, %v1367, 0.0
  %v1466 = vsel %vm1071, %v1380, 0.0
  %v1467 = vadd.f32 %v1465, %v1466
  %v1468 = vrot.slane %v1467, 4
  %v1469 = vadd.f32 %v1467, %v1468
  %v1470 = vrot.slane %v1469, 2
  %v1471 = vadd.f32 %v1469, %v1470
  %v1472 = vrot.slane %v1471, 1
  %v1473 = vadd.f32 %v1471, %v1472
  %v1474 = vld [vmem:[#allocation2] sm:$0x1]
  %1476 = vset.pattern.permute.xlu0 0
  %1477 = vperm.xlu0 %1476, %v1474
  %v1478 = vpop.permute.xlu0 %1477
  %v1480 = vlaneseq
  %v1481 = vshrl.u32 %v1480, 7
  %v1482 = vsub.s32 0, %v1481
  %v1483 = vrot.slane %v1478, %v1482
  %v1484 = vadd.f32 %v1387, %v1483
  %v1485 = vadd.f32 %v1394, %v1483
  %v1486 = vadd.f32 %v1401, %v1483
  %v1487 = vadd.f32 %v1408, %v1483
  %v1488 = vadd.f32 %v1415, %v1483
  %v1489 = vadd.f32 %v1422, %v1483
  %v1490 = vadd.f32 %v1429, %v1483
  %v1491 = vadd.f32 %v1436, %v1483
  %v1492 = vadd.f32 %v1443, %v1483
  %v1493 = vadd.f32 %v1450, %v1483
  %v1494 = vadd.f32 %v1457, %v1483
  %v1495 = vadd.f32 %v1464, %v1483
  %v1496 = vadd.f32 %v1473, %v1483
  %v1497 = vtanh.pop %v1484
  %v1498 = vtanh.pop %v1485
  %v1499 = vtanh.pop %v1486
  %v1500 = vtanh.pop %v1487
  %v1501 = vtanh.pop %v1488
  %v1502 = vtanh.pop %v1489
  %v1503 = vtanh.pop %v1490
  %v1504 = vtanh.pop %v1491
  %v1505 = vtanh.pop %v1492
  %v1506 = vtanh.pop %v1493
  %v1507 = vtanh.pop %v1494
  %v1508 = vtanh.pop %v1495
  %v1509 = vtanh.pop %v1496
  %v1523 = vcombine.low %v1497, %v1498
  %v1524 = vcombine.low %v1499, %v1500
  %v1525 = vcombine.low %v1501, %v1502
  %v1526 = vcombine.low %v1503, %v1504
  %v1528 = vunpack.c.l.s4 1966171168
  %v1529 = vunpack.c.0.s8 %v1528
  %v1530 = vlaneseq
  %v1531 = vshrl.u32 %v1530, 7
  %v1532 = vsub.s32 %v1529, %v1531
  %v1533 = vrot.slane %v1523, %v1532
  %v1535 = vunpack.c.l.s4 1966171168
  %v1536 = vunpack.c.0.s8 %v1535
  %v1537 = vlaneseq
  %v1538 = vshrl.u32 %v1537, 7
  %v1539 = vsub.s32 %v1536, %v1538
  %v1540 = vrot.slane %v1524, %v1539
  %v1542 = vunpack.c.l.s4 1966171168
  %v1543 = vunpack.c.0.s8 %v1542
  %v1544 = vlaneseq
  %v1545 = vshrl.u32 %v1544, 7
  %v1546 = vsub.s32 %v1543, %v1545
  %v1547 = vrot.slane %v1525, %v1546
  %v1549 = vunpack.c.l.s4 1966171168
  %v1550 = vunpack.c.0.s8 %v1549
  %v1551 = vlaneseq
  %v1552 = vshrl.u32 %v1551, 7
  %v1553 = vsub.s32 %v1550, %v1552
  %v1554 = vrot.slane %v1526, %v1553
  %v1555 = vcombine.low %v1533, %v1540
  %v1556 = vcombine.low %v1547, %v1554
  %v1558 = vunpack.c.l.s4 1966171168
  %v1559 = vunpack.c.0.s8 %v1558
  %v1560 = vlaneseq
  %v1561 = vshrl.u32 %v1560, 7
  %v1562 = vsub.s32 %v1559, %v1561
  %v1563 = vrot.slane %v1555, %v1562
  %v1565 = vunpack.c.l.s4 1966171168
  %v1566 = vunpack.c.0.s8 %v1565
  %v1567 = vlaneseq
  %v1568 = vshrl.u32 %v1567, 7
  %v1569 = vsub.s32 %v1566, %v1568
  %v1570 = vrot.slane %v1556, %v1569
  %v1571 = vcombine.low %v1563, %v1570
  %v1572 = vcombine.low %v1505, %v1506
  %v1573 = vcombine.low %v1507, %v1508
  %v1575 = vunpack.c.l.s4 1966171168
  %v1576 = vunpack.c.0.s8 %v1575
  %v1577 = vlaneseq
  %v1578 = vshrl.u32 %v1577, 7
  %v1579 = vsub.s32 %v1576, %v1578
  %v1580 = vrot.slane %v1572, %v1579
  %v1582 = vunpack.c.l.s4 1966171168
  %v1583 = vunpack.c.0.s8 %v1582
  %v1584 = vlaneseq
  %v1585 = vshrl.u32 %v1584, 7
  %v1586 = vsub.s32 %v1583, %v1585
  %v1587 = vrot.slane %v1573, %v1586
  %v1589 = vunpack.c.l.s4 1966171168
  %v1590 = vunpack.c.0.s8 %v1589
  %v1591 = vlaneseq
  %v1592 = vshrl.u32 %v1591, 7
  %v1593 = vsub.s32 %v1590, %v1592
  %v1594 = vrot.slane %v1509, %v1593
  %v1595 = vcombine.low %v1580, %v1587
  %v1597 = vunpack.c.l.s4 1966171168
  %v1598 = vunpack.c.0.s8 %v1597
  %v1599 = vlaneseq
  %v1600 = vshrl.u32 %v1599, 7
  %v1601 = vsub.s32 %v1598, %v1600
  %v1602 = vrot.slane %v1595, %v1601
  %v1604 = vunpack.c.l.s4 1966171168
  %v1605 = vunpack.c.0.s8 %v1604
  %v1606 = vlaneseq
  %v1607 = vshrl.u32 %v1606, 7
  %v1608 = vsub.s32 %v1605, %v1607
  %v1609 = vrot.slane %v1594, %v1608
  %v1610 = vcombine.low %v1602, %v1609
  %1613 = vst [vmem:[%s6] sm:$0xff] %v1571
  %v1614 = vlaneseq
  %vm1615 = vcmp.ge.s32.totalorder %v1614, 0
  %vm1616 = vcmp.lt.s32.totalorder %v1614, 544
  %vm1617 = vmand %vm1615, %vm1616
  %1618 = vst.msk [vmem:[%s6 + $0x8] sm:$0x1f] %vm1617, %v1610
  // Predicated region
  $region26: #{cvae_forward.13} parent=0 // pred_check
    _
  $region27: #{cvae_forward.13} parent=0 // pred_check_branch
    %1620 = sbr.rel (0) target = $region29
  $region28: #{cvae_forward.13} parent=0 // pred_region
    _
  $region29: #{cvae_forward.13} parent=0 // pred_fallthru
    _
  // Predicated region
  $region30: #{cvae_forward.13} parent=0 // pred_check
    _
  $region31: #{cvae_forward.13} parent=0 // pred_check_branch
    %1622 = sbr.rel (0) target = $region33
  $region32: #{cvae_forward.13} parent=0 // pred_region
    _
  $region33: #{cvae_forward.13} parent=0 // pred_fallthru
    _

</llo_original>
